<compile_context>
chip_gen: v6e
topology: v6e:2x2x1
jax: 0.10.0
libtpu: 0.0.40
codegen_flags: <defaults>
</compile_context>

<pallas_src>
import jax
import jax.numpy as jnp
from jax.experimental import pallas as pl
from jax.experimental.pallas import tpu as pltpu

# ----------------------------- config ---------------------------------------
HIDDEN = 32
HEADS = 4
LAYERS = 2
INTER = 64
VOCAB = 100
MAX_POS = 32
TAG_VOCAB = 512          # torch.nn.Embedding(512, hidden)
LN_EPS = 1e-12

# Packed small-parameter buffer layout: one f32 (SMALL_ROWS, SMALL_W) tensor
# (single DMA stream) holding every bias / LayerNorm param / regressor head.
SMALL_W = 128
R_EMB_LN = 0          # rows 0-1   : embedding LN gamma, beta            (H)
R_BQKV = 2            # rows 2-3   : fused QKV bias, one row per layer   (3H)
R_BO = 4              # rows 4-5   : attention-output bias per layer     (H)
R_BFFN1 = 6           # rows 6-7   : FFN1 bias per layer                 (I)
R_BFFN2 = 8           # rows 8-9   : FFN2 bias per layer                 (H)
R_LN1 = 10            # rows 10-13 : post-attn LN (gamma, beta) x layer  (H)
R_LN2 = 14            # rows 14-17 : post-FFN  LN (gamma, beta) x layer  (H)
R_BP = 18             # row  18    : pooler bias                         (H)
R_WR = 19             # rows 19-21 : regressor weight chunks             (H)
R_BR = 22             # row  22    : regressor bias                      (1)
SMALL_ROWS = 24       # padded to a multiple of 8 sublanes


# --------------------------- kernel helpers ----------------------------------
def _layer_norm(v, g, b):
    mu = jnp.mean(v, axis=-1, keepdims=True)
    var = jnp.mean(jnp.square(v - mu), axis=-1, keepdims=True)
    return (v - mu) * jax.lax.rsqrt(var + LN_EPS) * g + b


# ------------------------------ fused kernel ---------------------------------
def _bert_regression_kernel(
    emb_ref, mask_ref, tag_ref,
    w_qkv_ref, w_o_ref, w_ffn1_ref, w_ffn2_ref, wp_ref,
    small_ref, out_ref,
):
    H, nh, L, I = HIDDEN, HEADS, LAYERS, INTER
    dh = H // nh
    scale = 1.0 / float(dh) ** 0.5
    bblk, S, _ = emb_ref.shape

    def srow(r, w):
        return small_ref[r:r + 1, 0:w]            # (1, w) f32 slice of packed buf

    mask = mask_ref[...]                          # (bblk, 1, S), 1 = keep / 0 = pad
    bias = (1.0 - mask) * -1e9                    # additive key-padding bias

    # -------------------------- embedding LayerNorm --------------------------
    # Fold batch into MXU rows: all dense matmuls see (bblk*S, H) operands.
    x = emb_ref[...].reshape(bblk * S, H)
    x = _layer_norm(x, srow(R_EMB_LN, H), srow(R_EMB_LN + 1, H))

    # Per-head lane masks: head h owns hidden lanes [h*dh, (h+1)*dh).  Head
    # split/merge is done with masks + full-width matmuls (no transposes).
    lane = jax.lax.broadcasted_iota(jnp.int32, (1, H), 1)
    head_masks = [
        jnp.logical_and(lane >= h * dh, lane < (h + 1) * dh).astype(jnp.float32)
        for h in range(nh)
    ]

    for l in range(L):                            # static unroll (L = 2)
        # Fused QKV: one (bblk*S, H) @ (H, 3H) matmul instead of three.
        qkv = jnp.dot(x.astype(jnp.bfloat16), w_qkv_ref[l],
                      preferred_element_type=jnp.float32) + srow(R_BQKV + l, 3 * H)
        q = qkv[:, 0:H].reshape(bblk, S, H)
        k = qkv[:, H:2 * H].reshape(bblk, S, H)
        v = qkv[:, 2 * H:3 * H].reshape(bblk, S, H)

        kb = k.astype(jnp.bfloat16)
        ctx = jnp.zeros((bblk, S, H), jnp.float32)
        for m in head_masks:
            # masked contraction == per-head q @ k^T (other heads' lanes give 0)
            s = jnp.einsum('bqd,bkd->bqk', (q * m).astype(jnp.bfloat16), kb,
                           preferred_element_type=jnp.float32) * scale + bias
            s = s - jnp.max(s, axis=-1, keepdims=True)
            p = jnp.exp(s)
            p = p / jnp.sum(p, axis=-1, keepdims=True)   # exact div (numeric parity)
            # masked V keeps head h's lanes only -> summing over heads merges heads
            ctx = ctx + jnp.einsum('bqk,bkd->bqd', p.astype(jnp.bfloat16),
                                   (v * m).astype(jnp.bfloat16),
                                   preferred_element_type=jnp.float32)

        attn = jnp.dot(ctx.reshape(bblk * S, H).astype(jnp.bfloat16), w_o_ref[l],
                       preferred_element_type=jnp.float32) + srow(R_BO + l, H)
        x = _layer_norm(x + attn, srow(R_LN1 + 2 * l, H), srow(R_LN1 + 2 * l + 1, H))

        h1 = jnp.dot(x.astype(jnp.bfloat16), w_ffn1_ref[l],
                     preferred_element_type=jnp.float32) + srow(R_BFFN1 + l, I)
        # TODO(synk): PyTorch nn.GELU default is exact erf; tanh approximation used.
        h1 = jax.nn.gelu(h1, approximate=True)
        h2 = jnp.dot(h1.astype(jnp.bfloat16), w_ffn2_ref[l],
                     preferred_element_type=jnp.float32) + srow(R_BFFN2 + l, H)
        x = _layer_norm(x + h2, srow(R_LN2 + 2 * l, H), srow(R_LN2 + 2 * l + 1, H))

    x3 = x.reshape(bblk, S, H)

    # BERT pooler: tanh(W_p @ h_[CLS] + b_p)
    cls = x3[:, 0:1, :].reshape(bblk, H)
    pooled = jnp.tanh(jnp.dot(cls.astype(jnp.bfloat16), wp_ref[...],
                              preferred_element_type=jnp.float32) + srow(R_BP, H))

    # masked mean of token states: batched row-vector matmul == masked sum
    seq_sum = jnp.einsum('bos,bsh->boh', mask, x3,
                         preferred_element_type=jnp.float32)        # (bblk, 1, H)
    denom = jnp.maximum(jnp.sum(mask, axis=-1, keepdims=True), 1.0)
    seq_mean = (seq_sum / denom).reshape(bblk, H)

    # arg_comp_tags embedding, mean over the sequence
    # TODO(synk): reference intent unclear (broken torch.cat); tag mean is unmasked.
    tag_mean = jnp.mean(tag_ref[...], axis=1)                       # (bblk, H)

    # regressor Linear(3H, 1): one H-wide weight chunk per concatenated feature
    z = (pooled * srow(R_WR, H)
         + seq_mean * srow(R_WR + 1, H)
         + tag_mean * srow(R_WR + 2, H))                            # (bblk, H)
    out_ref[0] = jnp.sum(z, axis=-1, keepdims=True) + small_ref[R_BR:R_BR + 1, 0:1]


# ------------------------- parameter construction ---------------------------
def init_params(key):
    H, L, I, V, P, T = HIDDEN, LAYERS, INTER, VOCAB, MAX_POS, TAG_VOCAB

    def nrm(k, shape, scale=0.02):
        return scale * jax.random.normal(k, shape, dtype=jnp.float32)

    ks = iter(jax.random.split(key, 9))

    # ---- packed small-parameter buffer (biases / LN params / regressor) ----
    def row(vec):
        vec = jnp.asarray(vec, jnp.float32).reshape(1, -1)
        return jnp.pad(vec, ((0, 0), (0, SMALL_W - vec.shape[1])))

    ones_h = jnp.ones((H,), jnp.float32)
    zeros_h = jnp.zeros((H,), jnp.float32)
    wr = nrm(next(ks), (3, H))                               # regressor Linear(3H, 1)

    rows = []
    rows += [row(ones_h), row(zeros_h)]                      # emb LN gamma, beta
    rows += [row(jnp.zeros((3 * H,))) for _ in range(L)]     # fused QKV bias
    rows += [row(zeros_h) for _ in range(L)]                 # attention-output bias
    rows += [row(jnp.zeros((I,))) for _ in range(L)]         # FFN1 bias
    rows += [row(zeros_h) for _ in range(L)]                 # FFN2 bias
    for _ in range(L):                                       # post-attn LN
        rows += [row(ones_h), row(zeros_h)]
    for _ in range(L):                                       # post-FFN LN
        rows += [row(ones_h), row(zeros_h)]
    rows += [row(zeros_h)]                                   # pooler bias
    rows += [row(wr[i]) for i in range(3)]                   # regressor chunks
    rows += [row(jnp.zeros((1,)))]                           # regressor bias
    small = jnp.concatenate(rows, axis=0)
    small = jnp.pad(small, ((0, SMALL_ROWS - small.shape[0]), (0, 0)))

    return {
        "word_emb": nrm(next(ks), (V, H)),
        "pos_emb": nrm(next(ks), (P, H)),
        "tag_emb": nrm(next(ks), (T, H)),                    # arg_comp_tags embedding
        # MXU weights pre-cast to bf16 (half DMA bytes, no in-kernel converts)
        "w_qkv": nrm(next(ks), (L, H, 3 * H)).astype(jnp.bfloat16),   # [Wq|Wk|Wv]
        "w_o": nrm(next(ks), (L, H, H)).astype(jnp.bfloat16),
        "w_ffn1": nrm(next(ks), (L, H, I)).astype(jnp.bfloat16),
        "w_ffn2": nrm(next(ks), (L, I, H)).astype(jnp.bfloat16),
        "wp": nrm(next(ks), (H, H)).astype(jnp.bfloat16),
        "small": small,
    }


# ------------------------------- forward ------------------------------------
def _num_batch_blocks(B):
    # v7x has 2 TensorCores that only get work via parallel grid steps;
    # v5e / v6e have a single TC, where extra grid steps are pure serial
    # overhead -> collapse to one step there.
    try:
        kind = jax.devices()[0].device_kind.lower()
    except Exception:
        kind = ""
    if "v7" in kind and B % 2 == 0 and B >= 2:
        return 2
    return 1


def bert_regression_forward(params, input_ids, attention_mask, arg_comp_tags):
    B, S = input_ids.shape
    H = HIDDEN
    nb = _num_batch_blocks(B)
    bblk = B // nb

    # TODO(synk): token/position/tag embedding gathers stay as XLA glue
    # (data-dependent table lookups; tables are tiny).
    emb = jnp.take(params["word_emb"], input_ids, axis=0) + params["pos_emb"][None, :S, :]
    tag = jnp.take(params["tag_emb"], arg_comp_tags, axis=0)
    mask = attention_mask.astype(jnp.float32).reshape(B, 1, S)

    def full(a):
        return pl.BlockSpec(a.shape, lambda b, _n=a.ndim: (0,) * _n)

    out = pl.pallas_call(
        _bert_regression_kernel,
        out_shape=jax.ShapeDtypeStruct((nb, bblk, 1), jnp.float32),
        grid=(nb,),
        in_specs=[
            pl.BlockSpec((bblk, S, H), lambda b: (b, 0, 0)),   # word + pos embeddings
            pl.BlockSpec((bblk, 1, S), lambda b: (b, 0, 0)),   # attention mask
            pl.BlockSpec((bblk, S, H), lambda b: (b, 0, 0)),   # tag embeddings
            full(params["w_qkv"]), full(params["w_o"]),
            full(params["w_ffn1"]), full(params["w_ffn2"]),
            full(params["wp"]), full(params["small"]),
        ],
        out_specs=pl.BlockSpec((1, bblk, 1), lambda b: (b, 0, 0)),
        compiler_params=pltpu.CompilerParams(
            dimension_semantics=("parallel",)),                # 2-way over v7x's TCs
    )(emb, mask, tag,
      params["w_qkv"], params["w_o"], params["w_ffn1"], params["w_ffn2"],
      params["wp"], params["small"])

    # TODO(synk): reference eval-mode loss is torch.empty(1) (uninitialized) — omitted.
    return {"output": out.reshape(B, 1)}


# -------------------------------- main ---------------------------------------
if __name__ == "__main__":
    root = jax.random.PRNGKey(0)
    pkey, dkey = jax.random.split(root)
    params = init_params(pkey)

    B, S = 2, 8
    k1, k2, k3 = jax.random.split(dkey, 3)
    input_ids = jax.random.randint(k1, (B, S), 0, VOCAB, dtype=jnp.int32)
    attention_mask = jnp.ones((B, S), dtype=jnp.int32)
    arg_comp_tags = jax.random.randint(k3, (B, S), 0, TAG_VOCAB, dtype=jnp.int32)

    fwd = jax.jit(bert_regression_forward)
    out = fwd(params, input_ids, attention_mask, arg_comp_tags)
    jax.block_until_ready(out["output"])
    assert out["output"].shape == (B, 1)
    print("KERNEL_OK")
</pallas_src>

<mosaic_0001>
module attributes {stable_mosaic.version = 11 : i64} {
  func.func @_bert_regression_kernel(%arg0: i32, %arg1: memref<2x8x32xf32, #tpu.memory_space<vmem>>, %arg2: memref<2x1x8xf32, #tpu.memory_space<vmem>>, %arg3: memref<2x8x32xf32, #tpu.memory_space<vmem>>, %arg4: memref<2x32x96xbf16, #tpu.memory_space<vmem>>, %arg5: memref<2x32x32xbf16, #tpu.memory_space<vmem>>, %arg6: memref<2x32x64xbf16, #tpu.memory_space<vmem>>, %arg7: memref<2x64x32xbf16, #tpu.memory_space<vmem>>, %arg8: memref<32x32xbf16, #tpu.memory_space<vmem>>, %arg9: memref<24x128xf32, #tpu.memory_space<vmem>>, %arg10: memref<1x2x1xf32, #tpu.memory_space<vmem>>) attributes {dimension_semantics = [#tpu.dimension_semantics<parallel>], iteration_bounds = array<i64: 1>, scalar_prefetch = 0 : i64, scratch_operands = 0 : i64, tpu.core_type = #tpu.core_type<tc>, window_params = [{transform_indices = @transform_0, window_bounds = array<i64: 2, 8, 32>}, {transform_indices = @transform_1, window_bounds = array<i64: 2, 1, 8>}, {transform_indices = @transform_2, window_bounds = array<i64: 2, 8, 32>}, {pipeline_mode = #tpu.pipeline_mode<synchronous>, transform_indices = @transform_3, window_bounds = array<i64: 2, 32, 96>}, {pipeline_mode = #tpu.pipeline_mode<synchronous>, transform_indices = @transform_4, window_bounds = array<i64: 2, 32, 32>}, {pipeline_mode = #tpu.pipeline_mode<synchronous>, transform_indices = @transform_5, window_bounds = array<i64: 2, 32, 64>}, {pipeline_mode = #tpu.pipeline_mode<synchronous>, transform_indices = @transform_6, window_bounds = array<i64: 2, 64, 32>}, {pipeline_mode = #tpu.pipeline_mode<synchronous>, transform_indices = @transform_7, window_bounds = array<i64: 32, 32>}, {pipeline_mode = #tpu.pipeline_mode<synchronous>, transform_indices = @transform_8, window_bounds = array<i64: 24, 128>}, {transform_indices = @transform_9, window_bounds = array<i64: 1, 2, 1>}]} {
    %c0 = arith.constant 0 : index
    %c0_0 = arith.constant 0 : index
    %c0_1 = arith.constant 0 : index
    %0 = vector.load %arg2[%c0, %c0_0, %c0_1] : memref<2x1x8xf32, #tpu.memory_space<vmem>>, vector<2x1x8xf32>
    %cst = arith.constant 1.000000e+00 : f32
    %1 = vector.broadcast %cst : f32 to vector<2x1x8xf32>
    %2 = arith.subf %1, %0 : vector<2x1x8xf32>
    %cst_2 = arith.constant -1.000000e+09 : f32
    %3 = vector.broadcast %cst_2 : f32 to vector<2x1x8xf32>
    %4 = arith.mulf %2, %3 : vector<2x1x8xf32>
    %c0_3 = arith.constant 0 : index
    %c0_4 = arith.constant 0 : index
    %c0_5 = arith.constant 0 : index
    %5 = vector.load %arg1[%c0_3, %c0_4, %c0_5] : memref<2x8x32xf32, #tpu.memory_space<vmem>>, vector<2x8x32xf32>
    %6 = vector.shape_cast %5 : vector<2x8x32xf32> to vector<16x32xf32>
    %c0_6 = arith.constant 0 : index
    %c0_7 = arith.constant 0 : index
    %7 = vector.load %arg9[%c0_6, %c0_7] : memref<24x128xf32, #tpu.memory_space<vmem>>, vector<1x32xf32>
    %c1 = arith.constant 1 : index
    %c0_8 = arith.constant 0 : index
    %8 = vector.load %arg9[%c1, %c0_8] : memref<24x128xf32, #tpu.memory_space<vmem>>, vector<1x32xf32>
    %cst_9 = arith.constant dense<0.000000e+00> : vector<16xf32>
    %9 = vector.multi_reduction <add>, %6, %cst_9 [1] : vector<16x32xf32> to vector<16xf32>
    %10 = vector.shape_cast %9 : vector<16xf32> to vector<16x1xf32>
    %cst_10 = arith.constant 3.200000e+01 : f32
    %11 = vector.broadcast %cst_10 : f32 to vector<16x1xf32>
    %12 = arith.divf %10, %11 : vector<16x1xf32>
    %13 = vector.broadcast %12 : vector<16x1xf32> to vector<16x32xf32>
    %14 = arith.subf %6, %13 : vector<16x32xf32>
    %15 = arith.mulf %14, %14 : vector<16x32xf32>
    %cst_11 = arith.constant dense<0.000000e+00> : vector<16xf32>
    %16 = vector.multi_reduction <add>, %15, %cst_11 [1] : vector<16x32xf32> to vector<16xf32>
    %17 = vector.shape_cast %16 : vector<16xf32> to vector<16x1xf32>
    %cst_12 = arith.constant 3.200000e+01 : f32
    %18 = vector.broadcast %cst_12 : f32 to vector<16x1xf32>
    %19 = arith.divf %17, %18 : vector<16x1xf32>
    %20 = vector.broadcast %12 : vector<16x1xf32> to vector<16x32xf32>
    %21 = arith.subf %6, %20 : vector<16x32xf32>
    %cst_13 = arith.constant 9.99999996E-13 : f32
    %22 = vector.broadcast %cst_13 : f32 to vector<16x1xf32>
    %23 = arith.addf %19, %22 : vector<16x1xf32>
    %24 = math.rsqrt %23 : vector<16x1xf32>
    %25 = vector.broadcast %24 : vector<16x1xf32> to vector<16x32xf32>
    %26 = arith.mulf %21, %25 : vector<16x32xf32>
    %27 = vector.broadcast %7 : vector<1x32xf32> to vector<16x32xf32>
    %28 = arith.mulf %26, %27 : vector<16x32xf32>
    %29 = vector.broadcast %8 : vector<1x32xf32> to vector<16x32xf32>
    %30 = arith.addf %28, %29 : vector<16x32xf32>
    %31 = tpu.iota {dimensions = array<i32: 1>} : vector<1x32xi32>
    %c0_i32 = arith.constant 0 : i32
    %32 = vector.broadcast %c0_i32 : i32 to vector<1x32xi32>
    %33 = arith.cmpi sge, %31, %32 : vector<1x32xi32>
    %c8_i32 = arith.constant 8 : i32
    %34 = vector.broadcast %c8_i32 : i32 to vector<1x32xi32>
    %35 = arith.cmpi slt, %31, %34 : vector<1x32xi32>
    %36 = arith.andi %33, %35 : vector<1x32xi1>
    %37 = arith.extui %36 : vector<1x32xi1> to vector<1x32xi32>
    %38 = arith.sitofp %37 : vector<1x32xi32> to vector<1x32xf32>
    %c8_i32_14 = arith.constant 8 : i32
    %39 = vector.broadcast %c8_i32_14 : i32 to vector<1x32xi32>
    %40 = arith.cmpi sge, %31, %39 : vector<1x32xi32>
    %c16_i32 = arith.constant 16 : i32
    %41 = vector.broadcast %c16_i32 : i32 to vector<1x32xi32>
    %42 = arith.cmpi slt, %31, %41 : vector<1x32xi32>
    %43 = arith.andi %40, %42 : vector<1x32xi1>
    %44 = arith.extui %43 : vector<1x32xi1> to vector<1x32xi32>
    %45 = arith.sitofp %44 : vector<1x32xi32> to vector<1x32xf32>
    %c16_i32_15 = arith.constant 16 : i32
    %46 = vector.broadcast %c16_i32_15 : i32 to vector<1x32xi32>
    %47 = arith.cmpi sge, %31, %46 : vector<1x32xi32>
    %c24_i32 = arith.constant 24 : i32
    %48 = vector.broadcast %c24_i32 : i32 to vector<1x32xi32>
    %49 = arith.cmpi slt, %31, %48 : vector<1x32xi32>
    %50 = arith.andi %47, %49 : vector<1x32xi1>
    %51 = arith.extui %50 : vector<1x32xi1> to vector<1x32xi32>
    %52 = arith.sitofp %51 : vector<1x32xi32> to vector<1x32xf32>
    %c24_i32_16 = arith.constant 24 : i32
    %53 = vector.broadcast %c24_i32_16 : i32 to vector<1x32xi32>
    %54 = arith.cmpi sge, %31, %53 : vector<1x32xi32>
    %c32_i32 = arith.constant 32 : i32
    %55 = vector.broadcast %c32_i32 : i32 to vector<1x32xi32>
    %56 = arith.cmpi slt, %31, %55 : vector<1x32xi32>
    %57 = arith.andi %54, %56 : vector<1x32xi1>
    %58 = arith.extui %57 : vector<1x32xi1> to vector<1x32xi32>
    %59 = arith.sitofp %58 : vector<1x32xi32> to vector<1x32xf32>
    %60 = arith.truncf %30 : vector<16x32xf32> to vector<16x32xbf16>
    %c0_17 = arith.constant 0 : index
    %c0_18 = arith.constant 0 : index
    %c0_19 = arith.constant 0 : index
    %61 = vector.load %arg4[%c0_17, %c0_18, %c0_19] : memref<2x32x96xbf16, #tpu.memory_space<vmem>>, vector<1x32x96xbf16>
    %62 = vector.shape_cast %61 : vector<1x32x96xbf16> to vector<32x96xbf16>
    %cst_20 = arith.constant dense<0.000000e+00> : vector<16x96xf32>
    %63 = tpu.matmul %60, %62, %cst_20 {dimension_numbers = #tpu.dot_dimension_numbers<[1], [0], [0], [1], [0, 0, 1, 1], [], []>} : vector<16x32xbf16>, vector<32x96xbf16>, vector<16x96xf32> -> vector<16x96xf32>
    %c2 = arith.constant 2 : index
    %c0_21 = arith.constant 0 : index
    %64 = vector.load %arg9[%c2, %c0_21] : memref<24x128xf32, #tpu.memory_space<vmem>>, vector<1x96xf32>
    %65 = vector.broadcast %64 : vector<1x96xf32> to vector<16x96xf32>
    %66 = arith.addf %63, %65 : vector<16x96xf32>
    %67 = vector.extract_strided_slice %66 {offsets = [0, 0], sizes = [16, 32], strides = [1, 1]} : vector<16x96xf32> to vector<16x32xf32>
    %68 = vector.shape_cast %67 : vector<16x32xf32> to vector<2x8x32xf32>
    %69 = vector.extract_strided_slice %66 {offsets = [0, 32], sizes = [16, 32], strides = [1, 1]} : vector<16x96xf32> to vector<16x32xf32>
    %70 = vector.shape_cast %69 : vector<16x32xf32> to vector<2x8x32xf32>
    %71 = vector.extract_strided_slice %66 {offsets = [0, 64], sizes = [16, 32], strides = [1, 1]} : vector<16x96xf32> to vector<16x32xf32>
    %72 = vector.shape_cast %71 : vector<16x32xf32> to vector<2x8x32xf32>
    %73 = arith.truncf %70 : vector<2x8x32xf32> to vector<2x8x32xbf16>
    %cst_22 = arith.constant 0.000000e+00 : f32
    %74 = vector.broadcast %cst_22 : f32 to vector<2x8x32xf32>
    %75 = vector.shape_cast %38 : vector<1x32xf32> to vector<1x1x32xf32>
    %76 = vector.broadcast %75 : vector<1x1x32xf32> to vector<2x8x32xf32>
    %77 = arith.mulf %68, %76 : vector<2x8x32xf32>
    %78 = arith.truncf %77 : vector<2x8x32xf32> to vector<2x8x32xbf16>
    "tpu.trace_start"() <{level = 10 : i32, message = "bqd,bkd->bqk"}> : () -> ()
    %cst_23 = arith.constant dense<0.000000e+00> : vector<2x8x8xf32>
    %79 = tpu.matmul %78, %73, %cst_23 {dimension_numbers = #tpu.dot_dimension_numbers<[2], [2], [1], [1], [0, 0, 0, 1, 1, 1], [0], [0]>} : vector<2x8x32xbf16>, vector<2x8x32xbf16>, vector<2x8x8xf32> -> vector<2x8x8xf32>
    "tpu.trace_stop"() : () -> ()
    %cst_24 = arith.constant 0.353553385 : f32
    %80 = vector.broadcast %cst_24 : f32 to vector<2x8x8xf32>
    %81 = arith.mulf %79, %80 : vector<2x8x8xf32>
    %82 = vector.broadcast %4 : vector<2x1x8xf32> to vector<2x8x8xf32>
    %83 = arith.addf %81, %82 : vector<2x8x8xf32>
    %cst_25 = arith.constant dense<0xFF800000> : vector<2x8xf32>
    %84 = vector.multi_reduction <maximumf>, %83, %cst_25 [2] : vector<2x8x8xf32> to vector<2x8xf32>
    %85 = vector.shape_cast %84 : vector<2x8xf32> to vector<2x8x1xf32>
    %86 = vector.broadcast %85 : vector<2x8x1xf32> to vector<2x8x8xf32>
    %87 = arith.subf %83, %86 : vector<2x8x8xf32>
    %88 = math.exp %87 : vector<2x8x8xf32>
    %cst_26 = arith.constant dense<0.000000e+00> : vector<2x8xf32>
    %89 = vector.multi_reduction <add>, %88, %cst_26 [2] : vector<2x8x8xf32> to vector<2x8xf32>
    %90 = vector.shape_cast %89 : vector<2x8xf32> to vector<2x8x1xf32>
    %91 = vector.broadcast %90 : vector<2x8x1xf32> to vector<2x8x8xf32>
    %92 = arith.divf %88, %91 : vector<2x8x8xf32>
    %93 = arith.truncf %92 : vector<2x8x8xf32> to vector<2x8x8xbf16>
    %94 = vector.shape_cast %38 : vector<1x32xf32> to vector<1x1x32xf32>
    %95 = vector.broadcast %94 : vector<1x1x32xf32> to vector<2x8x32xf32>
    %96 = arith.mulf %72, %95 : vector<2x8x32xf32>
    %97 = arith.truncf %96 : vector<2x8x32xf32> to vector<2x8x32xbf16>
    "tpu.trace_start"() <{level = 10 : i32, message = "bqk,bkd->bqd"}> : () -> ()
    %cst_27 = arith.constant dense<0.000000e+00> : vector<2x8x32xf32>
    %98 = tpu.matmul %93, %97, %cst_27 {dimension_numbers = #tpu.dot_dimension_numbers<[2], [1], [1], [2], [0, 0, 0, 1, 1, 2], [0], [0]>} : vector<2x8x8xbf16>, vector<2x8x32xbf16>, vector<2x8x32xf32> -> vector<2x8x32xf32>
    "tpu.trace_stop"() : () -> ()
    %99 = arith.addf %74, %98 : vector<2x8x32xf32>
    %100 = vector.shape_cast %45 : vector<1x32xf32> to vector<1x1x32xf32>
    %101 = vector.broadcast %100 : vector<1x1x32xf32> to vector<2x8x32xf32>
    %102 = arith.mulf %68, %101 : vector<2x8x32xf32>
    %103 = arith.truncf %102 : vector<2x8x32xf32> to vector<2x8x32xbf16>
    "tpu.trace_start"() <{level = 10 : i32, message = "bqd,bkd->bqk"}> : () -> ()
    %cst_28 = arith.constant dense<0.000000e+00> : vector<2x8x8xf32>
    %104 = tpu.matmul %103, %73, %cst_28 {dimension_numbers = #tpu.dot_dimension_numbers<[2], [2], [1], [1], [0, 0, 0, 1, 1, 1], [0], [0]>} : vector<2x8x32xbf16>, vector<2x8x32xbf16>, vector<2x8x8xf32> -> vector<2x8x8xf32>
    "tpu.trace_stop"() : () -> ()
    %cst_29 = arith.constant 0.353553385 : f32
    %105 = vector.broadcast %cst_29 : f32 to vector<2x8x8xf32>
    %106 = arith.mulf %104, %105 : vector<2x8x8xf32>
    %107 = vector.broadcast %4 : vector<2x1x8xf32> to vector<2x8x8xf32>
    %108 = arith.addf %106, %107 : vector<2x8x8xf32>
    %cst_30 = arith.constant dense<0xFF800000> : vector<2x8xf32>
    %109 = vector.multi_reduction <maximumf>, %108, %cst_30 [2] : vector<2x8x8xf32> to vector<2x8xf32>
    %110 = vector.shape_cast %109 : vector<2x8xf32> to vector<2x8x1xf32>
    %111 = vector.broadcast %110 : vector<2x8x1xf32> to vector<2x8x8xf32>
    %112 = arith.subf %108, %111 : vector<2x8x8xf32>
    %113 = math.exp %112 : vector<2x8x8xf32>
    %cst_31 = arith.constant dense<0.000000e+00> : vector<2x8xf32>
    %114 = vector.multi_reduction <add>, %113, %cst_31 [2] : vector<2x8x8xf32> to vector<2x8xf32>
    %115 = vector.shape_cast %114 : vector<2x8xf32> to vector<2x8x1xf32>
    %116 = vector.broadcast %115 : vector<2x8x1xf32> to vector<2x8x8xf32>
    %117 = arith.divf %113, %116 : vector<2x8x8xf32>
    %118 = arith.truncf %117 : vector<2x8x8xf32> to vector<2x8x8xbf16>
    %119 = vector.shape_cast %45 : vector<1x32xf32> to vector<1x1x32xf32>
    %120 = vector.broadcast %119 : vector<1x1x32xf32> to vector<2x8x32xf32>
    %121 = arith.mulf %72, %120 : vector<2x8x32xf32>
    %122 = arith.truncf %121 : vector<2x8x32xf32> to vector<2x8x32xbf16>
    "tpu.trace_start"() <{level = 10 : i32, message = "bqk,bkd->bqd"}> : () -> ()
    %cst_32 = arith.constant dense<0.000000e+00> : vector<2x8x32xf32>
    %123 = tpu.matmul %118, %122, %cst_32 {dimension_numbers = #tpu.dot_dimension_numbers<[2], [1], [1], [2], [0, 0, 0, 1, 1, 2], [0], [0]>} : vector<2x8x8xbf16>, vector<2x8x32xbf16>, vector<2x8x32xf32> -> vector<2x8x32xf32>
    "tpu.trace_stop"() : () -> ()
    %124 = arith.addf %99, %123 : vector<2x8x32xf32>
    %125 = vector.shape_cast %52 : vector<1x32xf32> to vector<1x1x32xf32>
    %126 = vector.broadcast %125 : vector<1x1x32xf32> to vector<2x8x32xf32>
    %127 = arith.mulf %68, %126 : vector<2x8x32xf32>
    %128 = arith.truncf %127 : vector<2x8x32xf32> to vector<2x8x32xbf16>
    "tpu.trace_start"() <{level = 10 : i32, message = "bqd,bkd->bqk"}> : () -> ()
    %cst_33 = arith.constant dense<0.000000e+00> : vector<2x8x8xf32>
    %129 = tpu.matmul %128, %73, %cst_33 {dimension_numbers = #tpu.dot_dimension_numbers<[2], [2], [1], [1], [0, 0, 0, 1, 1, 1], [0], [0]>} : vector<2x8x32xbf16>, vector<2x8x32xbf16>, vector<2x8x8xf32> -> vector<2x8x8xf32>
    "tpu.trace_stop"() : () -> ()
    %cst_34 = arith.constant 0.353553385 : f32
    %130 = vector.broadcast %cst_34 : f32 to vector<2x8x8xf32>
    %131 = arith.mulf %129, %130 : vector<2x8x8xf32>
    %132 = vector.broadcast %4 : vector<2x1x8xf32> to vector<2x8x8xf32>
    %133 = arith.addf %131, %132 : vector<2x8x8xf32>
    %cst_35 = arith.constant dense<0xFF800000> : vector<2x8xf32>
    %134 = vector.multi_reduction <maximumf>, %133, %cst_35 [2] : vector<2x8x8xf32> to vector<2x8xf32>
    %135 = vector.shape_cast %134 : vector<2x8xf32> to vector<2x8x1xf32>
    %136 = vector.broadcast %135 : vector<2x8x1xf32> to vector<2x8x8xf32>
    %137 = arith.subf %133, %136 : vector<2x8x8xf32>
    %138 = math.exp %137 : vector<2x8x8xf32>
    %cst_36 = arith.constant dense<0.000000e+00> : vector<2x8xf32>
    %139 = vector.multi_reduction <add>, %138, %cst_36 [2] : vector<2x8x8xf32> to vector<2x8xf32>
    %140 = vector.shape_cast %139 : vector<2x8xf32> to vector<2x8x1xf32>
    %141 = vector.broadcast %140 : vector<2x8x1xf32> to vector<2x8x8xf32>
    %142 = arith.divf %138, %141 : vector<2x8x8xf32>
    %143 = arith.truncf %142 : vector<2x8x8xf32> to vector<2x8x8xbf16>
    %144 = vector.shape_cast %52 : vector<1x32xf32> to vector<1x1x32xf32>
    %145 = vector.broadcast %144 : vector<1x1x32xf32> to vector<2x8x32xf32>
    %146 = arith.mulf %72, %145 : vector<2x8x32xf32>
    %147 = arith.truncf %146 : vector<2x8x32xf32> to vector<2x8x32xbf16>
    "tpu.trace_start"() <{level = 10 : i32, message = "bqk,bkd->bqd"}> : () -> ()
    %cst_37 = arith.constant dense<0.000000e+00> : vector<2x8x32xf32>
    %148 = tpu.matmul %143, %147, %cst_37 {dimension_numbers = #tpu.dot_dimension_numbers<[2], [1], [1], [2], [0, 0, 0, 1, 1, 2], [0], [0]>} : vector<2x8x8xbf16>, vector<2x8x32xbf16>, vector<2x8x32xf32> -> vector<2x8x32xf32>
    "tpu.trace_stop"() : () -> ()
    %149 = arith.addf %124, %148 : vector<2x8x32xf32>
    %150 = vector.shape_cast %59 : vector<1x32xf32> to vector<1x1x32xf32>
    %151 = vector.broadcast %150 : vector<1x1x32xf32> to vector<2x8x32xf32>
    %152 = arith.mulf %68, %151 : vector<2x8x32xf32>
    %153 = arith.truncf %152 : vector<2x8x32xf32> to vector<2x8x32xbf16>
    "tpu.trace_start"() <{level = 10 : i32, message = "bqd,bkd->bqk"}> : () -> ()
    %cst_38 = arith.constant dense<0.000000e+00> : vector<2x8x8xf32>
    %154 = tpu.matmul %153, %73, %cst_38 {dimension_numbers = #tpu.dot_dimension_numbers<[2], [2], [1], [1], [0, 0, 0, 1, 1, 1], [0], [0]>} : vector<2x8x32xbf16>, vector<2x8x32xbf16>, vector<2x8x8xf32> -> vector<2x8x8xf32>
    "tpu.trace_stop"() : () -> ()
    %cst_39 = arith.constant 0.353553385 : f32
    %155 = vector.broadcast %cst_39 : f32 to vector<2x8x8xf32>
    %156 = arith.mulf %154, %155 : vector<2x8x8xf32>
    %157 = vector.broadcast %4 : vector<2x1x8xf32> to vector<2x8x8xf32>
    %158 = arith.addf %156, %157 : vector<2x8x8xf32>
    %cst_40 = arith.constant dense<0xFF800000> : vector<2x8xf32>
    %159 = vector.multi_reduction <maximumf>, %158, %cst_40 [2] : vector<2x8x8xf32> to vector<2x8xf32>
    %160 = vector.shape_cast %159 : vector<2x8xf32> to vector<2x8x1xf32>
    %161 = vector.broadcast %160 : vector<2x8x1xf32> to vector<2x8x8xf32>
    %162 = arith.subf %158, %161 : vector<2x8x8xf32>
    %163 = math.exp %162 : vector<2x8x8xf32>
    %cst_41 = arith.constant dense<0.000000e+00> : vector<2x8xf32>
    %164 = vector.multi_reduction <add>, %163, %cst_41 [2] : vector<2x8x8xf32> to vector<2x8xf32>
    %165 = vector.shape_cast %164 : vector<2x8xf32> to vector<2x8x1xf32>
    %166 = vector.broadcast %165 : vector<2x8x1xf32> to vector<2x8x8xf32>
    %167 = arith.divf %163, %166 : vector<2x8x8xf32>
    %168 = arith.truncf %167 : vector<2x8x8xf32> to vector<2x8x8xbf16>
    %169 = vector.shape_cast %59 : vector<1x32xf32> to vector<1x1x32xf32>
    %170 = vector.broadcast %169 : vector<1x1x32xf32> to vector<2x8x32xf32>
    %171 = arith.mulf %72, %170 : vector<2x8x32xf32>
    %172 = arith.truncf %171 : vector<2x8x32xf32> to vector<2x8x32xbf16>
    "tpu.trace_start"() <{level = 10 : i32, message = "bqk,bkd->bqd"}> : () -> ()
    %cst_42 = arith.constant dense<0.000000e+00> : vector<2x8x32xf32>
    %173 = tpu.matmul %168, %172, %cst_42 {dimension_numbers = #tpu.dot_dimension_numbers<[2], [1], [1], [2], [0, 0, 0, 1, 1, 2], [0], [0]>} : vector<2x8x8xbf16>, vector<2x8x32xbf16>, vector<2x8x32xf32> -> vector<2x8x32xf32>
    "tpu.trace_stop"() : () -> ()
    %174 = arith.addf %149, %173 : vector<2x8x32xf32>
    %175 = vector.shape_cast %174 : vector<2x8x32xf32> to vector<16x32xf32>
    %176 = arith.truncf %175 : vector<16x32xf32> to vector<16x32xbf16>
    %c0_43 = arith.constant 0 : index
    %c0_44 = arith.constant 0 : index
    %c0_45 = arith.constant 0 : index
    %177 = vector.load %arg5[%c0_43, %c0_44, %c0_45] : memref<2x32x32xbf16, #tpu.memory_space<vmem>>, vector<1x32x32xbf16>
    %178 = vector.shape_cast %177 : vector<1x32x32xbf16> to vector<32x32xbf16>
    %cst_46 = arith.constant dense<0.000000e+00> : vector<16x32xf32>
    %179 = tpu.matmul %176, %178, %cst_46 {dimension_numbers = #tpu.dot_dimension_numbers<[1], [0], [0], [1], [0, 0, 1, 1], [], []>} : vector<16x32xbf16>, vector<32x32xbf16>, vector<16x32xf32> -> vector<16x32xf32>
    %c4 = arith.constant 4 : index
    %c0_47 = arith.constant 0 : index
    %180 = vector.load %arg9[%c4, %c0_47] : memref<24x128xf32, #tpu.memory_space<vmem>>, vector<1x32xf32>
    %181 = vector.broadcast %180 : vector<1x32xf32> to vector<16x32xf32>
    %182 = arith.addf %179, %181 : vector<16x32xf32>
    %183 = arith.addf %30, %182 : vector<16x32xf32>
    %c10 = arith.constant 10 : index
    %c0_48 = arith.constant 0 : index
    %184 = vector.load %arg9[%c10, %c0_48] : memref<24x128xf32, #tpu.memory_space<vmem>>, vector<1x32xf32>
    %c11 = arith.constant 11 : index
    %c0_49 = arith.constant 0 : index
    %185 = vector.load %arg9[%c11, %c0_49] : memref<24x128xf32, #tpu.memory_space<vmem>>, vector<1x32xf32>
    %cst_50 = arith.constant dense<0.000000e+00> : vector<16xf32>
    %186 = vector.multi_reduction <add>, %183, %cst_50 [1] : vector<16x32xf32> to vector<16xf32>
    %187 = vector.shape_cast %186 : vector<16xf32> to vector<16x1xf32>
    %cst_51 = arith.constant 3.200000e+01 : f32
    %188 = vector.broadcast %cst_51 : f32 to vector<16x1xf32>
    %189 = arith.divf %187, %188 : vector<16x1xf32>
    %190 = vector.broadcast %189 : vector<16x1xf32> to vector<16x32xf32>
    %191 = arith.subf %183, %190 : vector<16x32xf32>
    %192 = arith.mulf %191, %191 : vector<16x32xf32>
    %cst_52 = arith.constant dense<0.000000e+00> : vector<16xf32>
    %193 = vector.multi_reduction <add>, %192, %cst_52 [1] : vector<16x32xf32> to vector<16xf32>
    %194 = vector.shape_cast %193 : vector<16xf32> to vector<16x1xf32>
    %cst_53 = arith.constant 3.200000e+01 : f32
    %195 = vector.broadcast %cst_53 : f32 to vector<16x1xf32>
    %196 = arith.divf %194, %195 : vector<16x1xf32>
    %197 = vector.broadcast %189 : vector<16x1xf32> to vector<16x32xf32>
    %198 = arith.subf %183, %197 : vector<16x32xf32>
    %cst_54 = arith.constant 9.99999996E-13 : f32
    %199 = vector.broadcast %cst_54 : f32 to vector<16x1xf32>
    %200 = arith.addf %196, %199 : vector<16x1xf32>
    %201 = math.rsqrt %200 : vector<16x1xf32>
    %202 = vector.broadcast %201 : vector<16x1xf32> to vector<16x32xf32>
    %203 = arith.mulf %198, %202 : vector<16x32xf32>
    %204 = vector.broadcast %184 : vector<1x32xf32> to vector<16x32xf32>
    %205 = arith.mulf %203, %204 : vector<16x32xf32>
    %206 = vector.broadcast %185 : vector<1x32xf32> to vector<16x32xf32>
    %207 = arith.addf %205, %206 : vector<16x32xf32>
    %208 = arith.truncf %207 : vector<16x32xf32> to vector<16x32xbf16>
    %c0_55 = arith.constant 0 : index
    %c0_56 = arith.constant 0 : index
    %c0_57 = arith.constant 0 : index
    %209 = vector.load %arg6[%c0_55, %c0_56, %c0_57] : memref<2x32x64xbf16, #tpu.memory_space<vmem>>, vector<1x32x64xbf16>
    %210 = vector.shape_cast %209 : vector<1x32x64xbf16> to vector<32x64xbf16>
    %cst_58 = arith.constant dense<0.000000e+00> : vector<16x64xf32>
    %211 = tpu.matmul %208, %210, %cst_58 {dimension_numbers = #tpu.dot_dimension_numbers<[1], [0], [0], [1], [0, 0, 1, 1], [], []>} : vector<16x32xbf16>, vector<32x64xbf16>, vector<16x64xf32> -> vector<16x64xf32>
    %c6 = arith.constant 6 : index
    %c0_59 = arith.constant 0 : index
    %212 = vector.load %arg9[%c6, %c0_59] : memref<24x128xf32, #tpu.memory_space<vmem>>, vector<1x64xf32>
    %213 = vector.broadcast %212 : vector<1x64xf32> to vector<16x64xf32>
    %214 = arith.addf %211, %213 : vector<16x64xf32>
    %215 = arith.mulf %214, %214 : vector<16x64xf32>
    %216 = arith.mulf %214, %215 : vector<16x64xf32>
    %cst_60 = arith.constant 4.471500e-02 : f32
    %217 = vector.broadcast %cst_60 : f32 to vector<16x64xf32>
    %218 = arith.mulf %217, %216 : vector<16x64xf32>
    %219 = arith.addf %214, %218 : vector<16x64xf32>
    %cst_61 = arith.constant 0.797884583 : f32
    %220 = vector.broadcast %cst_61 : f32 to vector<16x64xf32>
    %221 = arith.mulf %220, %219 : vector<16x64xf32>
    %222 = math.tanh %221 : vector<16x64xf32>
    %cst_62 = arith.constant 1.000000e+00 : f32
    %223 = vector.broadcast %cst_62 : f32 to vector<16x64xf32>
    %224 = arith.addf %223, %222 : vector<16x64xf32>
    %cst_63 = arith.constant 5.000000e-01 : f32
    %225 = vector.broadcast %cst_63 : f32 to vector<16x64xf32>
    %226 = arith.mulf %225, %224 : vector<16x64xf32>
    %227 = arith.mulf %214, %226 : vector<16x64xf32>
    %228 = arith.truncf %227 : vector<16x64xf32> to vector<16x64xbf16>
    %c0_64 = arith.constant 0 : index
    %c0_65 = arith.constant 0 : index
    %c0_66 = arith.constant 0 : index
    %229 = vector.load %arg7[%c0_64, %c0_65, %c0_66] : memref<2x64x32xbf16, #tpu.memory_space<vmem>>, vector<1x64x32xbf16>
    %230 = vector.shape_cast %229 : vector<1x64x32xbf16> to vector<64x32xbf16>
    %cst_67 = arith.constant dense<0.000000e+00> : vector<16x32xf32>
    %231 = tpu.matmul %228, %230, %cst_67 {dimension_numbers = #tpu.dot_dimension_numbers<[1], [0], [0], [1], [0, 0, 1, 1], [], []>} : vector<16x64xbf16>, vector<64x32xbf16>, vector<16x32xf32> -> vector<16x32xf32>
    %c8 = arith.constant 8 : index
    %c0_68 = arith.constant 0 : index
    %232 = vector.load %arg9[%c8, %c0_68] : memref<24x128xf32, #tpu.memory_space<vmem>>, vector<1x32xf32>
    %233 = vector.broadcast %232 : vector<1x32xf32> to vector<16x32xf32>
    %234 = arith.addf %231, %233 : vector<16x32xf32>
    %235 = arith.addf %207, %234 : vector<16x32xf32>
    %c14 = arith.constant 14 : index
    %c0_69 = arith.constant 0 : index
    %236 = vector.load %arg9[%c14, %c0_69] : memref<24x128xf32, #tpu.memory_space<vmem>>, vector<1x32xf32>
    %c15 = arith.constant 15 : index
    %c0_70 = arith.constant 0 : index
    %237 = vector.load %arg9[%c15, %c0_70] : memref<24x128xf32, #tpu.memory_space<vmem>>, vector<1x32xf32>
    %cst_71 = arith.constant dense<0.000000e+00> : vector<16xf32>
    %238 = vector.multi_reduction <add>, %235, %cst_71 [1] : vector<16x32xf32> to vector<16xf32>
    %239 = vector.shape_cast %238 : vector<16xf32> to vector<16x1xf32>
    %cst_72 = arith.constant 3.200000e+01 : f32
    %240 = vector.broadcast %cst_72 : f32 to vector<16x1xf32>
    %241 = arith.divf %239, %240 : vector<16x1xf32>
    %242 = vector.broadcast %241 : vector<16x1xf32> to vector<16x32xf32>
    %243 = arith.subf %235, %242 : vector<16x32xf32>
    %244 = arith.mulf %243, %243 : vector<16x32xf32>
    %cst_73 = arith.constant dense<0.000000e+00> : vector<16xf32>
    %245 = vector.multi_reduction <add>, %244, %cst_73 [1] : vector<16x32xf32> to vector<16xf32>
    %246 = vector.shape_cast %245 : vector<16xf32> to vector<16x1xf32>
    %cst_74 = arith.constant 3.200000e+01 : f32
    %247 = vector.broadcast %cst_74 : f32 to vector<16x1xf32>
    %248 = arith.divf %246, %247 : vector<16x1xf32>
    %249 = vector.broadcast %241 : vector<16x1xf32> to vector<16x32xf32>
    %250 = arith.subf %235, %249 : vector<16x32xf32>
    %cst_75 = arith.constant 9.99999996E-13 : f32
    %251 = vector.broadcast %cst_75 : f32 to vector<16x1xf32>
    %252 = arith.addf %248, %251 : vector<16x1xf32>
    %253 = math.rsqrt %252 : vector<16x1xf32>
    %254 = vector.broadcast %253 : vector<16x1xf32> to vector<16x32xf32>
    %255 = arith.mulf %250, %254 : vector<16x32xf32>
    %256 = vector.broadcast %236 : vector<1x32xf32> to vector<16x32xf32>
    %257 = arith.mulf %255, %256 : vector<16x32xf32>
    %258 = vector.broadcast %237 : vector<1x32xf32> to vector<16x32xf32>
    %259 = arith.addf %257, %258 : vector<16x32xf32>
    %260 = arith.truncf %259 : vector<16x32xf32> to vector<16x32xbf16>
    %c1_76 = arith.constant 1 : index
    %c0_77 = arith.constant 0 : index
    %c0_78 = arith.constant 0 : index
    %261 = vector.load %arg4[%c1_76, %c0_77, %c0_78] : memref<2x32x96xbf16, #tpu.memory_space<vmem>>, vector<1x32x96xbf16>
    %262 = vector.shape_cast %261 : vector<1x32x96xbf16> to vector<32x96xbf16>
    %cst_79 = arith.constant dense<0.000000e+00> : vector<16x96xf32>
    %263 = tpu.matmul %260, %262, %cst_79 {dimension_numbers = #tpu.dot_dimension_numbers<[1], [0], [0], [1], [0, 0, 1, 1], [], []>} : vector<16x32xbf16>, vector<32x96xbf16>, vector<16x96xf32> -> vector<16x96xf32>
    %c3 = arith.constant 3 : index
    %c0_80 = arith.constant 0 : index
    %264 = vector.load %arg9[%c3, %c0_80] : memref<24x128xf32, #tpu.memory_space<vmem>>, vector<1x96xf32>
    %265 = vector.broadcast %264 : vector<1x96xf32> to vector<16x96xf32>
    %266 = arith.addf %263, %265 : vector<16x96xf32>
    %267 = vector.extract_strided_slice %266 {offsets = [0, 0], sizes = [16, 32], strides = [1, 1]} : vector<16x96xf32> to vector<16x32xf32>
    %268 = vector.shape_cast %267 : vector<16x32xf32> to vector<2x8x32xf32>
    %269 = vector.extract_strided_slice %266 {offsets = [0, 32], sizes = [16, 32], strides = [1, 1]} : vector<16x96xf32> to vector<16x32xf32>
    %270 = vector.shape_cast %269 : vector<16x32xf32> to vector<2x8x32xf32>
    %271 = vector.extract_strided_slice %266 {offsets = [0, 64], sizes = [16, 32], strides = [1, 1]} : vector<16x96xf32> to vector<16x32xf32>
    %272 = vector.shape_cast %271 : vector<16x32xf32> to vector<2x8x32xf32>
    %273 = arith.truncf %270 : vector<2x8x32xf32> to vector<2x8x32xbf16>
    %cst_81 = arith.constant 0.000000e+00 : f32
    %274 = vector.broadcast %cst_81 : f32 to vector<2x8x32xf32>
    %275 = vector.shape_cast %38 : vector<1x32xf32> to vector<1x1x32xf32>
    %276 = vector.broadcast %275 : vector<1x1x32xf32> to vector<2x8x32xf32>
    %277 = arith.mulf %268, %276 : vector<2x8x32xf32>
    %278 = arith.truncf %277 : vector<2x8x32xf32> to vector<2x8x32xbf16>
    "tpu.trace_start"() <{level = 10 : i32, message = "bqd,bkd->bqk"}> : () -> ()
    %cst_82 = arith.constant dense<0.000000e+00> : vector<2x8x8xf32>
    %279 = tpu.matmul %278, %273, %cst_82 {dimension_numbers = #tpu.dot_dimension_numbers<[2], [2], [1], [1], [0, 0, 0, 1, 1, 1], [0], [0]>} : vector<2x8x32xbf16>, vector<2x8x32xbf16>, vector<2x8x8xf32> -> vector<2x8x8xf32>
    "tpu.trace_stop"() : () -> ()
    %cst_83 = arith.constant 0.353553385 : f32
    %280 = vector.broadcast %cst_83 : f32 to vector<2x8x8xf32>
    %281 = arith.mulf %279, %280 : vector<2x8x8xf32>
    %282 = vector.broadcast %4 : vector<2x1x8xf32> to vector<2x8x8xf32>
    %283 = arith.addf %281, %282 : vector<2x8x8xf32>
    %cst_84 = arith.constant dense<0xFF800000> : vector<2x8xf32>
    %284 = vector.multi_reduction <maximumf>, %283, %cst_84 [2] : vector<2x8x8xf32> to vector<2x8xf32>
    %285 = vector.shape_cast %284 : vector<2x8xf32> to vector<2x8x1xf32>
    %286 = vector.broadcast %285 : vector<2x8x1xf32> to vector<2x8x8xf32>
    %287 = arith.subf %283, %286 : vector<2x8x8xf32>
    %288 = math.exp %287 : vector<2x8x8xf32>
    %cst_85 = arith.constant dense<0.000000e+00> : vector<2x8xf32>
    %289 = vector.multi_reduction <add>, %288, %cst_85 [2] : vector<2x8x8xf32> to vector<2x8xf32>
    %290 = vector.shape_cast %289 : vector<2x8xf32> to vector<2x8x1xf32>
    %291 = vector.broadcast %290 : vector<2x8x1xf32> to vector<2x8x8xf32>
    %292 = arith.divf %288, %291 : vector<2x8x8xf32>
    %293 = arith.truncf %292 : vector<2x8x8xf32> to vector<2x8x8xbf16>
    %294 = vector.shape_cast %38 : vector<1x32xf32> to vector<1x1x32xf32>
    %295 = vector.broadcast %294 : vector<1x1x32xf32> to vector<2x8x32xf32>
    %296 = arith.mulf %272, %295 : vector<2x8x32xf32>
    %297 = arith.truncf %296 : vector<2x8x32xf32> to vector<2x8x32xbf16>
    "tpu.trace_start"() <{level = 10 : i32, message = "bqk,bkd->bqd"}> : () -> ()
    %cst_86 = arith.constant dense<0.000000e+00> : vector<2x8x32xf32>
    %298 = tpu.matmul %293, %297, %cst_86 {dimension_numbers = #tpu.dot_dimension_numbers<[2], [1], [1], [2], [0, 0, 0, 1, 1, 2], [0], [0]>} : vector<2x8x8xbf16>, vector<2x8x32xbf16>, vector<2x8x32xf32> -> vector<2x8x32xf32>
    "tpu.trace_stop"() : () -> ()
    %299 = arith.addf %274, %298 : vector<2x8x32xf32>
    %300 = vector.shape_cast %45 : vector<1x32xf32> to vector<1x1x32xf32>
    %301 = vector.broadcast %300 : vector<1x1x32xf32> to vector<2x8x32xf32>
    %302 = arith.mulf %268, %301 : vector<2x8x32xf32>
    %303 = arith.truncf %302 : vector<2x8x32xf32> to vector<2x8x32xbf16>
    "tpu.trace_start"() <{level = 10 : i32, message = "bqd,bkd->bqk"}> : () -> ()
    %cst_87 = arith.constant dense<0.000000e+00> : vector<2x8x8xf32>
    %304 = tpu.matmul %303, %273, %cst_87 {dimension_numbers = #tpu.dot_dimension_numbers<[2], [2], [1], [1], [0, 0, 0, 1, 1, 1], [0], [0]>} : vector<2x8x32xbf16>, vector<2x8x32xbf16>, vector<2x8x8xf32> -> vector<2x8x8xf32>
    "tpu.trace_stop"() : () -> ()
    %cst_88 = arith.constant 0.353553385 : f32
    %305 = vector.broadcast %cst_88 : f32 to vector<2x8x8xf32>
    %306 = arith.mulf %304, %305 : vector<2x8x8xf32>
    %307 = vector.broadcast %4 : vector<2x1x8xf32> to vector<2x8x8xf32>
    %308 = arith.addf %306, %307 : vector<2x8x8xf32>
    %cst_89 = arith.constant dense<0xFF800000> : vector<2x8xf32>
    %309 = vector.multi_reduction <maximumf>, %308, %cst_89 [2] : vector<2x8x8xf32> to vector<2x8xf32>
    %310 = vector.shape_cast %309 : vector<2x8xf32> to vector<2x8x1xf32>
    %311 = vector.broadcast %310 : vector<2x8x1xf32> to vector<2x8x8xf32>
    %312 = arith.subf %308, %311 : vector<2x8x8xf32>
    %313 = math.exp %312 : vector<2x8x8xf32>
    %cst_90 = arith.constant dense<0.000000e+00> : vector<2x8xf32>
    %314 = vector.multi_reduction <add>, %313, %cst_90 [2] : vector<2x8x8xf32> to vector<2x8xf32>
    %315 = vector.shape_cast %314 : vector<2x8xf32> to vector<2x8x1xf32>
    %316 = vector.broadcast %315 : vector<2x8x1xf32> to vector<2x8x8xf32>
    %317 = arith.divf %313, %316 : vector<2x8x8xf32>
    %318 = arith.truncf %317 : vector<2x8x8xf32> to vector<2x8x8xbf16>
    %319 = vector.shape_cast %45 : vector<1x32xf32> to vector<1x1x32xf32>
    %320 = vector.broadcast %319 : vector<1x1x32xf32> to vector<2x8x32xf32>
    %321 = arith.mulf %272, %320 : vector<2x8x32xf32>
    %322 = arith.truncf %321 : vector<2x8x32xf32> to vector<2x8x32xbf16>
    "tpu.trace_start"() <{level = 10 : i32, message = "bqk,bkd->bqd"}> : () -> ()
    %cst_91 = arith.constant dense<0.000000e+00> : vector<2x8x32xf32>
    %323 = tpu.matmul %318, %322, %cst_91 {dimension_numbers = #tpu.dot_dimension_numbers<[2], [1], [1], [2], [0, 0, 0, 1, 1, 2], [0], [0]>} : vector<2x8x8xbf16>, vector<2x8x32xbf16>, vector<2x8x32xf32> -> vector<2x8x32xf32>
    "tpu.trace_stop"() : () -> ()
    %324 = arith.addf %299, %323 : vector<2x8x32xf32>
    %325 = vector.shape_cast %52 : vector<1x32xf32> to vector<1x1x32xf32>
    %326 = vector.broadcast %325 : vector<1x1x32xf32> to vector<2x8x32xf32>
    %327 = arith.mulf %268, %326 : vector<2x8x32xf32>
    %328 = arith.truncf %327 : vector<2x8x32xf32> to vector<2x8x32xbf16>
    "tpu.trace_start"() <{level = 10 : i32, message = "bqd,bkd->bqk"}> : () -> ()
    %cst_92 = arith.constant dense<0.000000e+00> : vector<2x8x8xf32>
    %329 = tpu.matmul %328, %273, %cst_92 {dimension_numbers = #tpu.dot_dimension_numbers<[2], [2], [1], [1], [0, 0, 0, 1, 1, 1], [0], [0]>} : vector<2x8x32xbf16>, vector<2x8x32xbf16>, vector<2x8x8xf32> -> vector<2x8x8xf32>
    "tpu.trace_stop"() : () -> ()
    %cst_93 = arith.constant 0.353553385 : f32
    %330 = vector.broadcast %cst_93 : f32 to vector<2x8x8xf32>
    %331 = arith.mulf %329, %330 : vector<2x8x8xf32>
    %332 = vector.broadcast %4 : vector<2x1x8xf32> to vector<2x8x8xf32>
    %333 = arith.addf %331, %332 : vector<2x8x8xf32>
    %cst_94 = arith.constant dense<0xFF800000> : vector<2x8xf32>
    %334 = vector.multi_reduction <maximumf>, %333, %cst_94 [2] : vector<2x8x8xf32> to vector<2x8xf32>
    %335 = vector.shape_cast %334 : vector<2x8xf32> to vector<2x8x1xf32>
    %336 = vector.broadcast %335 : vector<2x8x1xf32> to vector<2x8x8xf32>
    %337 = arith.subf %333, %336 : vector<2x8x8xf32>
    %338 = math.exp %337 : vector<2x8x8xf32>
    %cst_95 = arith.constant dense<0.000000e+00> : vector<2x8xf32>
    %339 = vector.multi_reduction <add>, %338, %cst_95 [2] : vector<2x8x8xf32> to vector<2x8xf32>
    %340 = vector.shape_cast %339 : vector<2x8xf32> to vector<2x8x1xf32>
    %341 = vector.broadcast %340 : vector<2x8x1xf32> to vector<2x8x8xf32>
    %342 = arith.divf %338, %341 : vector<2x8x8xf32>
    %343 = arith.truncf %342 : vector<2x8x8xf32> to vector<2x8x8xbf16>
    %344 = vector.shape_cast %52 : vector<1x32xf32> to vector<1x1x32xf32>
    %345 = vector.broadcast %344 : vector<1x1x32xf32> to vector<2x8x32xf32>
    %346 = arith.mulf %272, %345 : vector<2x8x32xf32>
    %347 = arith.truncf %346 : vector<2x8x32xf32> to vector<2x8x32xbf16>
    "tpu.trace_start"() <{level = 10 : i32, message = "bqk,bkd->bqd"}> : () -> ()
    %cst_96 = arith.constant dense<0.000000e+00> : vector<2x8x32xf32>
    %348 = tpu.matmul %343, %347, %cst_96 {dimension_numbers = #tpu.dot_dimension_numbers<[2], [1], [1], [2], [0, 0, 0, 1, 1, 2], [0], [0]>} : vector<2x8x8xbf16>, vector<2x8x32xbf16>, vector<2x8x32xf32> -> vector<2x8x32xf32>
    "tpu.trace_stop"() : () -> ()
    %349 = arith.addf %324, %348 : vector<2x8x32xf32>
    %350 = vector.shape_cast %59 : vector<1x32xf32> to vector<1x1x32xf32>
    %351 = vector.broadcast %350 : vector<1x1x32xf32> to vector<2x8x32xf32>
    %352 = arith.mulf %268, %351 : vector<2x8x32xf32>
    %353 = arith.truncf %352 : vector<2x8x32xf32> to vector<2x8x32xbf16>
    "tpu.trace_start"() <{level = 10 : i32, message = "bqd,bkd->bqk"}> : () -> ()
    %cst_97 = arith.constant dense<0.000000e+00> : vector<2x8x8xf32>
    %354 = tpu.matmul %353, %273, %cst_97 {dimension_numbers = #tpu.dot_dimension_numbers<[2], [2], [1], [1], [0, 0, 0, 1, 1, 1], [0], [0]>} : vector<2x8x32xbf16>, vector<2x8x32xbf16>, vector<2x8x8xf32> -> vector<2x8x8xf32>
    "tpu.trace_stop"() : () -> ()
    %cst_98 = arith.constant 0.353553385 : f32
    %355 = vector.broadcast %cst_98 : f32 to vector<2x8x8xf32>
    %356 = arith.mulf %354, %355 : vector<2x8x8xf32>
    %357 = vector.broadcast %4 : vector<2x1x8xf32> to vector<2x8x8xf32>
    %358 = arith.addf %356, %357 : vector<2x8x8xf32>
    %cst_99 = arith.constant dense<0xFF800000> : vector<2x8xf32>
    %359 = vector.multi_reduction <maximumf>, %358, %cst_99 [2] : vector<2x8x8xf32> to vector<2x8xf32>
    %360 = vector.shape_cast %359 : vector<2x8xf32> to vector<2x8x1xf32>
    %361 = vector.broadcast %360 : vector<2x8x1xf32> to vector<2x8x8xf32>
    %362 = arith.subf %358, %361 : vector<2x8x8xf32>
    %363 = math.exp %362 : vector<2x8x8xf32>
    %cst_100 = arith.constant dense<0.000000e+00> : vector<2x8xf32>
    %364 = vector.multi_reduction <add>, %363, %cst_100 [2] : vector<2x8x8xf32> to vector<2x8xf32>
    %365 = vector.shape_cast %364 : vector<2x8xf32> to vector<2x8x1xf32>
    %366 = vector.broadcast %365 : vector<2x8x1xf32> to vector<2x8x8xf32>
    %367 = arith.divf %363, %366 : vector<2x8x8xf32>
    %368 = arith.truncf %367 : vector<2x8x8xf32> to vector<2x8x8xbf16>
    %369 = vector.shape_cast %59 : vector<1x32xf32> to vector<1x1x32xf32>
    %370 = vector.broadcast %369 : vector<1x1x32xf32> to vector<2x8x32xf32>
    %371 = arith.mulf %272, %370 : vector<2x8x32xf32>
    %372 = arith.truncf %371 : vector<2x8x32xf32> to vector<2x8x32xbf16>
    "tpu.trace_start"() <{level = 10 : i32, message = "bqk,bkd->bqd"}> : () -> ()
    %cst_101 = arith.constant dense<0.000000e+00> : vector<2x8x32xf32>
    %373 = tpu.matmul %368, %372, %cst_101 {dimension_numbers = #tpu.dot_dimension_numbers<[2], [1], [1], [2], [0, 0, 0, 1, 1, 2], [0], [0]>} : vector<2x8x8xbf16>, vector<2x8x32xbf16>, vector<2x8x32xf32> -> vector<2x8x32xf32>
    "tpu.trace_stop"() : () -> ()
    %374 = arith.addf %349, %373 : vector<2x8x32xf32>
    %375 = vector.shape_cast %374 : vector<2x8x32xf32> to vector<16x32xf32>
    %376 = arith.truncf %375 : vector<16x32xf32> to vector<16x32xbf16>
    %c1_102 = arith.constant 1 : index
    %c0_103 = arith.constant 0 : index
    %c0_104 = arith.constant 0 : index
    %377 = vector.load %arg5[%c1_102, %c0_103, %c0_104] : memref<2x32x32xbf16, #tpu.memory_space<vmem>>, vector<1x32x32xbf16>
    %378 = vector.shape_cast %377 : vector<1x32x32xbf16> to vector<32x32xbf16>
    %cst_105 = arith.constant dense<0.000000e+00> : vector<16x32xf32>
    %379 = tpu.matmul %376, %378, %cst_105 {dimension_numbers = #tpu.dot_dimension_numbers<[1], [0], [0], [1], [0, 0, 1, 1], [], []>} : vector<16x32xbf16>, vector<32x32xbf16>, vector<16x32xf32> -> vector<16x32xf32>
    %c5 = arith.constant 5 : index
    %c0_106 = arith.constant 0 : index
    %380 = vector.load %arg9[%c5, %c0_106] : memref<24x128xf32, #tpu.memory_space<vmem>>, vector<1x32xf32>
    %381 = vector.broadcast %380 : vector<1x32xf32> to vector<16x32xf32>
    %382 = arith.addf %379, %381 : vector<16x32xf32>
    %383 = arith.addf %259, %382 : vector<16x32xf32>
    %c12 = arith.constant 12 : index
    %c0_107 = arith.constant 0 : index
    %384 = vector.load %arg9[%c12, %c0_107] : memref<24x128xf32, #tpu.memory_space<vmem>>, vector<1x32xf32>
    %c13 = arith.constant 13 : index
    %c0_108 = arith.constant 0 : index
    %385 = vector.load %arg9[%c13, %c0_108] : memref<24x128xf32, #tpu.memory_space<vmem>>, vector<1x32xf32>
    %cst_109 = arith.constant dense<0.000000e+00> : vector<16xf32>
    %386 = vector.multi_reduction <add>, %383, %cst_109 [1] : vector<16x32xf32> to vector<16xf32>
    %387 = vector.shape_cast %386 : vector<16xf32> to vector<16x1xf32>
    %cst_110 = arith.constant 3.200000e+01 : f32
    %388 = vector.broadcast %cst_110 : f32 to vector<16x1xf32>
    %389 = arith.divf %387, %388 : vector<16x1xf32>
    %390 = vector.broadcast %389 : vector<16x1xf32> to vector<16x32xf32>
    %391 = arith.subf %383, %390 : vector<16x32xf32>
    %392 = arith.mulf %391, %391 : vector<16x32xf32>
    %cst_111 = arith.constant dense<0.000000e+00> : vector<16xf32>
    %393 = vector.multi_reduction <add>, %392, %cst_111 [1] : vector<16x32xf32> to vector<16xf32>
    %394 = vector.shape_cast %393 : vector<16xf32> to vector<16x1xf32>
    %cst_112 = arith.constant 3.200000e+01 : f32
    %395 = vector.broadcast %cst_112 : f32 to vector<16x1xf32>
    %396 = arith.divf %394, %395 : vector<16x1xf32>
    %397 = vector.broadcast %389 : vector<16x1xf32> to vector<16x32xf32>
    %398 = arith.subf %383, %397 : vector<16x32xf32>
    %cst_113 = arith.constant 9.99999996E-13 : f32
    %399 = vector.broadcast %cst_113 : f32 to vector<16x1xf32>
    %400 = arith.addf %396, %399 : vector<16x1xf32>
    %401 = math.rsqrt %400 : vector<16x1xf32>
    %402 = vector.broadcast %401 : vector<16x1xf32> to vector<16x32xf32>
    %403 = arith.mulf %398, %402 : vector<16x32xf32>
    %404 = vector.broadcast %384 : vector<1x32xf32> to vector<16x32xf32>
    %405 = arith.mulf %403, %404 : vector<16x32xf32>
    %406 = vector.broadcast %385 : vector<1x32xf32> to vector<16x32xf32>
    %407 = arith.addf %405, %406 : vector<16x32xf32>
    %408 = arith.truncf %407 : vector<16x32xf32> to vector<16x32xbf16>
    %c1_114 = arith.constant 1 : index
    %c0_115 = arith.constant 0 : index
    %c0_116 = arith.constant 0 : index
    %409 = vector.load %arg6[%c1_114, %c0_115, %c0_116] : memref<2x32x64xbf16, #tpu.memory_space<vmem>>, vector<1x32x64xbf16>
    %410 = vector.shape_cast %409 : vector<1x32x64xbf16> to vector<32x64xbf16>
    %cst_117 = arith.constant dense<0.000000e+00> : vector<16x64xf32>
    %411 = tpu.matmul %408, %410, %cst_117 {dimension_numbers = #tpu.dot_dimension_numbers<[1], [0], [0], [1], [0, 0, 1, 1], [], []>} : vector<16x32xbf16>, vector<32x64xbf16>, vector<16x64xf32> -> vector<16x64xf32>
    %c7 = arith.constant 7 : index
    %c0_118 = arith.constant 0 : index
    %412 = vector.load %arg9[%c7, %c0_118] : memref<24x128xf32, #tpu.memory_space<vmem>>, vector<1x64xf32>
    %413 = vector.broadcast %412 : vector<1x64xf32> to vector<16x64xf32>
    %414 = arith.addf %411, %413 : vector<16x64xf32>
    %415 = arith.mulf %414, %414 : vector<16x64xf32>
    %416 = arith.mulf %414, %415 : vector<16x64xf32>
    %cst_119 = arith.constant 4.471500e-02 : f32
    %417 = vector.broadcast %cst_119 : f32 to vector<16x64xf32>
    %418 = arith.mulf %417, %416 : vector<16x64xf32>
    %419 = arith.addf %414, %418 : vector<16x64xf32>
    %cst_120 = arith.constant 0.797884583 : f32
    %420 = vector.broadcast %cst_120 : f32 to vector<16x64xf32>
    %421 = arith.mulf %420, %419 : vector<16x64xf32>
    %422 = math.tanh %421 : vector<16x64xf32>
    %cst_121 = arith.constant 1.000000e+00 : f32
    %423 = vector.broadcast %cst_121 : f32 to vector<16x64xf32>
    %424 = arith.addf %423, %422 : vector<16x64xf32>
    %cst_122 = arith.constant 5.000000e-01 : f32
    %425 = vector.broadcast %cst_122 : f32 to vector<16x64xf32>
    %426 = arith.mulf %425, %424 : vector<16x64xf32>
    %427 = arith.mulf %414, %426 : vector<16x64xf32>
    %428 = arith.truncf %427 : vector<16x64xf32> to vector<16x64xbf16>
    %c1_123 = arith.constant 1 : index
    %c0_124 = arith.constant 0 : index
    %c0_125 = arith.constant 0 : index
    %429 = vector.load %arg7[%c1_123, %c0_124, %c0_125] : memref<2x64x32xbf16, #tpu.memory_space<vmem>>, vector<1x64x32xbf16>
    %430 = vector.shape_cast %429 : vector<1x64x32xbf16> to vector<64x32xbf16>
    %cst_126 = arith.constant dense<0.000000e+00> : vector<16x32xf32>
    %431 = tpu.matmul %428, %430, %cst_126 {dimension_numbers = #tpu.dot_dimension_numbers<[1], [0], [0], [1], [0, 0, 1, 1], [], []>} : vector<16x64xbf16>, vector<64x32xbf16>, vector<16x32xf32> -> vector<16x32xf32>
    %c9 = arith.constant 9 : index
    %c0_127 = arith.constant 0 : index
    %432 = vector.load %arg9[%c9, %c0_127] : memref<24x128xf32, #tpu.memory_space<vmem>>, vector<1x32xf32>
    %433 = vector.broadcast %432 : vector<1x32xf32> to vector<16x32xf32>
    %434 = arith.addf %431, %433 : vector<16x32xf32>
    %435 = arith.addf %407, %434 : vector<16x32xf32>
    %c16 = arith.constant 16 : index
    %c0_128 = arith.constant 0 : index
    %436 = vector.load %arg9[%c16, %c0_128] : memref<24x128xf32, #tpu.memory_space<vmem>>, vector<1x32xf32>
    %c17 = arith.constant 17 : index
    %c0_129 = arith.constant 0 : index
    %437 = vector.load %arg9[%c17, %c0_129] : memref<24x128xf32, #tpu.memory_space<vmem>>, vector<1x32xf32>
    %cst_130 = arith.constant dense<0.000000e+00> : vector<16xf32>
    %438 = vector.multi_reduction <add>, %435, %cst_130 [1] : vector<16x32xf32> to vector<16xf32>
    %439 = vector.shape_cast %438 : vector<16xf32> to vector<16x1xf32>
    %cst_131 = arith.constant 3.200000e+01 : f32
    %440 = vector.broadcast %cst_131 : f32 to vector<16x1xf32>
    %441 = arith.divf %439, %440 : vector<16x1xf32>
    %442 = vector.broadcast %441 : vector<16x1xf32> to vector<16x32xf32>
    %443 = arith.subf %435, %442 : vector<16x32xf32>
    %444 = arith.mulf %443, %443 : vector<16x32xf32>
    %cst_132 = arith.constant dense<0.000000e+00> : vector<16xf32>
    %445 = vector.multi_reduction <add>, %444, %cst_132 [1] : vector<16x32xf32> to vector<16xf32>
    %446 = vector.shape_cast %445 : vector<16xf32> to vector<16x1xf32>
    %cst_133 = arith.constant 3.200000e+01 : f32
    %447 = vector.broadcast %cst_133 : f32 to vector<16x1xf32>
    %448 = arith.divf %446, %447 : vector<16x1xf32>
    %449 = vector.broadcast %441 : vector<16x1xf32> to vector<16x32xf32>
    %450 = arith.subf %435, %449 : vector<16x32xf32>
    %cst_134 = arith.constant 9.99999996E-13 : f32
    %451 = vector.broadcast %cst_134 : f32 to vector<16x1xf32>
    %452 = arith.addf %448, %451 : vector<16x1xf32>
    %453 = math.rsqrt %452 : vector<16x1xf32>
    %454 = vector.broadcast %453 : vector<16x1xf32> to vector<16x32xf32>
    %455 = arith.mulf %450, %454 : vector<16x32xf32>
    %456 = vector.broadcast %436 : vector<1x32xf32> to vector<16x32xf32>
    %457 = arith.mulf %455, %456 : vector<16x32xf32>
    %458 = vector.broadcast %437 : vector<1x32xf32> to vector<16x32xf32>
    %459 = arith.addf %457, %458 : vector<16x32xf32>
    %460 = vector.shape_cast %459 : vector<16x32xf32> to vector<2x8x32xf32>
    %461 = vector.extract_strided_slice %460 {offsets = [0, 0, 0], sizes = [2, 1, 32], strides = [1, 1, 1]} : vector<2x8x32xf32> to vector<2x1x32xf32>
    %462 = vector.shape_cast %461 : vector<2x1x32xf32> to vector<2x32xf32>
    %463 = arith.truncf %462 : vector<2x32xf32> to vector<2x32xbf16>
    %c0_135 = arith.constant 0 : index
    %c0_136 = arith.constant 0 : index
    %464 = vector.load %arg8[%c0_135, %c0_136] : memref<32x32xbf16, #tpu.memory_space<vmem>>, vector<32x32xbf16>
    %cst_137 = arith.constant dense<0.000000e+00> : vector<2x32xf32>
    %465 = tpu.matmul %463, %464, %cst_137 {dimension_numbers = #tpu.dot_dimension_numbers<[1], [0], [0], [1], [0, 0, 1, 1], [], []>} : vector<2x32xbf16>, vector<32x32xbf16>, vector<2x32xf32> -> vector<2x32xf32>
    %c18 = arith.constant 18 : index
    %c0_138 = arith.constant 0 : index
    %466 = vector.load %arg9[%c18, %c0_138] : memref<24x128xf32, #tpu.memory_space<vmem>>, vector<1x32xf32>
    %467 = vector.broadcast %466 : vector<1x32xf32> to vector<2x32xf32>
    %468 = arith.addf %465, %467 : vector<2x32xf32>
    %469 = math.tanh %468 : vector<2x32xf32>
    "tpu.trace_start"() <{level = 10 : i32, message = "bos,bsh->boh"}> : () -> ()
    %cst_139 = arith.constant dense<0.000000e+00> : vector<2x1x32xf32>
    %470 = tpu.matmul %0, %460, %cst_139 {dimension_numbers = #tpu.dot_dimension_numbers<[2], [1], [1], [2], [0, 0, 0, 1, 1, 2], [0], [0]>} : vector<2x1x8xf32>, vector<2x8x32xf32>, vector<2x1x32xf32> -> vector<2x1x32xf32>
    "tpu.trace_stop"() : () -> ()
    %cst_140 = arith.constant dense<0.000000e+00> : vector<2x1xf32>
    %471 = vector.multi_reduction <add>, %0, %cst_140 [2] : vector<2x1x8xf32> to vector<2x1xf32>
    %472 = vector.shape_cast %471 : vector<2x1xf32> to vector<2x1x1xf32>
    %cst_141 = arith.constant 1.000000e+00 : f32
    %473 = vector.broadcast %cst_141 : f32 to vector<2x1x1xf32>
    %474 = arith.maximumf %472, %473 : vector<2x1x1xf32>
    %475 = vector.broadcast %474 : vector<2x1x1xf32> to vector<2x1x32xf32>
    %476 = arith.divf %470, %475 : vector<2x1x32xf32>
    %477 = vector.shape_cast %476 : vector<2x1x32xf32> to vector<2x32xf32>
    %c0_142 = arith.constant 0 : index
    %c0_143 = arith.constant 0 : index
    %c0_144 = arith.constant 0 : index
    %478 = vector.load %arg3[%c0_142, %c0_143, %c0_144] : memref<2x8x32xf32, #tpu.memory_space<vmem>>, vector<2x8x32xf32>
    %cst_145 = arith.constant dense<0.000000e+00> : vector<2x32xf32>
    %479 = vector.multi_reduction <add>, %478, %cst_145 [1] : vector<2x8x32xf32> to vector<2x32xf32>
    %cst_146 = arith.constant 8.000000e+00 : f32
    %480 = vector.broadcast %cst_146 : f32 to vector<2x32xf32>
    %481 = arith.divf %479, %480 : vector<2x32xf32>
    %c19 = arith.constant 19 : index
    %c0_147 = arith.constant 0 : index
    %482 = vector.load %arg9[%c19, %c0_147] : memref<24x128xf32, #tpu.memory_space<vmem>>, vector<1x32xf32>
    %483 = vector.broadcast %482 : vector<1x32xf32> to vector<2x32xf32>
    %484 = arith.mulf %469, %483 : vector<2x32xf32>
    %c20 = arith.constant 20 : index
    %c0_148 = arith.constant 0 : index
    %485 = vector.load %arg9[%c20, %c0_148] : memref<24x128xf32, #tpu.memory_space<vmem>>, vector<1x32xf32>
    %486 = vector.broadcast %485 : vector<1x32xf32> to vector<2x32xf32>
    %487 = arith.mulf %477, %486 : vector<2x32xf32>
    %488 = arith.addf %484, %487 : vector<2x32xf32>
    %c21 = arith.constant 21 : index
    %c0_149 = arith.constant 0 : index
    %489 = vector.load %arg9[%c21, %c0_149] : memref<24x128xf32, #tpu.memory_space<vmem>>, vector<1x32xf32>
    %490 = vector.broadcast %489 : vector<1x32xf32> to vector<2x32xf32>
    %491 = arith.mulf %481, %490 : vector<2x32xf32>
    %492 = arith.addf %488, %491 : vector<2x32xf32>
    %cst_150 = arith.constant dense<0.000000e+00> : vector<2xf32>
    %493 = vector.multi_reduction <add>, %492, %cst_150 [1] : vector<2x32xf32> to vector<2xf32>
    %494 = vector.shape_cast %493 : vector<2xf32> to vector<2x1xf32>
    %c22 = arith.constant 22 : index
    %c0_151 = arith.constant 0 : index
    %495 = vector.load %arg9[%c22, %c0_151] : memref<24x128xf32, #tpu.memory_space<vmem>>, vector<1x1xf32>
    %496 = vector.broadcast %495 : vector<1x1xf32> to vector<2x1xf32>
    %497 = arith.addf %494, %496 : vector<2x1xf32>
    %c0_152 = arith.constant 0 : index
    %c0_153 = arith.constant 0 : index
    %c0_154 = arith.constant 0 : index
    %498 = vector.load %arg10[%c0_152, %c0_153, %c0_154] : memref<1x2x1xf32, #tpu.memory_space<vmem>>, vector<1x2x1xf32>
    %499 = vector.shape_cast %498 : vector<1x2x1xf32> to vector<2x1xf32>
    %500 = vector.shape_cast %497 : vector<2x1xf32> to vector<1x2x1xf32>
    tpu.vector_store %arg10[%c0_152, %c0_153, %c0_154], %500 {strides = array<i32>} : memref<1x2x1xf32, #tpu.memory_space<vmem>>, vector<1x2x1xf32>,
    return
  }
  func.func @transform_0(%arg0: i32) -> (i32, i32, i32) {
    %c0_i32 = arith.constant 0 : i32
    %c0_i32_0 = arith.constant 0 : i32
    %c0_i32_1 = arith.constant 0 : i32
    return %arg0, %c0_i32, %c0_i32_0 : i32, i32, i32
  }
  func.func @transform_1(%arg0: i32) -> (i32, i32, i32) {
    %c0_i32 = arith.constant 0 : i32
    %c0_i32_0 = arith.constant 0 : i32
    %c0_i32_1 = arith.constant 0 : i32
    return %arg0, %c0_i32, %c0_i32_0 : i32, i32, i32
  }
  func.func @transform_2(%arg0: i32) -> (i32, i32, i32) {
    %c0_i32 = arith.constant 0 : i32
    %c0_i32_0 = arith.constant 0 : i32
    %c0_i32_1 = arith.constant 0 : i32
    return %arg0, %c0_i32, %c0_i32_0 : i32, i32, i32
  }
  func.func @transform_3(%arg0: i32) -> (i32, i32, i32) {
    %c0_i32 = arith.constant 0 : i32
    %c0_i32_0 = arith.constant 0 : i32
    %c0_i32_1 = arith.constant 0 : i32
    %c0_i32_2 = arith.constant 0 : i32
    return %c0_i32, %c0_i32_0, %c0_i32_1 : i32, i32, i32
  }
  func.func @transform_4(%arg0: i32) -> (i32, i32, i32) {
    %c0_i32 = arith.constant 0 : i32
    %c0_i32_0 = arith.constant 0 : i32
    %c0_i32_1 = arith.constant 0 : i32
    %c0_i32_2 = arith.constant 0 : i32
    return %c0_i32, %c0_i32_0, %c0_i32_1 : i32, i32, i32
  }
  func.func @transform_5(%arg0: i32) -> (i32, i32, i32) {
    %c0_i32 = arith.constant 0 : i32
    %c0_i32_0 = arith.constant 0 : i32
    %c0_i32_1 = arith.constant 0 : i32
    %c0_i32_2 = arith.constant 0 : i32
    return %c0_i32, %c0_i32_0, %c0_i32_1 : i32, i32, i32
  }
  func.func @transform_6(%arg0: i32) -> (i32, i32, i32) {
    %c0_i32 = arith.constant 0 : i32
    %c0_i32_0 = arith.constant 0 : i32
    %c0_i32_1 = arith.constant 0 : i32
    %c0_i32_2 = arith.constant 0 : i32
    return %c0_i32, %c0_i32_0, %c0_i32_1 : i32, i32, i32
  }
  func.func @transform_7(%arg0: i32) -> (i32, i32) {
    %c0_i32 = arith.constant 0 : i32
    %c0_i32_0 = arith.constant 0 : i32
    %c0_i32_1 = arith.constant 0 : i32
    return %c0_i32, %c0_i32_0 : i32, i32
  }
  func.func @transform_8(%arg0: i32) -> (i32, i32) {
    %c0_i32 = arith.constant 0 : i32
    %c0_i32_0 = arith.constant 0 : i32
    %c0_i32_1 = arith.constant 0 : i32
    return %c0_i32, %c0_i32_0 : i32, i32
  }
  func.func @transform_9(%arg0: i32) -> (i32, i32, i32) {
    %c0_i32 = arith.constant 0 : i32
    %c0_i32_0 = arith.constant 0 : i32
    %c0_i32_1 = arith.constant 0 : i32
    return %arg0, %c0_i32, %c0_i32_0 : i32, i32, i32
  }
}

</mosaic_0001>

<llo_original>
// kernel: bert_regression_forward.1
$region0: #{bert_regression_forward.1}
  #allocation0 [shape = 'u32[]', space=smem, size = 0x4, offset = 0x4, fixed_abs, tag = 'smem constant byte address 0x4 - core index']
  #allocation1 [shape = 'u32[144,128]{1,0:T(1,128)}', space=vmem, size = 0x12000, scoped, tag = 'internal scratch']
  %s0 = inlined_call_operand.vmem [shape: f32[2,8,32], index: 0, kind: input, shape index: {}]
  %s1 = inlined_call_operand.vmem [shape: f32[2,1,8], index: 1, kind: input, shape index: {}]
  %s2 = inlined_call_operand.vmem [shape: f32[2,8,32], index: 2, kind: input, shape index: {}]
  %s3 = inlined_call_operand.vmem [shape: bf16[2,32,96], index: 3, kind: input, shape index: {}]
  %s4 = inlined_call_operand.vmem [shape: bf16[2,32,32], index: 4, kind: input, shape index: {}]
  %s5 = inlined_call_operand.vmem [shape: bf16[2,32,64], index: 5, kind: input, shape index: {}]
  %s6 = inlined_call_operand.vmem [shape: bf16[2,64,32], index: 6, kind: input, shape index: {}]
  %s7 = inlined_call_operand.vmem [shape: bf16[32,32], index: 7, kind: input, shape index: {}]
  %s8 = inlined_call_operand.vmem [shape: f32[24,128], index: 8, kind: input, shape index: {}]
  %s9 = inlined_call_operand.vmem [shape: f32[1,2,1], index: 9, kind: output, shape index: {}]
  %s10 = sld [smem:[#allocation0]]
  $region46: #{bert_regression_forward.1} parent=0
    _
  %s12 = ssub.s32 1, %s10
  %s13 = scalar_select 0, %s12, %s10
  // Predicated region
  $region2: #{bert_regression_forward.1} parent=0 // pred_check
    _
  $region3: #{bert_regression_forward.1} parent=0 // pred_check_branch
    %15 = sbr.rel (0) target = $region5
  $region4: #{bert_regression_forward.1} parent=0 // pred_region
    _
  $region5: #{bert_regression_forward.1} parent=0 // pred_fallthru
    _
  // Predicated region
  $region6: #{bert_regression_forward.1} parent=0 // pred_check
    _
  $region7: #{bert_regression_forward.1} parent=0 // pred_check_branch
    %17 = sbr.rel (0) target = $region9
  $region8: #{bert_regression_forward.1} parent=0 // pred_region
    _
  $region9: #{bert_regression_forward.1} parent=0 // pred_fallthru
    _
  // Predicated region
  $region10: #{bert_regression_forward.1} parent=0 // pred_check
    _
  $region11: #{bert_regression_forward.1} parent=0 // pred_check_branch
    %19 = sbr.rel (0) target = $region13
  $region12: #{bert_regression_forward.1} parent=0 // pred_region
    _
  $region13: #{bert_regression_forward.1} parent=0 // pred_fallthru
    _
  // Predicated region
  $region14: #{bert_regression_forward.1} parent=0 // pred_check
    _
  $region15: #{bert_regression_forward.1} parent=0 // pred_check_branch
    %21 = sbr.rel (0) target = $region17
  $region16: #{bert_regression_forward.1} parent=0 // pred_region
    _
  $region17: #{bert_regression_forward.1} parent=0 // pred_fallthru
    _
  // Predicated region
  $region18: #{bert_regression_forward.1} parent=0 // pred_check
    _
  $region19: #{bert_regression_forward.1} parent=0 // pred_check_branch
    %23 = sbr.rel (0) target = $region21
  $region20: #{bert_regression_forward.1} parent=0 // pred_region
    _
  $region21: #{bert_regression_forward.1} parent=0 // pred_fallthru
    _
  // Predicated region
  $region22: #{bert_regression_forward.1} parent=0 // pred_check
    _
  $region23: #{bert_regression_forward.1} parent=0 // pred_check_branch
    %25 = sbr.rel (0) target = $region25
  $region24: #{bert_regression_forward.1} parent=0 // pred_region
    _
  $region25: #{bert_regression_forward.1} parent=0 // pred_fallthru
    _
  // Predicated region
  $region26: #{bert_regression_forward.1} parent=0 // pred_check
    _
  $region27: #{bert_regression_forward.1} parent=0 // pred_check_branch
    %27 = sbr.rel (0) target = $region29
  $region28: #{bert_regression_forward.1} parent=0 // pred_region
    _
  $region29: #{bert_regression_forward.1} parent=0 // pred_fallthru
    _
  // Predicated region
  $region30: #{bert_regression_forward.1} parent=0 // pred_check
    _
  $region31: #{bert_regression_forward.1} parent=0 // pred_check_branch
    %29 = sbr.rel (0) target = $region33
  $region32: #{bert_regression_forward.1} parent=0 // pred_region
    _
  $region33: #{bert_regression_forward.1} parent=0 // pred_fallthru
    _
  // Predicated region
  $region34: #{bert_regression_forward.1} parent=0 // pred_check
    _
  $region35: #{bert_regression_forward.1} parent=0 // pred_check_branch
    %31 = sbr.rel (0) target = $region37
  $region36: #{bert_regression_forward.1} parent=0 // pred_region
    _
  $region37: #{bert_regression_forward.1} parent=0 // pred_fallthru
    _
  %v33 = vld [vmem:[%s1] sm:$0x1]
  %v34 = vld [vmem:[%s1 + $0x1] sm:$0x1]
  %v35 = vsub.f32 1.0, %v33
  %v36 = vsub.f32 1.0, %v34
  %v37 = vmul.f32 %v35, -1e+09
  %v38 = vmul.f32 %v36, -1e+09
  %v39 = vld [vmem:[%s0] sm:$0xff]
  %v40 = vld [vmem:[%s0 + $0x8] sm:$0xff]
  %v41 = vld [vmem:[%s8] sm:$0x1]
  %v42 = vld [vmem:[%s8 + $0x1] sm:$0x1]
  %vm43 = vcmask 261120
  %v44 = vsel %vm43, %v39, 0.0
  %45 = vadd.xlane.f32.xlu0 %v44
  %v46 = vpop.xlane.xlu0 %45
  %v47 = vsel %vm43, %v40, 0.0
  %48 = vadd.xlane.f32.xlu0 %v47
  %v49 = vpop.xlane.xlu0 %48
  %v50 = vrcp.pop 32.0
  %v51 = vmul.f32 %v46, %v50
  %v52 = vmul.f32 %v49, %v50
  %v53 = vsub.f32 %v39, %v51
  %v54 = vsub.f32 %v40, %v52
  %v55 = vmul.f32 %v53, %v53
  %v56 = vmul.f32 %v54, %v54
  %v57 = vsel %vm43, %v55, 0.0
  %58 = vadd.xlane.f32.xlu0 %v57
  %v59 = vpop.xlane.xlu0 %58
  %v60 = vsel %vm43, %v56, 0.0
  %61 = vadd.xlane.f32.xlu0 %v60
  %v62 = vpop.xlane.xlu0 %61
  %v63 = vmul.f32 %v59, %v50
  %v64 = vmul.f32 %v62, %v50
  %v65 = vadd.f32 %v63, 1e-12
  %v66 = vadd.f32 %v64, 1e-12
  %v67 = vrsqrt.pop %v65
  %v68 = vrsqrt.pop %v66
  %v69 = vmul.f32 %v53, %v67
  %v70 = vmul.f32 %v54, %v68
  %v71 = vlaneseq
  %v72 = vshrl.u32 %v71, 7
  %v73 = vsub.s32 0, %v72
  %v74 = vrot.slane %v41, %v73
  %v75 = vmul.f32 %v69, %v74
  %v76 = vmul.f32 %v70, %v74
  %v77 = vlaneseq
  %v78 = vshrl.u32 %v77, 7
  %v79 = vsub.s32 0, %v78
  %v80 = vrot.slane %v42, %v79
  %v81 = vadd.f32 %v75, %v80
  %v82 = vadd.f32 %v76, %v80
  %v83 = vlaneseq
  %v84 = vand.u32 %v83, 127
  %vm85 = vcmp.ge.s32.totalorder %v84, 0
  %vm86 = vcmp.lt.s32.totalorder %v84, 8
  %vm87 = vmand %vm85, %vm86
  %v88 = vsel %vm87, 1, 0
  %v89 = vcvt.s32.f32 %v88
  %vm90 = vcmp.ge.s32.totalorder %v84, 8
  %vm91 = vcmp.lt.s32.totalorder %v84, 16
  %vm92 = vmand %vm90, %vm91
  %v93 = vsel %vm92, 1, 0
  %v94 = vcvt.s32.f32 %v93
  %vm95 = vcmp.ge.s32.totalorder %v84, 16
  %vm96 = vcmp.lt.s32.totalorder %v84, 24
  %vm97 = vmand %vm95, %vm96
  %v98 = vsel %vm97, 1, 0
  %v99 = vcvt.s32.f32 %v98
  %vm100 = vcmp.ge.s32.totalorder %v84, 24
  %vm101 = vcmp.lt.s32.totalorder %v84, 32
  %vm102 = vmand %vm100, %vm101
  %v103 = vsel %vm102, 1, 0
  %v104 = vcvt.s32.f32 %v103
  %v105 = vpack.c.bf16 %v82, %v81
  %v106 = vld [vmem:[%s3] sm:$0xf]
  %v107 = vld [vmem:[%s3 + $0x4] sm:$0xf]
  %v108 = vld [vmem:[%s3 + $0x8] sm:$0xf]
  %v109 = vld [vmem:[%s3 + $0xc] sm:$0xf]
  %v110 = vld [vmem:[%s8 + $0x2] sm:$0x1]
  %v111 = vlaneseq
  %v112 = vshrl.u32 %v111, 7
  %v113 = vsub.s32 0, %v112
  %v114 = vrot.slane %v110, %v113
  %v119 = vunpack.c.l.b16 %v106
  %v120 = vunpack.c.l.b16 %v107
  %v121 = vunpack.c.l.b16 %v108
  %v122 = vunpack.c.l.b16 %v109
  %v123 = vpack.c.b16 %v120, %v119
  %v124 = vpack.c.b16 %v122, %v121
  %v128 = vsel %vm43, %v105, 0
  %130 = vmatprep.subr.bf16.mxu0 0
  %131 = vmatpush1.bf16.msra.mxu0 0
  %132 = vmatprep.subr.bf16.mxu0 0
  %133 = vmatpush1.bf16.msra.mxu0 0
  %134 = vmatprep.subr.bf16.mxu0 0
  %135 = vmatpush1.bf16.msra.mxu0 0
  %136 = vmatprep.subr.bf16.mxu0 0
  %137 = vmatpush1.bf16.msra.mxu0 0
  %138 = vmatprep.subr.bf16.mxu0 0
  %139 = vmatpush1.bf16.msra.mxu0 0
  %140 = vmatprep.subr.bf16.mxu0 0
  %141 = vmatpush1.bf16.msra.mxu0 0
  %142 = vmatprep.subr.bf16.mxu0 0
  %143 = vmatpush1.bf16.msra.mxu0 %v124
  %144 = vmatprep.subr.bf16.mxu0 0
  %145 = vmatpush1.bf16.msra.mxu0 %v123
  %146 = vmatprep.subr.bf16.mxu0 0
  %147 = vmatpush2.bf16.msra.mxu0 0
  %148 = vmatprep.subr.bf16.mxu0 0
  %149 = vmatpush2.bf16.msra.mxu0 0
  %150 = vmatprep.subr.bf16.mxu0 0
  %151 = vmatpush2.bf16.msra.mxu0 0
  %152 = vmatprep.subr.bf16.mxu0 0
  %153 = vmatpush2.bf16.msra.mxu0 0
  %154 = vmatprep.subr.bf16.mxu0 0
  %155 = vmatpush2.bf16.msra.mxu0 0
  %156 = vmatprep.subr.bf16.mxu0 0
  %157 = vmatpush2.bf16.msra.mxu0 0
  %158 = vmatprep.subr.bf16.mxu0 0
  %159 = vmatpush2.bf16.msra.mxu0 0
  %160 = vmatprep.subr.bf16.mxu0 0
  %161 = vmatpush2.bf16.msra.mxu0 0
  %162 = vmatprep.mubr.bf16.mxu0 0
  %163 = vmatmul.mubr.bf16.gmra.mxu0 %v128
  %v164 = vpop.f32.mrf.mxu0
  %v165 = vadd.f32 %v114, %v164
  %v166 = vpop.f32.mrf.mxu0
  %v167 = vpop.f32.mrf.mxu0
  %v168 = vadd.f32 %v114, %v167
  %v169 = vpop.f32.mrf.mxu0
  %170 = vdwg.mxu0
  %v171 = vpack.c.bf16 %v165, %v165
  %v172 = vpack.c.bf16 %v168, %v168
  %v173 = vmul.f32 %v165, %v89
  %v174 = vmul.f32 %v168, %v89
  %v175 = vpack.c.bf16 %v173, %v173
  %v176 = vpack.c.bf16 %v174, %v174
  %178 = vrot.lane.b32.xlu0 %v171, 96
  %v179 = vpop.permute.xlu0 %178
  %v181 = vsel %vm43, %v175, 0
  %v184 = vsel %vm43, %v179, 0
  %186 = vmatprep.subr.bf16.mxu0 0
  %187 = vmatpush1.bf16.xpose.msra.mxu0 0
  %188 = vmatprep.subr.bf16.mxu0 0
  %189 = vmatpush1.bf16.xpose.msra.mxu0 0
  %190 = vmatprep.subr.bf16.mxu0 0
  %191 = vmatpush1.bf16.xpose.msra.mxu0 0
  %192 = vmatprep.subr.bf16.mxu0 0
  %193 = vmatpush1.bf16.xpose.msra.mxu0 0
  %194 = vmatprep.subr.bf16.mxu0 0
  %195 = vmatpush1.bf16.xpose.msra.mxu0 0
  %196 = vmatprep.subr.bf16.mxu0 0
  %197 = vmatpush1.bf16.xpose.msra.mxu0 0
  %198 = vmatprep.subr.bf16.mxu0 0
  %199 = vmatpush1.bf16.xpose.msra.mxu0 0
  %200 = vmatprep.subr.bf16.mxu0 0
  %201 = vmatpush1.bf16.xpose.msra.mxu0 %v184
  %202 = vmatprep.subr.bf16.mxu0 0
  %203 = vmatpush2.bf16.xpose.msra.mxu0 0
  %204 = vmatprep.subr.bf16.mxu0 0
  %205 = vmatpush2.bf16.xpose.msra.mxu0 0
  %206 = vmatprep.subr.bf16.mxu0 0
  %207 = vmatpush2.bf16.xpose.msra.mxu0 0
  %208 = vmatprep.subr.bf16.mxu0 0
  %209 = vmatpush2.bf16.xpose.msra.mxu0 0
  %210 = vmatprep.subr.bf16.mxu0 0
  %211 = vmatpush2.bf16.xpose.msra.mxu0 0
  %212 = vmatprep.subr.bf16.mxu0 0
  %213 = vmatpush2.bf16.xpose.msra.mxu0 0
  %214 = vmatprep.subr.bf16.mxu0 0
  %215 = vmatpush2.bf16.xpose.msra.mxu0 0
  %216 = vmatprep.subr.bf16.mxu0 0
  %217 = vmatpush2.bf16.xpose.msra.mxu0 0
  %218 = vmatprep.mubr.bf16.mxu0 0
  %219 = vmatmul.mubr.bf16.gmra.mxu0 %v181
  %v220 = vpop.f32.mrf.mxu0
  %v221 = vadd.f32 0.0, %v220
  %v222 = vpop.f32.mrf.mxu0
  %v223 = vpop.f32.mrf.mxu0
  %v224 = vpop.f32.mrf.mxu0
  %225 = vdwg.mxu0
  %227 = vrot.lane.b32.xlu0 %v172, 96
  %v228 = vpop.permute.xlu0 %227
  %v230 = vsel %vm43, %v176, 0
  %v233 = vsel %vm43, %v228, 0
  %235 = vmatprep.subr.bf16.mxu0 0
  %236 = vmatpush1.bf16.xpose.msra.mxu0 0
  %237 = vmatprep.subr.bf16.mxu0 0
  %238 = vmatpush1.bf16.xpose.msra.mxu0 0
  %239 = vmatprep.subr.bf16.mxu0 0
  %240 = vmatpush1.bf16.xpose.msra.mxu0 0
  %241 = vmatprep.subr.bf16.mxu0 0
  %242 = vmatpush1.bf16.xpose.msra.mxu0 0
  %243 = vmatprep.subr.bf16.mxu0 0
  %244 = vmatpush1.bf16.xpose.msra.mxu0 0
  %245 = vmatprep.subr.bf16.mxu0 0
  %246 = vmatpush1.bf16.xpose.msra.mxu0 0
  %247 = vmatprep.subr.bf16.mxu0 0
  %248 = vmatpush1.bf16.xpose.msra.mxu0 0
  %249 = vmatprep.subr.bf16.mxu0 0
  %250 = vmatpush1.bf16.xpose.msra.mxu0 %v233
  %251 = vmatprep.subr.bf16.mxu0 0
  %252 = vmatpush2.bf16.xpose.msra.mxu0 0
  %253 = vmatprep.subr.bf16.mxu0 0
  %254 = vmatpush2.bf16.xpose.msra.mxu0 0
  %255 = vmatprep.subr.bf16.mxu0 0
  %256 = vmatpush2.bf16.xpose.msra.mxu0 0
  %257 = vmatprep.subr.bf16.mxu0 0
  %258 = vmatpush2.bf16.xpose.msra.mxu0 0
  %259 = vmatprep.subr.bf16.mxu0 0
  %260 = vmatpush2.bf16.xpose.msra.mxu0 0
  %261 = vmatprep.subr.bf16.mxu0 0
  %262 = vmatpush2.bf16.xpose.msra.mxu0 0
  %263 = vmatprep.subr.bf16.mxu0 0
  %264 = vmatpush2.bf16.xpose.msra.mxu0 0
  %265 = vmatprep.subr.bf16.mxu0 0
  %266 = vmatpush2.bf16.xpose.msra.mxu0 0
  %267 = vmatprep.mubr.bf16.mxu0 0
  %268 = vmatmul.mubr.bf16.gmra.mxu0 %v230
  %v269 = vpop.f32.mrf.mxu0
  %v270 = vadd.f32 0.0, %v269
  %v271 = vpop.f32.mrf.mxu0
  %v272 = vpop.f32.mrf.mxu0
  %v273 = vpop.f32.mrf.mxu0
  %274 = vdwg.mxu0
  %v275 = vmul.f32 %v221, 0.35355338
  %v276 = vmul.f32 %v270, 0.35355338
  %v279 = vlaneseq
  %v280 = vshrl.u32 %v279, 7
  %v281 = vsub.s32 0, %v280
  %v282 = vrot.slane %v37, %v281
  %v283 = vlaneseq
  %v284 = vshrl.u32 %v283, 7
  %v285 = vsub.s32 0, %v284
  %v286 = vrot.slane %v38, %v285
  %v289 = vadd.f32 %v275, %v282
  %v290 = vadd.f32 %v276, %v286
  %vm291 = vcmask 64512
  %v292 = vsel %vm291, %v289, -inf
  %293 = vmax.xlane.f32.xlu0 %v292
  %v294 = vpop.xlane.xlu0 %293
  %v295 = vsel %vm291, %v290, -inf
  %296 = vmax.xlane.f32.xlu0 %v295
  %v297 = vpop.xlane.xlu0 %296
  %v298 = vsub.f32 %v289, %v294
  %v299 = vsub.f32 %v290, %v297
  %v300 = vmul.f32 %v298, 1.442695
  %v301 = vpow.pop %v300
  %v302 = vmul.f32 %v299, 1.442695
  %v303 = vpow.pop %v302
  %v304 = vsel %vm291, %v301, 0.0
  %305 = vadd.xlane.f32.xlu0 %v304
  %v306 = vpop.xlane.xlu0 %305
  %v307 = vsel %vm291, %v303, 0.0
  %308 = vadd.xlane.f32.xlu0 %v307
  %v309 = vpop.xlane.xlu0 %308
  %v310 = vrcp.pop %v306
  %v311 = vmul.f32 %v301, %v310
  %v312 = vrcp.pop %v309
  %v313 = vmul.f32 %v303, %v312
  %v314 = vpack.c.bf16 %v311, %v311
  %v315 = vpack.c.bf16 %v313, %v313
  %317 = vrot.lane.b32.xlu0 %v89, 64
  %v318 = vpop.permute.xlu0 %317
  %v320 = vmul.f32 %v165, %v318
  %v321 = vmul.f32 %v168, %v318
  %v322 = vpack.c.bf16 %v320, %v320
  %v323 = vpack.c.bf16 %v321, %v321
  %v324 = vmul.f32 %v165, %v94
  %v325 = vmul.f32 %v168, %v94
  %v326 = vpack.c.bf16 %v324, %v324
  %v327 = vpack.c.bf16 %v325, %v325
  %v329 = vsel %vm43, %v326, 0
  %331 = vmatprep.subr.bf16.mxu0 0
  %332 = vmatpush1.bf16.xpose.msra.mxu0 0
  %333 = vmatprep.subr.bf16.mxu0 0
  %334 = vmatpush1.bf16.xpose.msra.mxu0 0
  %335 = vmatprep.subr.bf16.mxu0 0
  %336 = vmatpush1.bf16.xpose.msra.mxu0 0
  %337 = vmatprep.subr.bf16.mxu0 0
  %338 = vmatpush1.bf16.xpose.msra.mxu0 0
  %339 = vmatprep.subr.bf16.mxu0 0
  %340 = vmatpush1.bf16.xpose.msra.mxu0 0
  %341 = vmatprep.subr.bf16.mxu0 0
  %342 = vmatpush1.bf16.xpose.msra.mxu0 0
  %343 = vmatprep.subr.bf16.mxu0 0
  %344 = vmatpush1.bf16.xpose.msra.mxu0 0
  %345 = vmatprep.subr.bf16.mxu0 0
  %346 = vmatpush1.bf16.xpose.msra.mxu0 %v184
  %347 = vmatprep.subr.bf16.mxu0 0
  %348 = vmatpush2.bf16.xpose.msra.mxu0 0
  %349 = vmatprep.subr.bf16.mxu0 0
  %350 = vmatpush2.bf16.xpose.msra.mxu0 0
  %351 = vmatprep.subr.bf16.mxu0 0
  %352 = vmatpush2.bf16.xpose.msra.mxu0 0
  %353 = vmatprep.subr.bf16.mxu0 0
  %354 = vmatpush2.bf16.xpose.msra.mxu0 0
  %355 = vmatprep.subr.bf16.mxu0 0
  %356 = vmatpush2.bf16.xpose.msra.mxu0 0
  %357 = vmatprep.subr.bf16.mxu0 0
  %358 = vmatpush2.bf16.xpose.msra.mxu0 0
  %359 = vmatprep.subr.bf16.mxu0 0
  %360 = vmatpush2.bf16.xpose.msra.mxu0 0
  %361 = vmatprep.subr.bf16.mxu0 0
  %362 = vmatpush2.bf16.xpose.msra.mxu0 0
  %363 = vmatprep.mubr.bf16.mxu0 0
  %364 = vmatmul.mubr.bf16.gmra.mxu0 %v329
  %v365 = vpop.f32.mrf.mxu0
  %v366 = vadd.f32 0.0, %v365
  %v367 = vpop.f32.mrf.mxu0
  %v368 = vpop.f32.mrf.mxu0
  %v369 = vpop.f32.mrf.mxu0
  %370 = vdwg.mxu0
  %v372 = vsel %vm43, %v327, 0
  %374 = vmatprep.subr.bf16.mxu0 0
  %375 = vmatpush1.bf16.xpose.msra.mxu0 0
  %376 = vmatprep.subr.bf16.mxu0 0
  %377 = vmatpush1.bf16.xpose.msra.mxu0 0
  %378 = vmatprep.subr.bf16.mxu0 0
  %379 = vmatpush1.bf16.xpose.msra.mxu0 0
  %380 = vmatprep.subr.bf16.mxu0 0
  %381 = vmatpush1.bf16.xpose.msra.mxu0 0
  %382 = vmatprep.subr.bf16.mxu0 0
  %383 = vmatpush1.bf16.xpose.msra.mxu0 0
  %384 = vmatprep.subr.bf16.mxu0 0
  %385 = vmatpush1.bf16.xpose.msra.mxu0 0
  %386 = vmatprep.subr.bf16.mxu0 0
  %387 = vmatpush1.bf16.xpose.msra.mxu0 0
  %388 = vmatprep.subr.bf16.mxu0 0
  %389 = vmatpush1.bf16.xpose.msra.mxu0 %v233
  %390 = vmatprep.subr.bf16.mxu0 0
  %391 = vmatpush2.bf16.xpose.msra.mxu0 0
  %392 = vmatprep.subr.bf16.mxu0 0
  %393 = vmatpush2.bf16.xpose.msra.mxu0 0
  %394 = vmatprep.subr.bf16.mxu0 0
  %395 = vmatpush2.bf16.xpose.msra.mxu0 0
  %396 = vmatprep.subr.bf16.mxu0 0
  %397 = vmatpush2.bf16.xpose.msra.mxu0 0
  %398 = vmatprep.subr.bf16.mxu0 0
  %399 = vmatpush2.bf16.xpose.msra.mxu0 0
  %400 = vmatprep.subr.bf16.mxu0 0
  %401 = vmatpush2.bf16.xpose.msra.mxu0 0
  %402 = vmatprep.subr.bf16.mxu0 0
  %403 = vmatpush2.bf16.xpose.msra.mxu0 0
  %404 = vmatprep.subr.bf16.mxu0 0
  %405 = vmatpush2.bf16.xpose.msra.mxu0 0
  %406 = vmatprep.mubr.bf16.mxu0 0
  %407 = vmatmul.mubr.bf16.gmra.mxu0 %v372
  %v408 = vpop.f32.mrf.mxu0
  %v409 = vadd.f32 0.0, %v408
  %v410 = vpop.f32.mrf.mxu0
  %v411 = vpop.f32.mrf.mxu0
  %v412 = vpop.f32.mrf.mxu0
  %413 = vdwg.mxu0
  %v414 = vmul.f32 %v366, 0.35355338
  %v415 = vmul.f32 %v409, 0.35355338
  %v416 = vadd.f32 %v414, %v282
  %v417 = vadd.f32 %v415, %v286
  %v418 = vsel %vm291, %v416, -inf
  %419 = vmax.xlane.f32.xlu0 %v418
  %v420 = vpop.xlane.xlu0 %419
  %v421 = vsel %vm291, %v417, -inf
  %422 = vmax.xlane.f32.xlu0 %v421
  %v423 = vpop.xlane.xlu0 %422
  %v424 = vsub.f32 %v416, %v420
  %v425 = vsub.f32 %v417, %v423
  %v426 = vmul.f32 %v424, 1.442695
  %v427 = vpow.pop %v426
  %v428 = vmul.f32 %v425, 1.442695
  %v429 = vpow.pop %v428
  %v430 = vsel %vm291, %v427, 0.0
  %431 = vadd.xlane.f32.xlu0 %v430
  %v432 = vpop.xlane.xlu0 %431
  %v433 = vsel %vm291, %v429, 0.0
  %434 = vadd.xlane.f32.xlu0 %v433
  %v435 = vpop.xlane.xlu0 %434
  %v436 = vrcp.pop %v432
  %v437 = vmul.f32 %v427, %v436
  %v438 = vrcp.pop %v435
  %v439 = vmul.f32 %v429, %v438
  %v440 = vpack.c.bf16 %v437, %v437
  %v441 = vpack.c.bf16 %v439, %v439
  %443 = vrot.lane.b32.xlu0 %v94, 64
  %v444 = vpop.permute.xlu0 %443
  %v446 = vmul.f32 %v165, %v444
  %v447 = vmul.f32 %v168, %v444
  %v448 = vpack.c.bf16 %v446, %v446
  %v449 = vpack.c.bf16 %v447, %v447
  %451 = vrot.lane.b32.xlu0 %v448, 64
  %v452 = vpop.permute.xlu0 %451
  %v454 = vsel %vm291, %v440, 0
  %vm456 = vcmask 1043456
  %v458 = vsel %vm456, %v452, 0
  %460 = vmatprep.subr.bf16.mxu0 0
  %461 = vmatpush1.bf16.msra.mxu0 0
  %462 = vmatprep.subr.bf16.mxu0 0
  %463 = vmatpush1.bf16.msra.mxu0 0
  %464 = vmatprep.subr.bf16.mxu0 0
  %465 = vmatpush1.bf16.msra.mxu0 0
  %466 = vmatprep.subr.bf16.mxu0 0
  %467 = vmatpush1.bf16.msra.mxu0 0
  %468 = vmatprep.subr.bf16.mxu0 0
  %469 = vmatpush1.bf16.msra.mxu0 0
  %470 = vmatprep.subr.bf16.mxu0 0
  %471 = vmatpush1.bf16.msra.mxu0 0
  %472 = vmatprep.subr.bf16.mxu0 0
  %473 = vmatpush1.bf16.msra.mxu0 0
  %474 = vmatprep.subr.bf16.mxu0 0
  %475 = vmatpush1.bf16.msra.mxu0 %v458
  %476 = vmatprep.subr.bf16.mxu0 0
  %477 = vmatpush2.bf16.msra.mxu0 0
  %478 = vmatprep.subr.bf16.mxu0 0
  %479 = vmatpush2.bf16.msra.mxu0 0
  %480 = vmatprep.subr.bf16.mxu0 0
  %481 = vmatpush2.bf16.msra.mxu0 0
  %482 = vmatprep.subr.bf16.mxu0 0
  %483 = vmatpush2.bf16.msra.mxu0 0
  %484 = vmatprep.subr.bf16.mxu0 0
  %485 = vmatpush2.bf16.msra.mxu0 0
  %486 = vmatprep.subr.bf16.mxu0 0
  %487 = vmatpush2.bf16.msra.mxu0 0
  %488 = vmatprep.subr.bf16.mxu0 0
  %489 = vmatpush2.bf16.msra.mxu0 0
  %490 = vmatprep.subr.bf16.mxu0 0
  %491 = vmatpush2.bf16.msra.mxu0 0
  %492 = vmatprep.mubr.bf16.mxu0 0
  %493 = vmatmul.mubr.bf16.gmra.mxu0 %v454
  %v494 = vpop.f32.mrf.mxu0
  %v495 = vadd.f32 0.0, %v494
  %v496 = vpop.f32.mrf.mxu0
  %v497 = vpop.f32.mrf.mxu0
  %v498 = vpop.f32.mrf.mxu0
  %499 = vdwg.mxu0
  %501 = vrot.lane.b32.xlu0 %v449, 64
  %v502 = vpop.permute.xlu0 %501
  %v504 = vsel %vm291, %v441, 0
  %v507 = vsel %vm456, %v502, 0
  %509 = vmatprep.subr.bf16.mxu0 0
  %510 = vmatpush1.bf16.msra.mxu0 0
  %511 = vmatprep.subr.bf16.mxu0 0
  %512 = vmatpush1.bf16.msra.mxu0 0
  %513 = vmatprep.subr.bf16.mxu0 0
  %514 = vmatpush1.bf16.msra.mxu0 0
  %515 = vmatprep.subr.bf16.mxu0 0
  %516 = vmatpush1.bf16.msra.mxu0 0
  %517 = vmatprep.subr.bf16.mxu0 0
  %518 = vmatpush1.bf16.msra.mxu0 0
  %519 = vmatprep.subr.bf16.mxu0 0
  %520 = vmatpush1.bf16.msra.mxu0 0
  %521 = vmatprep.subr.bf16.mxu0 0
  %522 = vmatpush1.bf16.msra.mxu0 0
  %523 = vmatprep.subr.bf16.mxu0 0
  %524 = vmatpush1.bf16.msra.mxu0 %v507
  %525 = vmatprep.subr.bf16.mxu0 0
  %526 = vmatpush2.bf16.msra.mxu0 0
  %527 = vmatprep.subr.bf16.mxu0 0
  %528 = vmatpush2.bf16.msra.mxu0 0
  %529 = vmatprep.subr.bf16.mxu0 0
  %530 = vmatpush2.bf16.msra.mxu0 0
  %531 = vmatprep.subr.bf16.mxu0 0
  %532 = vmatpush2.bf16.msra.mxu0 0
  %533 = vmatprep.subr.bf16.mxu0 0
  %534 = vmatpush2.bf16.msra.mxu0 0
  %535 = vmatprep.subr.bf16.mxu0 0
  %536 = vmatpush2.bf16.msra.mxu0 0
  %537 = vmatprep.subr.bf16.mxu0 0
  %538 = vmatpush2.bf16.msra.mxu0 0
  %539 = vmatprep.subr.bf16.mxu0 0
  %540 = vmatpush2.bf16.msra.mxu0 0
  %541 = vmatprep.mubr.bf16.mxu0 0
  %542 = vmatmul.mubr.bf16.gmra.mxu0 %v504
  %v543 = vpop.f32.mrf.mxu0
  %v544 = vadd.f32 0.0, %v543
  %v545 = vpop.f32.mrf.mxu0
  %v546 = vpop.f32.mrf.mxu0
  %v547 = vpop.f32.mrf.mxu0
  %548 = vdwg.mxu0
  %550 = vrot.lane.b32.xlu0 %v322, 64
  %v551 = vpop.permute.xlu0 %550
  %v553 = vsel %vm291, %v314, 0
  %v556 = vsel %vm456, %v551, 0
  %558 = vmatprep.subr.bf16.mxu0 0
  %559 = vmatpush1.bf16.msra.mxu0 0
  %560 = vmatprep.subr.bf16.mxu0 0
  %561 = vmatpush1.bf16.msra.mxu0 0
  %562 = vmatprep.subr.bf16.mxu0 0
  %563 = vmatpush1.bf16.msra.mxu0 0
  %564 = vmatprep.subr.bf16.mxu0 0
  %565 = vmatpush1.bf16.msra.mxu0 0
  %566 = vmatprep.subr.bf16.mxu0 0
  %567 = vmatpush1.bf16.msra.mxu0 0
  %568 = vmatprep.subr.bf16.mxu0 0
  %569 = vmatpush1.bf16.msra.mxu0 0
  %570 = vmatprep.subr.bf16.mxu0 0
  %571 = vmatpush1.bf16.msra.mxu0 0
  %572 = vmatprep.subr.bf16.mxu0 0
  %573 = vmatpush1.bf16.msra.mxu0 %v556
  %574 = vmatprep.subr.bf16.mxu0 0
  %575 = vmatpush2.bf16.msra.mxu0 0
  %576 = vmatprep.subr.bf16.mxu0 0
  %577 = vmatpush2.bf16.msra.mxu0 0
  %578 = vmatprep.subr.bf16.mxu0 0
  %579 = vmatpush2.bf16.msra.mxu0 0
  %580 = vmatprep.subr.bf16.mxu0 0
  %581 = vmatpush2.bf16.msra.mxu0 0
  %582 = vmatprep.subr.bf16.mxu0 0
  %583 = vmatpush2.bf16.msra.mxu0 0
  %584 = vmatprep.subr.bf16.mxu0 0
  %585 = vmatpush2.bf16.msra.mxu0 0
  %586 = vmatprep.subr.bf16.mxu0 0
  %587 = vmatpush2.bf16.msra.mxu0 0
  %588 = vmatprep.subr.bf16.mxu0 0
  %589 = vmatpush2.bf16.msra.mxu0 0
  %590 = vmatprep.mubr.bf16.mxu0 0
  %591 = vmatmul.mubr.bf16.gmra.mxu0 %v553
  %v592 = vpop.f32.mrf.mxu0
  %v593 = vadd.f32 %v495, %v592
  %v594 = vpop.f32.mrf.mxu0
  %v595 = vpop.f32.mrf.mxu0
  %v596 = vpop.f32.mrf.mxu0
  %597 = vdwg.mxu0
  %599 = vrot.lane.b32.xlu0 %v323, 64
  %v600 = vpop.permute.xlu0 %599
  %v602 = vsel %vm291, %v315, 0
  %v605 = vsel %vm456, %v600, 0
  %607 = vmatprep.subr.bf16.mxu0 0
  %608 = vmatpush1.bf16.msra.mxu0 0
  %609 = vmatprep.subr.bf16.mxu0 0
  %610 = vmatpush1.bf16.msra.mxu0 0
  %611 = vmatprep.subr.bf16.mxu0 0
  %612 = vmatpush1.bf16.msra.mxu0 0
  %613 = vmatprep.subr.bf16.mxu0 0
  %614 = vmatpush1.bf16.msra.mxu0 0
  %615 = vmatprep.subr.bf16.mxu0 0
  %616 = vmatpush1.bf16.msra.mxu0 0
  %617 = vmatprep.subr.bf16.mxu0 0
  %618 = vmatpush1.bf16.msra.mxu0 0
  %619 = vmatprep.subr.bf16.mxu0 0
  %620 = vmatpush1.bf16.msra.mxu0 0
  %621 = vmatprep.subr.bf16.mxu0 0
  %622 = vmatpush1.bf16.msra.mxu0 %v605
  %623 = vmatprep.subr.bf16.mxu0 0
  %624 = vmatpush2.bf16.msra.mxu0 0
  %625 = vmatprep.subr.bf16.mxu0 0
  %626 = vmatpush2.bf16.msra.mxu0 0
  %627 = vmatprep.subr.bf16.mxu0 0
  %628 = vmatpush2.bf16.msra.mxu0 0
  %629 = vmatprep.subr.bf16.mxu0 0
  %630 = vmatpush2.bf16.msra.mxu0 0
  %631 = vmatprep.subr.bf16.mxu0 0
  %632 = vmatpush2.bf16.msra.mxu0 0
  %633 = vmatprep.subr.bf16.mxu0 0
  %634 = vmatpush2.bf16.msra.mxu0 0
  %635 = vmatprep.subr.bf16.mxu0 0
  %636 = vmatpush2.bf16.msra.mxu0 0
  %637 = vmatprep.subr.bf16.mxu0 0
  %638 = vmatpush2.bf16.msra.mxu0 0
  %639 = vmatprep.mubr.bf16.mxu0 0
  %640 = vmatmul.mubr.bf16.gmra.mxu0 %v602
  %v641 = vpop.f32.mrf.mxu0
  %v642 = vadd.f32 %v544, %v641
  %v643 = vpop.f32.mrf.mxu0
  %v644 = vpop.f32.mrf.mxu0
  %v645 = vpop.f32.mrf.mxu0
  %646 = vdwg.mxu0
  %v647 = vmul.f32 %v165, %v99
  %v648 = vmul.f32 %v168, %v99
  %v649 = vpack.c.bf16 %v647, %v647
  %v650 = vpack.c.bf16 %v648, %v648
  %v652 = vsel %vm43, %v649, 0
  %654 = vmatprep.subr.bf16.mxu0 0
  %655 = vmatpush1.bf16.xpose.msra.mxu0 0
  %656 = vmatprep.subr.bf16.mxu0 0
  %657 = vmatpush1.bf16.xpose.msra.mxu0 0
  %658 = vmatprep.subr.bf16.mxu0 0
  %659 = vmatpush1.bf16.xpose.msra.mxu0 0
  %660 = vmatprep.subr.bf16.mxu0 0
  %661 = vmatpush1.bf16.xpose.msra.mxu0 0
  %662 = vmatprep.subr.bf16.mxu0 0
  %663 = vmatpush1.bf16.xpose.msra.mxu0 0
  %664 = vmatprep.subr.bf16.mxu0 0
  %665 = vmatpush1.bf16.xpose.msra.mxu0 0
  %666 = vmatprep.subr.bf16.mxu0 0
  %667 = vmatpush1.bf16.xpose.msra.mxu0 0
  %668 = vmatprep.subr.bf16.mxu0 0
  %669 = vmatpush1.bf16.xpose.msra.mxu0 %v184
  %670 = vmatprep.subr.bf16.mxu0 0
  %671 = vmatpush2.bf16.xpose.msra.mxu0 0
  %672 = vmatprep.subr.bf16.mxu0 0
  %673 = vmatpush2.bf16.xpose.msra.mxu0 0
  %674 = vmatprep.subr.bf16.mxu0 0
  %675 = vmatpush2.bf16.xpose.msra.mxu0 0
  %676 = vmatprep.subr.bf16.mxu0 0
  %677 = vmatpush2.bf16.xpose.msra.mxu0 0
  %678 = vmatprep.subr.bf16.mxu0 0
  %679 = vmatpush2.bf16.xpose.msra.mxu0 0
  %680 = vmatprep.subr.bf16.mxu0 0
  %681 = vmatpush2.bf16.xpose.msra.mxu0 0
  %682 = vmatprep.subr.bf16.mxu0 0
  %683 = vmatpush2.bf16.xpose.msra.mxu0 0
  %684 = vmatprep.subr.bf16.mxu0 0
  %685 = vmatpush2.bf16.xpose.msra.mxu0 0
  %686 = vmatprep.mubr.bf16.mxu0 0
  %687 = vmatmul.mubr.bf16.gmra.mxu0 %v652
  %v688 = vpop.f32.mrf.mxu0
  %v689 = vadd.f32 0.0, %v688
  %v690 = vpop.f32.mrf.mxu0
  %v691 = vpop.f32.mrf.mxu0
  %v692 = vpop.f32.mrf.mxu0
  %693 = vdwg.mxu0
  %v695 = vsel %vm43, %v650, 0
  %697 = vmatprep.subr.bf16.mxu0 0
  %698 = vmatpush1.bf16.xpose.msra.mxu0 0
  %699 = vmatprep.subr.bf16.mxu0 0
  %700 = vmatpush1.bf16.xpose.msra.mxu0 0
  %701 = vmatprep.subr.bf16.mxu0 0
  %702 = vmatpush1.bf16.xpose.msra.mxu0 0
  %703 = vmatprep.subr.bf16.mxu0 0
  %704 = vmatpush1.bf16.xpose.msra.mxu0 0
  %705 = vmatprep.subr.bf16.mxu0 0
  %706 = vmatpush1.bf16.xpose.msra.mxu0 0
  %707 = vmatprep.subr.bf16.mxu0 0
  %708 = vmatpush1.bf16.xpose.msra.mxu0 0
  %709 = vmatprep.subr.bf16.mxu0 0
  %710 = vmatpush1.bf16.xpose.msra.mxu0 0
  %711 = vmatprep.subr.bf16.mxu0 0
  %712 = vmatpush1.bf16.xpose.msra.mxu0 %v233
  %713 = vmatprep.subr.bf16.mxu0 0
  %714 = vmatpush2.bf16.xpose.msra.mxu0 0
  %715 = vmatprep.subr.bf16.mxu0 0
  %716 = vmatpush2.bf16.xpose.msra.mxu0 0
  %717 = vmatprep.subr.bf16.mxu0 0
  %718 = vmatpush2.bf16.xpose.msra.mxu0 0
  %719 = vmatprep.subr.bf16.mxu0 0
  %720 = vmatpush2.bf16.xpose.msra.mxu0 0
  %721 = vmatprep.subr.bf16.mxu0 0
  %722 = vmatpush2.bf16.xpose.msra.mxu0 0
  %723 = vmatprep.subr.bf16.mxu0 0
  %724 = vmatpush2.bf16.xpose.msra.mxu0 0
  %725 = vmatprep.subr.bf16.mxu0 0
  %726 = vmatpush2.bf16.xpose.msra.mxu0 0
  %727 = vmatprep.subr.bf16.mxu0 0
  %728 = vmatpush2.bf16.xpose.msra.mxu0 0
  %729 = vmatprep.mubr.bf16.mxu0 0
  %730 = vmatmul.mubr.bf16.gmra.mxu0 %v695
  %v731 = vpop.f32.mrf.mxu0
  %v732 = vadd.f32 0.0, %v731
  %v733 = vpop.f32.mrf.mxu0
  %v734 = vpop.f32.mrf.mxu0
  %v735 = vpop.f32.mrf.mxu0
  %736 = vdwg.mxu0
  %v737 = vmul.f32 %v689, 0.35355338
  %v738 = vmul.f32 %v732, 0.35355338
  %v739 = vadd.f32 %v737, %v282
  %v740 = vadd.f32 %v738, %v286
  %v741 = vsel %vm291, %v739, -inf
  %742 = vmax.xlane.f32.xlu0 %v741
  %v743 = vpop.xlane.xlu0 %742
  %v744 = vsel %vm291, %v740, -inf
  %745 = vmax.xlane.f32.xlu0 %v744
  %v746 = vpop.xlane.xlu0 %745
  %v747 = vsub.f32 %v739, %v743
  %v748 = vsub.f32 %v740, %v746
  %v749 = vmul.f32 %v747, 1.442695
  %v750 = vpow.pop %v749
  %v751 = vmul.f32 %v748, 1.442695
  %v752 = vpow.pop %v751
  %v753 = vsel %vm291, %v750, 0.0
  %754 = vadd.xlane.f32.xlu0 %v753
  %v755 = vpop.xlane.xlu0 %754
  %v756 = vsel %vm291, %v752, 0.0
  %757 = vadd.xlane.f32.xlu0 %v756
  %v758 = vpop.xlane.xlu0 %757
  %v759 = vrcp.pop %v755
  %v760 = vmul.f32 %v750, %v759
  %v761 = vrcp.pop %v758
  %v762 = vmul.f32 %v752, %v761
  %v763 = vpack.c.bf16 %v760, %v760
  %v764 = vpack.c.bf16 %v762, %v762
  %766 = vrot.lane.b32.xlu0 %v99, 64
  %v767 = vpop.permute.xlu0 %766
  %v769 = vmul.f32 %v165, %v767
  %v770 = vmul.f32 %v168, %v767
  %v771 = vpack.c.bf16 %v769, %v769
  %v772 = vpack.c.bf16 %v770, %v770
  %774 = vrot.lane.b32.xlu0 %v771, 64
  %v775 = vpop.permute.xlu0 %774
  %v777 = vsel %vm291, %v763, 0
  %v780 = vsel %vm456, %v775, 0
  %782 = vmatprep.subr.bf16.mxu0 0
  %783 = vmatpush1.bf16.msra.mxu0 0
  %784 = vmatprep.subr.bf16.mxu0 0
  %785 = vmatpush1.bf16.msra.mxu0 0
  %786 = vmatprep.subr.bf16.mxu0 0
  %787 = vmatpush1.bf16.msra.mxu0 0
  %788 = vmatprep.subr.bf16.mxu0 0
  %789 = vmatpush1.bf16.msra.mxu0 0
  %790 = vmatprep.subr.bf16.mxu0 0
  %791 = vmatpush1.bf16.msra.mxu0 0
  %792 = vmatprep.subr.bf16.mxu0 0
  %793 = vmatpush1.bf16.msra.mxu0 0
  %794 = vmatprep.subr.bf16.mxu0 0
  %795 = vmatpush1.bf16.msra.mxu0 0
  %796 = vmatprep.subr.bf16.mxu0 0
  %797 = vmatpush1.bf16.msra.mxu0 %v780
  %798 = vmatprep.subr.bf16.mxu0 0
  %799 = vmatpush2.bf16.msra.mxu0 0
  %800 = vmatprep.subr.bf16.mxu0 0
  %801 = vmatpush2.bf16.msra.mxu0 0
  %802 = vmatprep.subr.bf16.mxu0 0
  %803 = vmatpush2.bf16.msra.mxu0 0
  %804 = vmatprep.subr.bf16.mxu0 0
  %805 = vmatpush2.bf16.msra.mxu0 0
  %806 = vmatprep.subr.bf16.mxu0 0
  %807 = vmatpush2.bf16.msra.mxu0 0
  %808 = vmatprep.subr.bf16.mxu0 0
  %809 = vmatpush2.bf16.msra.mxu0 0
  %810 = vmatprep.subr.bf16.mxu0 0
  %811 = vmatpush2.bf16.msra.mxu0 0
  %812 = vmatprep.subr.bf16.mxu0 0
  %813 = vmatpush2.bf16.msra.mxu0 0
  %814 = vmatprep.mubr.bf16.mxu0 0
  %815 = vmatmul.mubr.bf16.gmra.mxu0 %v777
  %v816 = vpop.f32.mrf.mxu0
  %v817 = vadd.f32 0.0, %v816
  %v818 = vpop.f32.mrf.mxu0
  %v819 = vpop.f32.mrf.mxu0
  %v820 = vpop.f32.mrf.mxu0
  %821 = vdwg.mxu0
  %823 = vrot.lane.b32.xlu0 %v772, 64
  %v824 = vpop.permute.xlu0 %823
  %v826 = vsel %vm291, %v764, 0
  %v829 = vsel %vm456, %v824, 0
  %831 = vmatprep.subr.bf16.mxu0 0
  %832 = vmatpush1.bf16.msra.mxu0 0
  %833 = vmatprep.subr.bf16.mxu0 0
  %834 = vmatpush1.bf16.msra.mxu0 0
  %835 = vmatprep.subr.bf16.mxu0 0
  %836 = vmatpush1.bf16.msra.mxu0 0
  %837 = vmatprep.subr.bf16.mxu0 0
  %838 = vmatpush1.bf16.msra.mxu0 0
  %839 = vmatprep.subr.bf16.mxu0 0
  %840 = vmatpush1.bf16.msra.mxu0 0
  %841 = vmatprep.subr.bf16.mxu0 0
  %842 = vmatpush1.bf16.msra.mxu0 0
  %843 = vmatprep.subr.bf16.mxu0 0
  %844 = vmatpush1.bf16.msra.mxu0 0
  %845 = vmatprep.subr.bf16.mxu0 0
  %846 = vmatpush1.bf16.msra.mxu0 %v829
  %847 = vmatprep.subr.bf16.mxu0 0
  %848 = vmatpush2.bf16.msra.mxu0 0
  %849 = vmatprep.subr.bf16.mxu0 0
  %850 = vmatpush2.bf16.msra.mxu0 0
  %851 = vmatprep.subr.bf16.mxu0 0
  %852 = vmatpush2.bf16.msra.mxu0 0
  %853 = vmatprep.subr.bf16.mxu0 0
  %854 = vmatpush2.bf16.msra.mxu0 0
  %855 = vmatprep.subr.bf16.mxu0 0
  %856 = vmatpush2.bf16.msra.mxu0 0
  %857 = vmatprep.subr.bf16.mxu0 0
  %858 = vmatpush2.bf16.msra.mxu0 0
  %859 = vmatprep.subr.bf16.mxu0 0
  %860 = vmatpush2.bf16.msra.mxu0 0
  %861 = vmatprep.subr.bf16.mxu0 0
  %862 = vmatpush2.bf16.msra.mxu0 0
  %863 = vmatprep.mubr.bf16.mxu0 0
  %864 = vmatmul.mubr.bf16.gmra.mxu0 %v826
  %v865 = vpop.f32.mrf.mxu0
  %v866 = vadd.f32 0.0, %v865
  %v867 = vpop.f32.mrf.mxu0
  %v868 = vpop.f32.mrf.mxu0
  %v869 = vpop.f32.mrf.mxu0
  %870 = vdwg.mxu0
  %v871 = vadd.f32 %v593, %v817
  %v872 = vadd.f32 %v642, %v866
  %v873 = vmul.f32 %v165, %v104
  %v874 = vmul.f32 %v168, %v104
  %v875 = vpack.c.bf16 %v873, %v873
  %v876 = vpack.c.bf16 %v874, %v874
  %v878 = vsel %vm43, %v875, 0
  %880 = vmatprep.subr.bf16.mxu0 0
  %881 = vmatpush1.bf16.xpose.msra.mxu0 0
  %882 = vmatprep.subr.bf16.mxu0 0
  %883 = vmatpush1.bf16.xpose.msra.mxu0 0
  %884 = vmatprep.subr.bf16.mxu0 0
  %885 = vmatpush1.bf16.xpose.msra.mxu0 0
  %886 = vmatprep.subr.bf16.mxu0 0
  %887 = vmatpush1.bf16.xpose.msra.mxu0 0
  %888 = vmatprep.subr.bf16.mxu0 0
  %889 = vmatpush1.bf16.xpose.msra.mxu0 0
  %890 = vmatprep.subr.bf16.mxu0 0
  %891 = vmatpush1.bf16.xpose.msra.mxu0 0
  %892 = vmatprep.subr.bf16.mxu0 0
  %893 = vmatpush1.bf16.xpose.msra.mxu0 0
  %894 = vmatprep.subr.bf16.mxu0 0
  %895 = vmatpush1.bf16.xpose.msra.mxu0 %v184
  %896 = vmatprep.subr.bf16.mxu0 0
  %897 = vmatpush2.bf16.xpose.msra.mxu0 0
  %898 = vmatprep.subr.bf16.mxu0 0
  %899 = vmatpush2.bf16.xpose.msra.mxu0 0
  %900 = vmatprep.subr.bf16.mxu0 0
  %901 = vmatpush2.bf16.xpose.msra.mxu0 0
  %902 = vmatprep.subr.bf16.mxu0 0
  %903 = vmatpush2.bf16.xpose.msra.mxu0 0
  %904 = vmatprep.subr.bf16.mxu0 0
  %905 = vmatpush2.bf16.xpose.msra.mxu0 0
  %906 = vmatprep.subr.bf16.mxu0 0
  %907 = vmatpush2.bf16.xpose.msra.mxu0 0
  %908 = vmatprep.subr.bf16.mxu0 0
  %909 = vmatpush2.bf16.xpose.msra.mxu0 0
  %910 = vmatprep.subr.bf16.mxu0 0
  %911 = vmatpush2.bf16.xpose.msra.mxu0 0
  %912 = vmatprep.mubr.bf16.mxu0 0
  %913 = vmatmul.mubr.bf16.gmra.mxu0 %v878
  %v914 = vpop.f32.mrf.mxu0
  %v915 = vadd.f32 0.0, %v914
  %v916 = vpop.f32.mrf.mxu0
  %v917 = vpop.f32.mrf.mxu0
  %v918 = vpop.f32.mrf.mxu0
  %919 = vdwg.mxu0
  %v921 = vsel %vm43, %v876, 0
  %923 = vmatprep.subr.bf16.mxu0 0
  %924 = vmatpush1.bf16.xpose.msra.mxu0 0
  %925 = vmatprep.subr.bf16.mxu0 0
  %926 = vmatpush1.bf16.xpose.msra.mxu0 0
  %927 = vmatprep.subr.bf16.mxu0 0
  %928 = vmatpush1.bf16.xpose.msra.mxu0 0
  %929 = vmatprep.subr.bf16.mxu0 0
  %930 = vmatpush1.bf16.xpose.msra.mxu0 0
  %931 = vmatprep.subr.bf16.mxu0 0
  %932 = vmatpush1.bf16.xpose.msra.mxu0 0
  %933 = vmatprep.subr.bf16.mxu0 0
  %934 = vmatpush1.bf16.xpose.msra.mxu0 0
  %935 = vmatprep.subr.bf16.mxu0 0
  %936 = vmatpush1.bf16.xpose.msra.mxu0 0
  %937 = vmatprep.subr.bf16.mxu0 0
  %938 = vmatpush1.bf16.xpose.msra.mxu0 %v233
  %939 = vmatprep.subr.bf16.mxu0 0
  %940 = vmatpush2.bf16.xpose.msra.mxu0 0
  %941 = vmatprep.subr.bf16.mxu0 0
  %942 = vmatpush2.bf16.xpose.msra.mxu0 0
  %943 = vmatprep.subr.bf16.mxu0 0
  %944 = vmatpush2.bf16.xpose.msra.mxu0 0
  %945 = vmatprep.subr.bf16.mxu0 0
  %946 = vmatpush2.bf16.xpose.msra.mxu0 0
  %947 = vmatprep.subr.bf16.mxu0 0
  %948 = vmatpush2.bf16.xpose.msra.mxu0 0
  %949 = vmatprep.subr.bf16.mxu0 0
  %950 = vmatpush2.bf16.xpose.msra.mxu0 0
  %951 = vmatprep.subr.bf16.mxu0 0
  %952 = vmatpush2.bf16.xpose.msra.mxu0 0
  %953 = vmatprep.subr.bf16.mxu0 0
  %954 = vmatpush2.bf16.xpose.msra.mxu0 0
  %955 = vmatprep.mubr.bf16.mxu0 0
  %956 = vmatmul.mubr.bf16.gmra.mxu0 %v921
  %v957 = vpop.f32.mrf.mxu0
  %v958 = vadd.f32 0.0, %v957
  %v959 = vpop.f32.mrf.mxu0
  %v960 = vpop.f32.mrf.mxu0
  %v961 = vpop.f32.mrf.mxu0
  %962 = vdwg.mxu0
  %v963 = vmul.f32 %v915, 0.35355338
  %v964 = vmul.f32 %v958, 0.35355338
  %v965 = vadd.f32 %v963, %v282
  %v966 = vadd.f32 %v964, %v286
  %v967 = vsel %vm291, %v965, -inf
  %968 = vmax.xlane.f32.xlu0 %v967
  %v969 = vpop.xlane.xlu0 %968
  %v970 = vsel %vm291, %v966, -inf
  %971 = vmax.xlane.f32.xlu0 %v970
  %v972 = vpop.xlane.xlu0 %971
  %v973 = vsub.f32 %v965, %v969
  %v974 = vsub.f32 %v966, %v972
  %v975 = vmul.f32 %v973, 1.442695
  %v976 = vpow.pop %v975
  %v977 = vmul.f32 %v974, 1.442695
  %v978 = vpow.pop %v977
  %v979 = vsel %vm291, %v976, 0.0
  %980 = vadd.xlane.f32.xlu0 %v979
  %v981 = vpop.xlane.xlu0 %980
  %v982 = vsel %vm291, %v978, 0.0
  %983 = vadd.xlane.f32.xlu0 %v982
  %v984 = vpop.xlane.xlu0 %983
  %v985 = vrcp.pop %v981
  %v986 = vmul.f32 %v976, %v985
  %v987 = vrcp.pop %v984
  %v988 = vmul.f32 %v978, %v987
  %v989 = vpack.c.bf16 %v986, %v986
  %v990 = vpack.c.bf16 %v988, %v988
  %992 = vrot.lane.b32.xlu0 %v104, 64
  %v993 = vpop.permute.xlu0 %992
  %v995 = vmul.f32 %v165, %v993
  %v996 = vmul.f32 %v168, %v993
  %v997 = vpack.c.bf16 %v995, %v995
  %v998 = vpack.c.bf16 %v996, %v996
  %1000 = vrot.lane.b32.xlu0 %v997, 64
  %v1001 = vpop.permute.xlu0 %1000
  %v1003 = vsel %vm291, %v989, 0
  %v1006 = vsel %vm456, %v1001, 0
  %1008 = vmatprep.subr.bf16.mxu0 0
  %1009 = vmatpush1.bf16.msra.mxu0 0
  %1010 = vmatprep.subr.bf16.mxu0 0
  %1011 = vmatpush1.bf16.msra.mxu0 0
  %1012 = vmatprep.subr.bf16.mxu0 0
  %1013 = vmatpush1.bf16.msra.mxu0 0
  %1014 = vmatprep.subr.bf16.mxu0 0
  %1015 = vmatpush1.bf16.msra.mxu0 0
  %1016 = vmatprep.subr.bf16.mxu0 0
  %1017 = vmatpush1.bf16.msra.mxu0 0
  %1018 = vmatprep.subr.bf16.mxu0 0
  %1019 = vmatpush1.bf16.msra.mxu0 0
  %1020 = vmatprep.subr.bf16.mxu0 0
  %1021 = vmatpush1.bf16.msra.mxu0 0
  %1022 = vmatprep.subr.bf16.mxu0 0
  %1023 = vmatpush1.bf16.msra.mxu0 %v1006
  %1024 = vmatprep.subr.bf16.mxu0 0
  %1025 = vmatpush2.bf16.msra.mxu0 0
  %1026 = vmatprep.subr.bf16.mxu0 0
  %1027 = vmatpush2.bf16.msra.mxu0 0
  %1028 = vmatprep.subr.bf16.mxu0 0
  %1029 = vmatpush2.bf16.msra.mxu0 0
  %1030 = vmatprep.subr.bf16.mxu0 0
  %1031 = vmatpush2.bf16.msra.mxu0 0
  %1032 = vmatprep.subr.bf16.mxu0 0
  %1033 = vmatpush2.bf16.msra.mxu0 0
  %1034 = vmatprep.subr.bf16.mxu0 0
  %1035 = vmatpush2.bf16.msra.mxu0 0
  %1036 = vmatprep.subr.bf16.mxu0 0
  %1037 = vmatpush2.bf16.msra.mxu0 0
  %1038 = vmatprep.subr.bf16.mxu0 0
  %1039 = vmatpush2.bf16.msra.mxu0 0
  %1040 = vmatprep.mubr.bf16.mxu0 0
  %1041 = vmatmul.mubr.bf16.gmra.mxu0 %v1003
  %v1042 = vpop.f32.mrf.mxu0
  %v1043 = vadd.f32 0.0, %v1042
  %v1044 = vpop.f32.mrf.mxu0
  %v1045 = vpop.f32.mrf.mxu0
  %v1046 = vpop.f32.mrf.mxu0
  %1047 = vdwg.mxu0
  %1049 = vrot.lane.b32.xlu0 %v998, 64
  %v1050 = vpop.permute.xlu0 %1049
  %v1052 = vsel %vm291, %v990, 0
  %v1055 = vsel %vm456, %v1050, 0
  %1057 = vmatprep.subr.bf16.mxu0 0
  %1058 = vmatpush1.bf16.msra.mxu0 0
  %1059 = vmatprep.subr.bf16.mxu0 0
  %1060 = vmatpush1.bf16.msra.mxu0 0
  %1061 = vmatprep.subr.bf16.mxu0 0
  %1062 = vmatpush1.bf16.msra.mxu0 0
  %1063 = vmatprep.subr.bf16.mxu0 0
  %1064 = vmatpush1.bf16.msra.mxu0 0
  %1065 = vmatprep.subr.bf16.mxu0 0
  %1066 = vmatpush1.bf16.msra.mxu0 0
  %1067 = vmatprep.subr.bf16.mxu0 0
  %1068 = vmatpush1.bf16.msra.mxu0 0
  %1069 = vmatprep.subr.bf16.mxu0 0
  %1070 = vmatpush1.bf16.msra.mxu0 0
  %1071 = vmatprep.subr.bf16.mxu0 0
  %1072 = vmatpush1.bf16.msra.mxu0 %v1055
  %1073 = vmatprep.subr.bf16.mxu0 0
  %1074 = vmatpush2.bf16.msra.mxu0 0
  %1075 = vmatprep.subr.bf16.mxu0 0
  %1076 = vmatpush2.bf16.msra.mxu0 0
  %1077 = vmatprep.subr.bf16.mxu0 0
  %1078 = vmatpush2.bf16.msra.mxu0 0
  %1079 = vmatprep.subr.bf16.mxu0 0
  %1080 = vmatpush2.bf16.msra.mxu0 0
  %1081 = vmatprep.subr.bf16.mxu0 0
  %1082 = vmatpush2.bf16.msra.mxu0 0
  %1083 = vmatprep.subr.bf16.mxu0 0
  %1084 = vmatpush2.bf16.msra.mxu0 0
  %1085 = vmatprep.subr.bf16.mxu0 0
  %1086 = vmatpush2.bf16.msra.mxu0 0
  %1087 = vmatprep.subr.bf16.mxu0 0
  %1088 = vmatpush2.bf16.msra.mxu0 0
  %1089 = vmatprep.mubr.bf16.mxu0 0
  %1090 = vmatmul.mubr.bf16.gmra.mxu0 %v1052
  %v1091 = vpop.f32.mrf.mxu0
  %v1092 = vadd.f32 0.0, %v1091
  %v1093 = vpop.f32.mrf.mxu0
  %v1094 = vpop.f32.mrf.mxu0
  %v1095 = vpop.f32.mrf.mxu0
  %1096 = vdwg.mxu0
  %v1097 = vadd.f32 %v871, %v1043
  %v1098 = vadd.f32 %v872, %v1092
  %v1099 = vpack.c.bf16 %v1098, %v1097
  %v1100 = vld [vmem:[%s4] sm:$0xf]
  %v1101 = vld [vmem:[%s4 + $0x4] sm:$0xf]
  %v1102 = vld [vmem:[%s4 + $0x8] sm:$0xf]
  %v1103 = vld [vmem:[%s4 + $0xc] sm:$0xf]
  %v1104 = vld [vmem:[%s8 + $0x4] sm:$0x1]
  %v1105 = vlaneseq
  %v1106 = vshrl.u32 %v1105, 7
  %v1107 = vsub.s32 0, %v1106
  %v1108 = vrot.slane %v1104, %v1107
  %v1113 = vunpack.c.l.b16 %v1100
  %v1114 = vunpack.c.l.b16 %v1101
  %v1115 = vunpack.c.l.b16 %v1102
  %v1116 = vunpack.c.l.b16 %v1103
  %v1117 = vpack.c.b16 %v1114, %v1113
  %v1118 = vpack.c.b16 %v1116, %v1115
  %v1122 = vsel %vm43, %v1099, 0
  %1124 = vmatprep.subr.bf16.mxu0 0
  %1125 = vmatpush1.bf16.msra.mxu0 0
  %1126 = vmatprep.subr.bf16.mxu0 0
  %1127 = vmatpush1.bf16.msra.mxu0 0
  %1128 = vmatprep.subr.bf16.mxu0 0
  %1129 = vmatpush1.bf16.msra.mxu0 0
  %1130 = vmatprep.subr.bf16.mxu0 0
  %1131 = vmatpush1.bf16.msra.mxu0 0
  %1132 = vmatprep.subr.bf16.mxu0 0
  %1133 = vmatpush1.bf16.msra.mxu0 0
  %1134 = vmatprep.subr.bf16.mxu0 0
  %1135 = vmatpush1.bf16.msra.mxu0 0
  %1136 = vmatprep.subr.bf16.mxu0 0
  %1137 = vmatpush1.bf16.msra.mxu0 %v1118
  %1138 = vmatprep.subr.bf16.mxu0 0
  %1139 = vmatpush1.bf16.msra.mxu0 %v1117
  %1140 = vmatprep.subr.bf16.mxu0 0
  %1141 = vmatpush2.bf16.msra.mxu0 0
  %1142 = vmatprep.subr.bf16.mxu0 0
  %1143 = vmatpush2.bf16.msra.mxu0 0
  %1144 = vmatprep.subr.bf16.mxu0 0
  %1145 = vmatpush2.bf16.msra.mxu0 0
  %1146 = vmatprep.subr.bf16.mxu0 0
  %1147 = vmatpush2.bf16.msra.mxu0 0
  %1148 = vmatprep.subr.bf16.mxu0 0
  %1149 = vmatpush2.bf16.msra.mxu0 0
  %1150 = vmatprep.subr.bf16.mxu0 0
  %1151 = vmatpush2.bf16.msra.mxu0 0
  %1152 = vmatprep.subr.bf16.mxu0 0
  %1153 = vmatpush2.bf16.msra.mxu0 0
  %1154 = vmatprep.subr.bf16.mxu0 0
  %1155 = vmatpush2.bf16.msra.mxu0 0
  %1156 = vmatprep.mubr.bf16.mxu0 0
  %1157 = vmatmul.mubr.bf16.gmra.mxu0 %v1122
  %v1158 = vpop.f32.mrf.mxu0
  %v1159 = vadd.f32 %v1108, %v1158
  %v1160 = vpop.f32.mrf.mxu0
  %v1161 = vpop.f32.mrf.mxu0
  %v1162 = vadd.f32 %v1108, %v1161
  %v1163 = vpop.f32.mrf.mxu0
  %1164 = vdwg.mxu0
  %v1165 = vadd.f32 %v81, %v1159
  %v1166 = vadd.f32 %v82, %v1162
  %v1167 = vld [vmem:[%s8 + $0xa] sm:$0x1]
  %v1168 = vld [vmem:[%s8 + $0xb] sm:$0x1]
  %v1169 = vsel %vm43, %v1165, 0.0
  %1170 = vadd.xlane.f32.xlu0 %v1169
  %v1171 = vpop.xlane.xlu0 %1170
  %v1172 = vsel %vm43, %v1166, 0.0
  %1173 = vadd.xlane.f32.xlu0 %v1172
  %v1174 = vpop.xlane.xlu0 %1173
  %v1175 = vmul.f32 %v1171, %v50
  %v1176 = vmul.f32 %v1174, %v50
  %v1177 = vsub.f32 %v1165, %v1175
  %v1178 = vsub.f32 %v1166, %v1176
  %v1179 = vmul.f32 %v1177, %v1177
  %v1180 = vmul.f32 %v1178, %v1178
  %v1181 = vsel %vm43, %v1179, 0.0
  %1182 = vadd.xlane.f32.xlu0 %v1181
  %v1183 = vpop.xlane.xlu0 %1182
  %v1184 = vsel %vm43, %v1180, 0.0
  %1185 = vadd.xlane.f32.xlu0 %v1184
  %v1186 = vpop.xlane.xlu0 %1185
  %v1187 = vmul.f32 %v1183, %v50
  %v1188 = vmul.f32 %v1186, %v50
  %v1189 = vadd.f32 %v1187, 1e-12
  %v1190 = vadd.f32 %v1188, 1e-12
  %v1191 = vrsqrt.pop %v1189
  %v1192 = vrsqrt.pop %v1190
  %v1193 = vmul.f32 %v1177, %v1191
  %v1194 = vmul.f32 %v1178, %v1192
  %v1195 = vlaneseq
  %v1196 = vshrl.u32 %v1195, 7
  %v1197 = vsub.s32 0, %v1196
  %v1198 = vrot.slane %v1167, %v1197
  %v1199 = vmul.f32 %v1193, %v1198
  %v1200 = vmul.f32 %v1194, %v1198
  %v1201 = vlaneseq
  %v1202 = vshrl.u32 %v1201, 7
  %v1203 = vsub.s32 0, %v1202
  %v1204 = vrot.slane %v1168, %v1203
  %v1205 = vadd.f32 %v1199, %v1204
  %v1206 = vadd.f32 %v1200, %v1204
  %v1207 = vpack.c.bf16 %v1206, %v1205
  %v1208 = vld [vmem:[%s5] sm:$0xf]
  %v1209 = vld [vmem:[%s5 + $0x4] sm:$0xf]
  %v1210 = vld [vmem:[%s5 + $0x8] sm:$0xf]
  %v1211 = vld [vmem:[%s5 + $0xc] sm:$0xf]
  %v1212 = vld [vmem:[%s8 + $0x6] sm:$0x1]
  %v1213 = vlaneseq
  %v1214 = vshrl.u32 %v1213, 7
  %v1215 = vsub.s32 0, %v1214
  %v1216 = vrot.slane %v1212, %v1215
  %v1221 = vunpack.c.l.b16 %v1208
  %v1222 = vunpack.c.l.b16 %v1209
  %v1223 = vunpack.c.l.b16 %v1210
  %v1224 = vunpack.c.l.b16 %v1211
  %v1225 = vpack.c.b16 %v1222, %v1221
  %v1226 = vpack.c.b16 %v1224, %v1223
  %v1230 = vsel %vm43, %v1207, 0
  %1232 = vmatprep.subr.bf16.mxu0 0
  %1233 = vmatpush1.bf16.msra.mxu0 0
  %1234 = vmatprep.subr.bf16.mxu0 0
  %1235 = vmatpush1.bf16.msra.mxu0 0
  %1236 = vmatprep.subr.bf16.mxu0 0
  %1237 = vmatpush1.bf16.msra.mxu0 0
  %1238 = vmatprep.subr.bf16.mxu0 0
  %1239 = vmatpush1.bf16.msra.mxu0 0
  %1240 = vmatprep.subr.bf16.mxu0 0
  %1241 = vmatpush1.bf16.msra.mxu0 0
  %1242 = vmatprep.subr.bf16.mxu0 0
  %1243 = vmatpush1.bf16.msra.mxu0 0
  %1244 = vmatprep.subr.bf16.mxu0 0
  %1245 = vmatpush1.bf16.msra.mxu0 %v1226
  %1246 = vmatprep.subr.bf16.mxu0 0
  %1247 = vmatpush1.bf16.msra.mxu0 %v1225
  %1248 = vmatprep.subr.bf16.mxu0 0
  %1249 = vmatpush2.bf16.msra.mxu0 0
  %1250 = vmatprep.subr.bf16.mxu0 0
  %1251 = vmatpush2.bf16.msra.mxu0 0
  %1252 = vmatprep.subr.bf16.mxu0 0
  %1253 = vmatpush2.bf16.msra.mxu0 0
  %1254 = vmatprep.subr.bf16.mxu0 0
  %1255 = vmatpush2.bf16.msra.mxu0 0
  %1256 = vmatprep.subr.bf16.mxu0 0
  %1257 = vmatpush2.bf16.msra.mxu0 0
  %1258 = vmatprep.subr.bf16.mxu0 0
  %1259 = vmatpush2.bf16.msra.mxu0 0
  %1260 = vmatprep.subr.bf16.mxu0 0
  %1261 = vmatpush2.bf16.msra.mxu0 0
  %1262 = vmatprep.subr.bf16.mxu0 0
  %1263 = vmatpush2.bf16.msra.mxu0 0
  %1264 = vmatprep.mubr.bf16.mxu0 0
  %1265 = vmatmul.mubr.bf16.gmra.mxu0 %v1230
  %v1266 = vpop.f32.mrf.mxu0
  %v1267 = vadd.f32 %v1216, %v1266
  %v1268 = vpop.f32.mrf.mxu0
  %v1269 = vpop.f32.mrf.mxu0
  %v1270 = vadd.f32 %v1216, %v1269
  %v1271 = vpop.f32.mrf.mxu0
  %1272 = vdwg.mxu0
  %v1273 = vmul.f32 %v1267, %v1267
  %v1274 = vmul.f32 %v1270, %v1270
  %v1275 = vmul.f32 %v1267, %v1273
  %v1276 = vmul.f32 %v1270, %v1274
  %v1277 = vmul.f32 %v1275, 0.044715
  %v1278 = vmul.f32 %v1276, 0.044715
  %v1279 = vadd.f32 %v1267, %v1277
  %v1280 = vadd.f32 %v1270, %v1278
  %v1281 = vmul.f32 %v1279, 0.7978846
  %v1282 = vmul.f32 %v1280, 0.7978846
  %v1283 = vtanh.pop %v1281
  %v1284 = vtanh.pop %v1282
  %v1285 = vadd.f32 %v1283, 1.0
  %v1286 = vadd.f32 %v1284, 1.0
  %v1287 = vmul.f32 %v1285, 0.5
  %v1288 = vmul.f32 %v1286, 0.5
  %v1289 = vmul.f32 %v1267, %v1287
  %v1290 = vmul.f32 %v1270, %v1288
  %v1291 = vpack.c.bf16 %v1290, %v1289
  %v1292 = vld [vmem:[%s6] sm:$0xf]
  %v1293 = vld [vmem:[%s6 + $0x4] sm:$0xf]
  %v1294 = vld [vmem:[%s6 + $0x8] sm:$0xf]
  %v1295 = vld [vmem:[%s6 + $0xc] sm:$0xf]
  %v1296 = vld [vmem:[%s6 + $0x10] sm:$0xf]
  %v1297 = vld [vmem:[%s6 + $0x14] sm:$0xf]
  %v1298 = vld [vmem:[%s6 + $0x18] sm:$0xf]
  %v1299 = vld [vmem:[%s6 + $0x1c] sm:$0xf]
  %v1300 = vld [vmem:[%s8 + $0x8] sm:$0x1]
  %v1301 = vlaneseq
  %v1302 = vshrl.u32 %v1301, 7
  %v1303 = vsub.s32 0, %v1302
  %v1304 = vrot.slane %v1300, %v1303
  %v1313 = vunpack.c.l.b16 %v1292
  %v1314 = vunpack.c.l.b16 %v1293
  %v1315 = vunpack.c.l.b16 %v1294
  %v1316 = vunpack.c.l.b16 %v1295
  %v1317 = vunpack.c.l.b16 %v1296
  %v1318 = vunpack.c.l.b16 %v1297
  %v1319 = vunpack.c.l.b16 %v1298
  %v1320 = vunpack.c.l.b16 %v1299
  %v1321 = vpack.c.b16 %v1314, %v1313
  %v1322 = vpack.c.b16 %v1316, %v1315
  %v1323 = vpack.c.b16 %v1318, %v1317
  %v1324 = vpack.c.b16 %v1320, %v1319
  %vm1329 = vcmask 523264
  %v1331 = vsel %vm1329, %v1291, 0
  %1333 = vmatprep.subr.bf16.mxu0 0
  %1334 = vmatpush1.bf16.msra.mxu0 0
  %1335 = vmatprep.subr.bf16.mxu0 0
  %1336 = vmatpush1.bf16.msra.mxu0 0
  %1337 = vmatprep.subr.bf16.mxu0 0
  %1338 = vmatpush1.bf16.msra.mxu0 0
  %1339 = vmatprep.subr.bf16.mxu0 0
  %1340 = vmatpush1.bf16.msra.mxu0 0
  %1341 = vmatprep.subr.bf16.mxu0 0
  %1342 = vmatpush1.bf16.msra.mxu0 %v1324
  %1343 = vmatprep.subr.bf16.mxu0 0
  %1344 = vmatpush1.bf16.msra.mxu0 %v1323
  %1345 = vmatprep.subr.bf16.mxu0 0
  %1346 = vmatpush1.bf16.msra.mxu0 %v1322
  %1347 = vmatprep.subr.bf16.mxu0 0
  %1348 = vmatpush1.bf16.msra.mxu0 %v1321
  %1349 = vmatprep.subr.bf16.mxu0 0
  %1350 = vmatpush2.bf16.msra.mxu0 0
  %1351 = vmatprep.subr.bf16.mxu0 0
  %1352 = vmatpush2.bf16.msra.mxu0 0
  %1353 = vmatprep.subr.bf16.mxu0 0
  %1354 = vmatpush2.bf16.msra.mxu0 0
  %1355 = vmatprep.subr.bf16.mxu0 0
  %1356 = vmatpush2.bf16.msra.mxu0 0
  %1357 = vmatprep.subr.bf16.mxu0 0
  %1358 = vmatpush2.bf16.msra.mxu0 0
  %1359 = vmatprep.subr.bf16.mxu0 0
  %1360 = vmatpush2.bf16.msra.mxu0 0
  %1361 = vmatprep.subr.bf16.mxu0 0
  %1362 = vmatpush2.bf16.msra.mxu0 0
  %1363 = vmatprep.subr.bf16.mxu0 0
  %1364 = vmatpush2.bf16.msra.mxu0 0
  %1365 = vmatprep.mubr.bf16.mxu0 0
  %1366 = vmatmul.mubr.bf16.gmra.mxu0 %v1331
  %v1367 = vpop.f32.mrf.mxu0
  %v1368 = vadd.f32 %v1304, %v1367
  %v1369 = vpop.f32.mrf.mxu0
  %v1370 = vpop.f32.mrf.mxu0
  %v1371 = vadd.f32 %v1304, %v1370
  %v1372 = vpop.f32.mrf.mxu0
  %1373 = vdwg.mxu0
  %v1374 = vadd.f32 %v1205, %v1368
  %v1375 = vadd.f32 %v1206, %v1371
  %v1376 = vld [vmem:[%s8 + $0xe] sm:$0x1]
  %v1377 = vld [vmem:[%s8 + $0xf] sm:$0x1]
  %v1378 = vsel %vm43, %v1374, 0.0
  %1379 = vadd.xlane.f32.xlu0 %v1378
  %v1380 = vpop.xlane.xlu0 %1379
  %v1381 = vsel %vm43, %v1375, 0.0
  %1382 = vadd.xlane.f32.xlu0 %v1381
  %v1383 = vpop.xlane.xlu0 %1382
  %v1384 = vmul.f32 %v1380, %v50
  %v1385 = vmul.f32 %v1383, %v50
  %v1386 = vsub.f32 %v1374, %v1384
  %v1387 = vsub.f32 %v1375, %v1385
  %v1388 = vmul.f32 %v1386, %v1386
  %v1389 = vmul.f32 %v1387, %v1387
  %v1390 = vsel %vm43, %v1388, 0.0
  %1391 = vadd.xlane.f32.xlu0 %v1390
  %v1392 = vpop.xlane.xlu0 %1391
  %v1393 = vsel %vm43, %v1389, 0.0
  %1394 = vadd.xlane.f32.xlu0 %v1393
  %v1395 = vpop.xlane.xlu0 %1394
  %v1396 = vmul.f32 %v1392, %v50
  %v1397 = vmul.f32 %v1395, %v50
  %v1398 = vadd.f32 %v1396, 1e-12
  %v1399 = vadd.f32 %v1397, 1e-12
  %v1400 = vrsqrt.pop %v1398
  %v1401 = vrsqrt.pop %v1399
  %v1402 = vmul.f32 %v1386, %v1400
  %v1403 = vmul.f32 %v1387, %v1401
  %v1404 = vlaneseq
  %v1405 = vshrl.u32 %v1404, 7
  %v1406 = vsub.s32 0, %v1405
  %v1407 = vrot.slane %v1376, %v1406
  %v1408 = vmul.f32 %v1402, %v1407
  %v1409 = vmul.f32 %v1403, %v1407
  %v1410 = vlaneseq
  %v1411 = vshrl.u32 %v1410, 7
  %v1412 = vsub.s32 0, %v1411
  %v1413 = vrot.slane %v1377, %v1412
  %v1414 = vadd.f32 %v1408, %v1413
  %v1415 = vadd.f32 %v1409, %v1413
  %v1416 = vpack.c.bf16 %v1415, %v1414
  %s1417 = scalar_lea.vmem %s3, 16
  %v1418 = vld [vmem:[%s1417] sm:$0xf]
  %v1419 = vld [vmem:[%s1417 + $0x4] sm:$0xf]
  %v1420 = vld [vmem:[%s1417 + $0x8] sm:$0xf]
  %v1421 = vld [vmem:[%s1417 + $0xc] sm:$0xf]
  %v1422 = vld [vmem:[%s8 + $0x3] sm:$0x1]
  %v1423 = vlaneseq
  %v1424 = vshrl.u32 %v1423, 7
  %v1425 = vsub.s32 0, %v1424
  %v1426 = vrot.slane %v1422, %v1425
  %v1431 = vunpack.c.l.b16 %v1418
  %v1432 = vunpack.c.l.b16 %v1419
  %v1433 = vunpack.c.l.b16 %v1420
  %v1434 = vunpack.c.l.b16 %v1421
  %v1435 = vpack.c.b16 %v1432, %v1431
  %v1436 = vpack.c.b16 %v1434, %v1433
  %v1440 = vsel %vm43, %v1416, 0
  %1442 = vmatprep.subr.bf16.mxu0 0
  %1443 = vmatpush1.bf16.msra.mxu0 0
  %1444 = vmatprep.subr.bf16.mxu0 0
  %1445 = vmatpush1.bf16.msra.mxu0 0
  %1446 = vmatprep.subr.bf16.mxu0 0
  %1447 = vmatpush1.bf16.msra.mxu0 0
  %1448 = vmatprep.subr.bf16.mxu0 0
  %1449 = vmatpush1.bf16.msra.mxu0 0
  %1450 = vmatprep.subr.bf16.mxu0 0
  %1451 = vmatpush1.bf16.msra.mxu0 0
  %1452 = vmatprep.subr.bf16.mxu0 0
  %1453 = vmatpush1.bf16.msra.mxu0 0
  %1454 = vmatprep.subr.bf16.mxu0 0
  %1455 = vmatpush1.bf16.msra.mxu0 %v1436
  %1456 = vmatprep.subr.bf16.mxu0 0
  %1457 = vmatpush1.bf16.msra.mxu0 %v1435
  %1458 = vmatprep.subr.bf16.mxu0 0
  %1459 = vmatpush2.bf16.msra.mxu0 0
  %1460 = vmatprep.subr.bf16.mxu0 0
  %1461 = vmatpush2.bf16.msra.mxu0 0
  %1462 = vmatprep.subr.bf16.mxu0 0
  %1463 = vmatpush2.bf16.msra.mxu0 0
  %1464 = vmatprep.subr.bf16.mxu0 0
  %1465 = vmatpush2.bf16.msra.mxu0 0
  %1466 = vmatprep.subr.bf16.mxu0 0
  %1467 = vmatpush2.bf16.msra.mxu0 0
  %1468 = vmatprep.subr.bf16.mxu0 0
  %1469 = vmatpush2.bf16.msra.mxu0 0
  %1470 = vmatprep.subr.bf16.mxu0 0
  %1471 = vmatpush2.bf16.msra.mxu0 0
  %1472 = vmatprep.subr.bf16.mxu0 0
  %1473 = vmatpush2.bf16.msra.mxu0 0
  %1474 = vmatprep.mubr.bf16.mxu0 0
  %1475 = vmatmul.mubr.bf16.gmra.mxu0 %v1440
  %v1476 = vpop.f32.mrf.mxu0
  %v1477 = vadd.f32 %v1426, %v1476
  %v1478 = vpop.f32.mrf.mxu0
  %v1479 = vpop.f32.mrf.mxu0
  %v1480 = vadd.f32 %v1426, %v1479
  %v1481 = vpop.f32.mrf.mxu0
  %1482 = vdwg.mxu0
  %v1483 = vpack.c.bf16 %v1477, %v1477
  %v1484 = vpack.c.bf16 %v1480, %v1480
  %v1485 = vmul.f32 %v1477, %v89
  %v1486 = vmul.f32 %v1480, %v89
  %v1487 = vpack.c.bf16 %v1485, %v1485
  %v1488 = vpack.c.bf16 %v1486, %v1486
  %1490 = vrot.lane.b32.xlu0 %v1483, 96
  %v1491 = vpop.permute.xlu0 %1490
  %v1493 = vsel %vm43, %v1487, 0
  %v1496 = vsel %vm43, %v1491, 0
  %1498 = vmatprep.subr.bf16.mxu0 0
  %1499 = vmatpush1.bf16.xpose.msra.mxu0 0
  %1500 = vmatprep.subr.bf16.mxu0 0
  %1501 = vmatpush1.bf16.xpose.msra.mxu0 0
  %1502 = vmatprep.subr.bf16.mxu0 0
  %1503 = vmatpush1.bf16.xpose.msra.mxu0 0
  %1504 = vmatprep.subr.bf16.mxu0 0
  %1505 = vmatpush1.bf16.xpose.msra.mxu0 0
  %1506 = vmatprep.subr.bf16.mxu0 0
  %1507 = vmatpush1.bf16.xpose.msra.mxu0 0
  %1508 = vmatprep.subr.bf16.mxu0 0
  %1509 = vmatpush1.bf16.xpose.msra.mxu0 0
  %1510 = vmatprep.subr.bf16.mxu0 0
  %1511 = vmatpush1.bf16.xpose.msra.mxu0 0
  %1512 = vmatprep.subr.bf16.mxu0 0
  %1513 = vmatpush1.bf16.xpose.msra.mxu0 %v1496
  %1514 = vmatprep.subr.bf16.mxu0 0
  %1515 = vmatpush2.bf16.xpose.msra.mxu0 0
  %1516 = vmatprep.subr.bf16.mxu0 0
  %1517 = vmatpush2.bf16.xpose.msra.mxu0 0
  %1518 = vmatprep.subr.bf16.mxu0 0
  %1519 = vmatpush2.bf16.xpose.msra.mxu0 0
  %1520 = vmatprep.subr.bf16.mxu0 0
  %1521 = vmatpush2.bf16.xpose.msra.mxu0 0
  %1522 = vmatprep.subr.bf16.mxu0 0
  %1523 = vmatpush2.bf16.xpose.msra.mxu0 0
  %1524 = vmatprep.subr.bf16.mxu0 0
  %1525 = vmatpush2.bf16.xpose.msra.mxu0 0
  %1526 = vmatprep.subr.bf16.mxu0 0
  %1527 = vmatpush2.bf16.xpose.msra.mxu0 0
  %1528 = vmatprep.subr.bf16.mxu0 0
  %1529 = vmatpush2.bf16.xpose.msra.mxu0 0
  %1530 = vmatprep.mubr.bf16.mxu0 0
  %1531 = vmatmul.mubr.bf16.gmra.mxu0 %v1493
  %v1532 = vpop.f32.mrf.mxu0
  %v1533 = vadd.f32 0.0, %v1532
  %v1534 = vpop.f32.mrf.mxu0
  %v1535 = vpop.f32.mrf.mxu0
  %v1536 = vpop.f32.mrf.mxu0
  %1537 = vdwg.mxu0
  %1539 = vrot.lane.b32.xlu0 %v1484, 96
  %v1540 = vpop.permute.xlu0 %1539
  %v1542 = vsel %vm43, %v1488, 0
  %v1545 = vsel %vm43, %v1540, 0
  %1547 = vmatprep.subr.bf16.mxu0 0
  %1548 = vmatpush1.bf16.xpose.msra.mxu0 0
  %1549 = vmatprep.subr.bf16.mxu0 0
  %1550 = vmatpush1.bf16.xpose.msra.mxu0 0
  %1551 = vmatprep.subr.bf16.mxu0 0
  %1552 = vmatpush1.bf16.xpose.msra.mxu0 0
  %1553 = vmatprep.subr.bf16.mxu0 0
  %1554 = vmatpush1.bf16.xpose.msra.mxu0 0
  %1555 = vmatprep.subr.bf16.mxu0 0
  %1556 = vmatpush1.bf16.xpose.msra.mxu0 0
  %1557 = vmatprep.subr.bf16.mxu0 0
  %1558 = vmatpush1.bf16.xpose.msra.mxu0 0
  %1559 = vmatprep.subr.bf16.mxu0 0
  %1560 = vmatpush1.bf16.xpose.msra.mxu0 0
  %1561 = vmatprep.subr.bf16.mxu0 0
  %1562 = vmatpush1.bf16.xpose.msra.mxu0 %v1545
  %1563 = vmatprep.subr.bf16.mxu0 0
  %1564 = vmatpush2.bf16.xpose.msra.mxu0 0
  %1565 = vmatprep.subr.bf16.mxu0 0
  %1566 = vmatpush2.bf16.xpose.msra.mxu0 0
  %1567 = vmatprep.subr.bf16.mxu0 0
  %1568 = vmatpush2.bf16.xpose.msra.mxu0 0
  %1569 = vmatprep.subr.bf16.mxu0 0
  %1570 = vmatpush2.bf16.xpose.msra.mxu0 0
  %1571 = vmatprep.subr.bf16.mxu0 0
  %1572 = vmatpush2.bf16.xpose.msra.mxu0 0
  %1573 = vmatprep.subr.bf16.mxu0 0
  %1574 = vmatpush2.bf16.xpose.msra.mxu0 0
  %1575 = vmatprep.subr.bf16.mxu0 0
  %1576 = vmatpush2.bf16.xpose.msra.mxu0 0
  %1577 = vmatprep.subr.bf16.mxu0 0
  %1578 = vmatpush2.bf16.xpose.msra.mxu0 0
  %1579 = vmatprep.mubr.bf16.mxu0 0
  %1580 = vmatmul.mubr.bf16.gmra.mxu0 %v1542
  %v1581 = vpop.f32.mrf.mxu0
  %v1582 = vadd.f32 0.0, %v1581
  %v1583 = vpop.f32.mrf.mxu0
  %v1584 = vpop.f32.mrf.mxu0
  %v1585 = vpop.f32.mrf.mxu0
  %1586 = vdwg.mxu0
  %v1587 = vmul.f32 %v1533, 0.35355338
  %v1588 = vmul.f32 %v1582, 0.35355338
  %v1589 = vadd.f32 %v1587, %v282
  %v1590 = vadd.f32 %v1588, %v286
  %v1591 = vsel %vm291, %v1589, -inf
  %1592 = vmax.xlane.f32.xlu0 %v1591
  %v1593 = vpop.xlane.xlu0 %1592
  %v1594 = vsel %vm291, %v1590, -inf
  %1595 = vmax.xlane.f32.xlu0 %v1594
  %v1596 = vpop.xlane.xlu0 %1595
  %v1597 = vsub.f32 %v1589, %v1593
  %v1598 = vsub.f32 %v1590, %v1596
  %v1599 = vmul.f32 %v1597, 1.442695
  %v1600 = vpow.pop %v1599
  %v1601 = vmul.f32 %v1598, 1.442695
  %v1602 = vpow.pop %v1601
  %v1603 = vsel %vm291, %v1600, 0.0
  %1604 = vadd.xlane.f32.xlu0 %v1603
  %v1605 = vpop.xlane.xlu0 %1604
  %v1606 = vsel %vm291, %v1602, 0.0
  %1607 = vadd.xlane.f32.xlu0 %v1606
  %v1608 = vpop.xlane.xlu0 %1607
  %v1609 = vrcp.pop %v1605
  %v1610 = vmul.f32 %v1600, %v1609
  %v1611 = vrcp.pop %v1608
  %v1612 = vmul.f32 %v1602, %v1611
  %v1613 = vpack.c.bf16 %v1610, %v1610
  %v1614 = vpack.c.bf16 %v1612, %v1612
  %v1615 = vmul.f32 %v1477, %v318
  %v1616 = vmul.f32 %v1480, %v318
  %v1617 = vpack.c.bf16 %v1615, %v1615
  %v1618 = vpack.c.bf16 %v1616, %v1616
  %v1619 = vmul.f32 %v1477, %v94
  %v1620 = vmul.f32 %v1480, %v94
  %v1621 = vpack.c.bf16 %v1619, %v1619
  %v1622 = vpack.c.bf16 %v1620, %v1620
  %v1624 = vsel %vm43, %v1621, 0
  %1626 = vmatprep.subr.bf16.mxu0 0
  %1627 = vmatpush1.bf16.xpose.msra.mxu0 0
  %1628 = vmatprep.subr.bf16.mxu0 0
  %1629 = vmatpush1.bf16.xpose.msra.mxu0 0
  %1630 = vmatprep.subr.bf16.mxu0 0
  %1631 = vmatpush1.bf16.xpose.msra.mxu0 0
  %1632 = vmatprep.subr.bf16.mxu0 0
  %1633 = vmatpush1.bf16.xpose.msra.mxu0 0
  %1634 = vmatprep.subr.bf16.mxu0 0
  %1635 = vmatpush1.bf16.xpose.msra.mxu0 0
  %1636 = vmatprep.subr.bf16.mxu0 0
  %1637 = vmatpush1.bf16.xpose.msra.mxu0 0
  %1638 = vmatprep.subr.bf16.mxu0 0
  %1639 = vmatpush1.bf16.xpose.msra.mxu0 0
  %1640 = vmatprep.subr.bf16.mxu0 0
  %1641 = vmatpush1.bf16.xpose.msra.mxu0 %v1496
  %1642 = vmatprep.subr.bf16.mxu0 0
  %1643 = vmatpush2.bf16.xpose.msra.mxu0 0
  %1644 = vmatprep.subr.bf16.mxu0 0
  %1645 = vmatpush2.bf16.xpose.msra.mxu0 0
  %1646 = vmatprep.subr.bf16.mxu0 0
  %1647 = vmatpush2.bf16.xpose.msra.mxu0 0
  %1648 = vmatprep.subr.bf16.mxu0 0
  %1649 = vmatpush2.bf16.xpose.msra.mxu0 0
  %1650 = vmatprep.subr.bf16.mxu0 0
  %1651 = vmatpush2.bf16.xpose.msra.mxu0 0
  %1652 = vmatprep.subr.bf16.mxu0 0
  %1653 = vmatpush2.bf16.xpose.msra.mxu0 0
  %1654 = vmatprep.subr.bf16.mxu0 0
  %1655 = vmatpush2.bf16.xpose.msra.mxu0 0
  %1656 = vmatprep.subr.bf16.mxu0 0
  %1657 = vmatpush2.bf16.xpose.msra.mxu0 0
  %1658 = vmatprep.mubr.bf16.mxu0 0
  %1659 = vmatmul.mubr.bf16.gmra.mxu0 %v1624
  %v1660 = vpop.f32.mrf.mxu0
  %v1661 = vadd.f32 0.0, %v1660
  %v1662 = vpop.f32.mrf.mxu0
  %v1663 = vpop.f32.mrf.mxu0
  %v1664 = vpop.f32.mrf.mxu0
  %1665 = vdwg.mxu0
  %v1667 = vsel %vm43, %v1622, 0
  %1669 = vmatprep.subr.bf16.mxu0 0
  %1670 = vmatpush1.bf16.xpose.msra.mxu0 0
  %1671 = vmatprep.subr.bf16.mxu0 0
  %1672 = vmatpush1.bf16.xpose.msra.mxu0 0
  %1673 = vmatprep.subr.bf16.mxu0 0
  %1674 = vmatpush1.bf16.xpose.msra.mxu0 0
  %1675 = vmatprep.subr.bf16.mxu0 0
  %1676 = vmatpush1.bf16.xpose.msra.mxu0 0
  %1677 = vmatprep.subr.bf16.mxu0 0
  %1678 = vmatpush1.bf16.xpose.msra.mxu0 0
  %1679 = vmatprep.subr.bf16.mxu0 0
  %1680 = vmatpush1.bf16.xpose.msra.mxu0 0
  %1681 = vmatprep.subr.bf16.mxu0 0
  %1682 = vmatpush1.bf16.xpose.msra.mxu0 0
  %1683 = vmatprep.subr.bf16.mxu0 0
  %1684 = vmatpush1.bf16.xpose.msra.mxu0 %v1545
  %1685 = vmatprep.subr.bf16.mxu0 0
  %1686 = vmatpush2.bf16.xpose.msra.mxu0 0
  %1687 = vmatprep.subr.bf16.mxu0 0
  %1688 = vmatpush2.bf16.xpose.msra.mxu0 0
  %1689 = vmatprep.subr.bf16.mxu0 0
  %1690 = vmatpush2.bf16.xpose.msra.mxu0 0
  %1691 = vmatprep.subr.bf16.mxu0 0
  %1692 = vmatpush2.bf16.xpose.msra.mxu0 0
  %1693 = vmatprep.subr.bf16.mxu0 0
  %1694 = vmatpush2.bf16.xpose.msra.mxu0 0
  %1695 = vmatprep.subr.bf16.mxu0 0
  %1696 = vmatpush2.bf16.xpose.msra.mxu0 0
  %1697 = vmatprep.subr.bf16.mxu0 0
  %1698 = vmatpush2.bf16.xpose.msra.mxu0 0
  %1699 = vmatprep.subr.bf16.mxu0 0
  %1700 = vmatpush2.bf16.xpose.msra.mxu0 0
  %1701 = vmatprep.mubr.bf16.mxu0 0
  %1702 = vmatmul.mubr.bf16.gmra.mxu0 %v1667
  %v1703 = vpop.f32.mrf.mxu0
  %v1704 = vadd.f32 0.0, %v1703
  %v1705 = vpop.f32.mrf.mxu0
  %v1706 = vpop.f32.mrf.mxu0
  %v1707 = vpop.f32.mrf.mxu0
  %1708 = vdwg.mxu0
  %v1709 = vmul.f32 %v1661, 0.35355338
  %v1710 = vmul.f32 %v1704, 0.35355338
  %v1711 = vadd.f32 %v1709, %v282
  %v1712 = vadd.f32 %v1710, %v286
  %v1713 = vsel %vm291, %v1711, -inf
  %1714 = vmax.xlane.f32.xlu0 %v1713
  %v1715 = vpop.xlane.xlu0 %1714
  %v1716 = vsel %vm291, %v1712, -inf
  %1717 = vmax.xlane.f32.xlu0 %v1716
  %v1718 = vpop.xlane.xlu0 %1717
  %v1719 = vsub.f32 %v1711, %v1715
  %v1720 = vsub.f32 %v1712, %v1718
  %v1721 = vmul.f32 %v1719, 1.442695
  %v1722 = vpow.pop %v1721
  %v1723 = vmul.f32 %v1720, 1.442695
  %v1724 = vpow.pop %v1723
  %v1725 = vsel %vm291, %v1722, 0.0
  %1726 = vadd.xlane.f32.xlu0 %v1725
  %v1727 = vpop.xlane.xlu0 %1726
  %v1728 = vsel %vm291, %v1724, 0.0
  %1729 = vadd.xlane.f32.xlu0 %v1728
  %v1730 = vpop.xlane.xlu0 %1729
  %v1731 = vrcp.pop %v1727
  %v1732 = vmul.f32 %v1722, %v1731
  %v1733 = vrcp.pop %v1730
  %v1734 = vmul.f32 %v1724, %v1733
  %v1735 = vpack.c.bf16 %v1732, %v1732
  %v1736 = vpack.c.bf16 %v1734, %v1734
  %v1737 = vmul.f32 %v1477, %v444
  %v1738 = vmul.f32 %v1480, %v444
  %v1739 = vpack.c.bf16 %v1737, %v1737
  %v1740 = vpack.c.bf16 %v1738, %v1738
  %1742 = vrot.lane.b32.xlu0 %v1739, 64
  %v1743 = vpop.permute.xlu0 %1742
  %v1745 = vsel %vm291, %v1735, 0
  %v1748 = vsel %vm456, %v1743, 0
  %1750 = vmatprep.subr.bf16.mxu0 0
  %1751 = vmatpush1.bf16.msra.mxu0 0
  %1752 = vmatprep.subr.bf16.mxu0 0
  %1753 = vmatpush1.bf16.msra.mxu0 0
  %1754 = vmatprep.subr.bf16.mxu0 0
  %1755 = vmatpush1.bf16.msra.mxu0 0
  %1756 = vmatprep.subr.bf16.mxu0 0
  %1757 = vmatpush1.bf16.msra.mxu0 0
  %1758 = vmatprep.subr.bf16.mxu0 0
  %1759 = vmatpush1.bf16.msra.mxu0 0
  %1760 = vmatprep.subr.bf16.mxu0 0
  %1761 = vmatpush1.bf16.msra.mxu0 0
  %1762 = vmatprep.subr.bf16.mxu0 0
  %1763 = vmatpush1.bf16.msra.mxu0 0
  %1764 = vmatprep.subr.bf16.mxu0 0
  %1765 = vmatpush1.bf16.msra.mxu0 %v1748
  %1766 = vmatprep.subr.bf16.mxu0 0
  %1767 = vmatpush2.bf16.msra.mxu0 0
  %1768 = vmatprep.subr.bf16.mxu0 0
  %1769 = vmatpush2.bf16.msra.mxu0 0
  %1770 = vmatprep.subr.bf16.mxu0 0
  %1771 = vmatpush2.bf16.msra.mxu0 0
  %1772 = vmatprep.subr.bf16.mxu0 0
  %1773 = vmatpush2.bf16.msra.mxu0 0
  %1774 = vmatprep.subr.bf16.mxu0 0
  %1775 = vmatpush2.bf16.msra.mxu0 0
  %1776 = vmatprep.subr.bf16.mxu0 0
  %1777 = vmatpush2.bf16.msra.mxu0 0
  %1778 = vmatprep.subr.bf16.mxu0 0
  %1779 = vmatpush2.bf16.msra.mxu0 0
  %1780 = vmatprep.subr.bf16.mxu0 0
  %1781 = vmatpush2.bf16.msra.mxu0 0
  %1782 = vmatprep.mubr.bf16.mxu0 0
  %1783 = vmatmul.mubr.bf16.gmra.mxu0 %v1745
  %v1784 = vpop.f32.mrf.mxu0
  %v1785 = vadd.f32 0.0, %v1784
  %v1786 = vpop.f32.mrf.mxu0
  %v1787 = vpop.f32.mrf.mxu0
  %v1788 = vpop.f32.mrf.mxu0
  %1789 = vdwg.mxu0
  %1791 = vrot.lane.b32.xlu0 %v1740, 64
  %v1792 = vpop.permute.xlu0 %1791
  %v1794 = vsel %vm291, %v1736, 0
  %v1797 = vsel %vm456, %v1792, 0
  %1799 = vmatprep.subr.bf16.mxu0 0
  %1800 = vmatpush1.bf16.msra.mxu0 0
  %1801 = vmatprep.subr.bf16.mxu0 0
  %1802 = vmatpush1.bf16.msra.mxu0 0
  %1803 = vmatprep.subr.bf16.mxu0 0
  %1804 = vmatpush1.bf16.msra.mxu0 0
  %1805 = vmatprep.subr.bf16.mxu0 0
  %1806 = vmatpush1.bf16.msra.mxu0 0
  %1807 = vmatprep.subr.bf16.mxu0 0
  %1808 = vmatpush1.bf16.msra.mxu0 0
  %1809 = vmatprep.subr.bf16.mxu0 0
  %1810 = vmatpush1.bf16.msra.mxu0 0
  %1811 = vmatprep.subr.bf16.mxu0 0
  %1812 = vmatpush1.bf16.msra.mxu0 0
  %1813 = vmatprep.subr.bf16.mxu0 0
  %1814 = vmatpush1.bf16.msra.mxu0 %v1797
  %1815 = vmatprep.subr.bf16.mxu0 0
  %1816 = vmatpush2.bf16.msra.mxu0 0
  %1817 = vmatprep.subr.bf16.mxu0 0
  %1818 = vmatpush2.bf16.msra.mxu0 0
  %1819 = vmatprep.subr.bf16.mxu0 0
  %1820 = vmatpush2.bf16.msra.mxu0 0
  %1821 = vmatprep.subr.bf16.mxu0 0
  %1822 = vmatpush2.bf16.msra.mxu0 0
  %1823 = vmatprep.subr.bf16.mxu0 0
  %1824 = vmatpush2.bf16.msra.mxu0 0
  %1825 = vmatprep.subr.bf16.mxu0 0
  %1826 = vmatpush2.bf16.msra.mxu0 0
  %1827 = vmatprep.subr.bf16.mxu0 0
  %1828 = vmatpush2.bf16.msra.mxu0 0
  %1829 = vmatprep.subr.bf16.mxu0 0
  %1830 = vmatpush2.bf16.msra.mxu0 0
  %1831 = vmatprep.mubr.bf16.mxu0 0
  %1832 = vmatmul.mubr.bf16.gmra.mxu0 %v1794
  %v1833 = vpop.f32.mrf.mxu0
  %v1834 = vadd.f32 0.0, %v1833
  %v1835 = vpop.f32.mrf.mxu0
  %v1836 = vpop.f32.mrf.mxu0
  %v1837 = vpop.f32.mrf.mxu0
  %1838 = vdwg.mxu0
  %1840 = vrot.lane.b32.xlu0 %v1617, 64
  %v1841 = vpop.permute.xlu0 %1840
  %v1843 = vsel %vm291, %v1613, 0
  %v1846 = vsel %vm456, %v1841, 0
  %1848 = vmatprep.subr.bf16.mxu0 0
  %1849 = vmatpush1.bf16.msra.mxu0 0
  %1850 = vmatprep.subr.bf16.mxu0 0
  %1851 = vmatpush1.bf16.msra.mxu0 0
  %1852 = vmatprep.subr.bf16.mxu0 0
  %1853 = vmatpush1.bf16.msra.mxu0 0
  %1854 = vmatprep.subr.bf16.mxu0 0
  %1855 = vmatpush1.bf16.msra.mxu0 0
  %1856 = vmatprep.subr.bf16.mxu0 0
  %1857 = vmatpush1.bf16.msra.mxu0 0
  %1858 = vmatprep.subr.bf16.mxu0 0
  %1859 = vmatpush1.bf16.msra.mxu0 0
  %1860 = vmatprep.subr.bf16.mxu0 0
  %1861 = vmatpush1.bf16.msra.mxu0 0
  %1862 = vmatprep.subr.bf16.mxu0 0
  %1863 = vmatpush1.bf16.msra.mxu0 %v1846
  %1864 = vmatprep.subr.bf16.mxu0 0
  %1865 = vmatpush2.bf16.msra.mxu0 0
  %1866 = vmatprep.subr.bf16.mxu0 0
  %1867 = vmatpush2.bf16.msra.mxu0 0
  %1868 = vmatprep.subr.bf16.mxu0 0
  %1869 = vmatpush2.bf16.msra.mxu0 0
  %1870 = vmatprep.subr.bf16.mxu0 0
  %1871 = vmatpush2.bf16.msra.mxu0 0
  %1872 = vmatprep.subr.bf16.mxu0 0
  %1873 = vmatpush2.bf16.msra.mxu0 0
  %1874 = vmatprep.subr.bf16.mxu0 0
  %1875 = vmatpush2.bf16.msra.mxu0 0
  %1876 = vmatprep.subr.bf16.mxu0 0
  %1877 = vmatpush2.bf16.msra.mxu0 0
  %1878 = vmatprep.subr.bf16.mxu0 0
  %1879 = vmatpush2.bf16.msra.mxu0 0
  %1880 = vmatprep.mubr.bf16.mxu0 0
  %1881 = vmatmul.mubr.bf16.gmra.mxu0 %v1843
  %v1882 = vpop.f32.mrf.mxu0
  %v1883 = vadd.f32 %v1785, %v1882
  %v1884 = vpop.f32.mrf.mxu0
  %v1885 = vpop.f32.mrf.mxu0
  %v1886 = vpop.f32.mrf.mxu0
  %1887 = vdwg.mxu0
  %1889 = vrot.lane.b32.xlu0 %v1618, 64
  %v1890 = vpop.permute.xlu0 %1889
  %v1892 = vsel %vm291, %v1614, 0
  %v1895 = vsel %vm456, %v1890, 0
  %1897 = vmatprep.subr.bf16.mxu0 0
  %1898 = vmatpush1.bf16.msra.mxu0 0
  %1899 = vmatprep.subr.bf16.mxu0 0
  %1900 = vmatpush1.bf16.msra.mxu0 0
  %1901 = vmatprep.subr.bf16.mxu0 0
  %1902 = vmatpush1.bf16.msra.mxu0 0
  %1903 = vmatprep.subr.bf16.mxu0 0
  %1904 = vmatpush1.bf16.msra.mxu0 0
  %1905 = vmatprep.subr.bf16.mxu0 0
  %1906 = vmatpush1.bf16.msra.mxu0 0
  %1907 = vmatprep.subr.bf16.mxu0 0
  %1908 = vmatpush1.bf16.msra.mxu0 0
  %1909 = vmatprep.subr.bf16.mxu0 0
  %1910 = vmatpush1.bf16.msra.mxu0 0
  %1911 = vmatprep.subr.bf16.mxu0 0
  %1912 = vmatpush1.bf16.msra.mxu0 %v1895
  %1913 = vmatprep.subr.bf16.mxu0 0
  %1914 = vmatpush2.bf16.msra.mxu0 0
  %1915 = vmatprep.subr.bf16.mxu0 0
  %1916 = vmatpush2.bf16.msra.mxu0 0
  %1917 = vmatprep.subr.bf16.mxu0 0
  %1918 = vmatpush2.bf16.msra.mxu0 0
  %1919 = vmatprep.subr.bf16.mxu0 0
  %1920 = vmatpush2.bf16.msra.mxu0 0
  %1921 = vmatprep.subr.bf16.mxu0 0
  %1922 = vmatpush2.bf16.msra.mxu0 0
  %1923 = vmatprep.subr.bf16.mxu0 0
  %1924 = vmatpush2.bf16.msra.mxu0 0
  %1925 = vmatprep.subr.bf16.mxu0 0
  %1926 = vmatpush2.bf16.msra.mxu0 0
  %1927 = vmatprep.subr.bf16.mxu0 0
  %1928 = vmatpush2.bf16.msra.mxu0 0
  %1929 = vmatprep.mubr.bf16.mxu0 0
  %1930 = vmatmul.mubr.bf16.gmra.mxu0 %v1892
  %v1931 = vpop.f32.mrf.mxu0
  %v1932 = vadd.f32 %v1834, %v1931
  %v1933 = vpop.f32.mrf.mxu0
  %v1934 = vpop.f32.mrf.mxu0
  %v1935 = vpop.f32.mrf.mxu0
  %1936 = vdwg.mxu0
  %v1937 = vmul.f32 %v1477, %v99
  %v1938 = vmul.f32 %v1480, %v99
  %v1939 = vpack.c.bf16 %v1937, %v1937
  %v1940 = vpack.c.bf16 %v1938, %v1938
  %v1942 = vsel %vm43, %v1939, 0
  %1944 = vmatprep.subr.bf16.mxu0 0
  %1945 = vmatpush1.bf16.xpose.msra.mxu0 0
  %1946 = vmatprep.subr.bf16.mxu0 0
  %1947 = vmatpush1.bf16.xpose.msra.mxu0 0
  %1948 = vmatprep.subr.bf16.mxu0 0
  %1949 = vmatpush1.bf16.xpose.msra.mxu0 0
  %1950 = vmatprep.subr.bf16.mxu0 0
  %1951 = vmatpush1.bf16.xpose.msra.mxu0 0
  %1952 = vmatprep.subr.bf16.mxu0 0
  %1953 = vmatpush1.bf16.xpose.msra.mxu0 0
  %1954 = vmatprep.subr.bf16.mxu0 0
  %1955 = vmatpush1.bf16.xpose.msra.mxu0 0
  %1956 = vmatprep.subr.bf16.mxu0 0
  %1957 = vmatpush1.bf16.xpose.msra.mxu0 0
  %1958 = vmatprep.subr.bf16.mxu0 0
  %1959 = vmatpush1.bf16.xpose.msra.mxu0 %v1496
  %1960 = vmatprep.subr.bf16.mxu0 0
  %1961 = vmatpush2.bf16.xpose.msra.mxu0 0
  %1962 = vmatprep.subr.bf16.mxu0 0
  %1963 = vmatpush2.bf16.xpose.msra.mxu0 0
  %1964 = vmatprep.subr.bf16.mxu0 0
  %1965 = vmatpush2.bf16.xpose.msra.mxu0 0
  %1966 = vmatprep.subr.bf16.mxu0 0
  %1967 = vmatpush2.bf16.xpose.msra.mxu0 0
  %1968 = vmatprep.subr.bf16.mxu0 0
  %1969 = vmatpush2.bf16.xpose.msra.mxu0 0
  %1970 = vmatprep.subr.bf16.mxu0 0
  %1971 = vmatpush2.bf16.xpose.msra.mxu0 0
  %1972 = vmatprep.subr.bf16.mxu0 0
  %1973 = vmatpush2.bf16.xpose.msra.mxu0 0
  %1974 = vmatprep.subr.bf16.mxu0 0
  %1975 = vmatpush2.bf16.xpose.msra.mxu0 0
  %1976 = vmatprep.mubr.bf16.mxu0 0
  %1977 = vmatmul.mubr.bf16.gmra.mxu0 %v1942
  %v1978 = vpop.f32.mrf.mxu0
  %v1979 = vadd.f32 0.0, %v1978
  %v1980 = vpop.f32.mrf.mxu0
  %v1981 = vpop.f32.mrf.mxu0
  %v1982 = vpop.f32.mrf.mxu0
  %1983 = vdwg.mxu0
  %v1985 = vsel %vm43, %v1940, 0
  %1987 = vmatprep.subr.bf16.mxu0 0
  %1988 = vmatpush1.bf16.xpose.msra.mxu0 0
  %1989 = vmatprep.subr.bf16.mxu0 0
  %1990 = vmatpush1.bf16.xpose.msra.mxu0 0
  %1991 = vmatprep.subr.bf16.mxu0 0
  %1992 = vmatpush1.bf16.xpose.msra.mxu0 0
  %1993 = vmatprep.subr.bf16.mxu0 0
  %1994 = vmatpush1.bf16.xpose.msra.mxu0 0
  %1995 = vmatprep.subr.bf16.mxu0 0
  %1996 = vmatpush1.bf16.xpose.msra.mxu0 0
  %1997 = vmatprep.subr.bf16.mxu0 0
  %1998 = vmatpush1.bf16.xpose.msra.mxu0 0
  %1999 = vmatprep.subr.bf16.mxu0 0
  %2000 = vmatpush1.bf16.xpose.msra.mxu0 0
  %2001 = vmatprep.subr.bf16.mxu0 0
  %2002 = vmatpush1.bf16.xpose.msra.mxu0 %v1545
  %2003 = vmatprep.subr.bf16.mxu0 0
  %2004 = vmatpush2.bf16.xpose.msra.mxu0 0
  %2005 = vmatprep.subr.bf16.mxu0 0
  %2006 = vmatpush2.bf16.xpose.msra.mxu0 0
  %2007 = vmatprep.subr.bf16.mxu0 0
  %2008 = vmatpush2.bf16.xpose.msra.mxu0 0
  %2009 = vmatprep.subr.bf16.mxu0 0
  %2010 = vmatpush2.bf16.xpose.msra.mxu0 0
  %2011 = vmatprep.subr.bf16.mxu0 0
  %2012 = vmatpush2.bf16.xpose.msra.mxu0 0
  %2013 = vmatprep.subr.bf16.mxu0 0
  %2014 = vmatpush2.bf16.xpose.msra.mxu0 0
  %2015 = vmatprep.subr.bf16.mxu0 0
  %2016 = vmatpush2.bf16.xpose.msra.mxu0 0
  %2017 = vmatprep.subr.bf16.mxu0 0
  %2018 = vmatpush2.bf16.xpose.msra.mxu0 0
  %2019 = vmatprep.mubr.bf16.mxu0 0
  %2020 = vmatmul.mubr.bf16.gmra.mxu0 %v1985
  %v2021 = vpop.f32.mrf.mxu0
  %v2022 = vadd.f32 0.0, %v2021
  %v2023 = vpop.f32.mrf.mxu0
  %v2024 = vpop.f32.mrf.mxu0
  %v2025 = vpop.f32.mrf.mxu0
  %2026 = vdwg.mxu0
  %v2027 = vmul.f32 %v1979, 0.35355338
  %v2028 = vmul.f32 %v2022, 0.35355338
  %v2029 = vadd.f32 %v2027, %v282
  %v2030 = vadd.f32 %v2028, %v286
  %v2031 = vsel %vm291, %v2029, -inf
  %2032 = vmax.xlane.f32.xlu0 %v2031
  %v2033 = vpop.xlane.xlu0 %2032
  %v2034 = vsel %vm291, %v2030, -inf
  %2035 = vmax.xlane.f32.xlu0 %v2034
  %v2036 = vpop.xlane.xlu0 %2035
  %v2037 = vsub.f32 %v2029, %v2033
  %v2038 = vsub.f32 %v2030, %v2036
  %v2039 = vmul.f32 %v2037, 1.442695
  %v2040 = vpow.pop %v2039
  %v2041 = vmul.f32 %v2038, 1.442695
  %v2042 = vpow.pop %v2041
  %v2043 = vsel %vm291, %v2040, 0.0
  %2044 = vadd.xlane.f32.xlu0 %v2043
  %v2045 = vpop.xlane.xlu0 %2044
  %v2046 = vsel %vm291, %v2042, 0.0
  %2047 = vadd.xlane.f32.xlu0 %v2046
  %v2048 = vpop.xlane.xlu0 %2047
  %v2049 = vrcp.pop %v2045
  %v2050 = vmul.f32 %v2040, %v2049
  %v2051 = vrcp.pop %v2048
  %v2052 = vmul.f32 %v2042, %v2051
  %v2053 = vpack.c.bf16 %v2050, %v2050
  %v2054 = vpack.c.bf16 %v2052, %v2052
  %v2055 = vmul.f32 %v1477, %v767
  %v2056 = vmul.f32 %v1480, %v767
  %v2057 = vpack.c.bf16 %v2055, %v2055
  %v2058 = vpack.c.bf16 %v2056, %v2056
  %2060 = vrot.lane.b32.xlu0 %v2057, 64
  %v2061 = vpop.permute.xlu0 %2060
  %v2063 = vsel %vm291, %v2053, 0
  %v2066 = vsel %vm456, %v2061, 0
  %2068 = vmatprep.subr.bf16.mxu0 0
  %2069 = vmatpush1.bf16.msra.mxu0 0
  %2070 = vmatprep.subr.bf16.mxu0 0
  %2071 = vmatpush1.bf16.msra.mxu0 0
  %2072 = vmatprep.subr.bf16.mxu0 0
  %2073 = vmatpush1.bf16.msra.mxu0 0
  %2074 = vmatprep.subr.bf16.mxu0 0
  %2075 = vmatpush1.bf16.msra.mxu0 0
  %2076 = vmatprep.subr.bf16.mxu0 0
  %2077 = vmatpush1.bf16.msra.mxu0 0
  %2078 = vmatprep.subr.bf16.mxu0 0
  %2079 = vmatpush1.bf16.msra.mxu0 0
  %2080 = vmatprep.subr.bf16.mxu0 0
  %2081 = vmatpush1.bf16.msra.mxu0 0
  %2082 = vmatprep.subr.bf16.mxu0 0
  %2083 = vmatpush1.bf16.msra.mxu0 %v2066
  %2084 = vmatprep.subr.bf16.mxu0 0
  %2085 = vmatpush2.bf16.msra.mxu0 0
  %2086 = vmatprep.subr.bf16.mxu0 0
  %2087 = vmatpush2.bf16.msra.mxu0 0
  %2088 = vmatprep.subr.bf16.mxu0 0
  %2089 = vmatpush2.bf16.msra.mxu0 0
  %2090 = vmatprep.subr.bf16.mxu0 0
  %2091 = vmatpush2.bf16.msra.mxu0 0
  %2092 = vmatprep.subr.bf16.mxu0 0
  %2093 = vmatpush2.bf16.msra.mxu0 0
  %2094 = vmatprep.subr.bf16.mxu0 0
  %2095 = vmatpush2.bf16.msra.mxu0 0
  %2096 = vmatprep.subr.bf16.mxu0 0
  %2097 = vmatpush2.bf16.msra.mxu0 0
  %2098 = vmatprep.subr.bf16.mxu0 0
  %2099 = vmatpush2.bf16.msra.mxu0 0
  %2100 = vmatprep.mubr.bf16.mxu0 0
  %2101 = vmatmul.mubr.bf16.gmra.mxu0 %v2063
  %v2102 = vpop.f32.mrf.mxu0
  %v2103 = vadd.f32 0.0, %v2102
  %v2104 = vpop.f32.mrf.mxu0
  %v2105 = vpop.f32.mrf.mxu0
  %v2106 = vpop.f32.mrf.mxu0
  %2107 = vdwg.mxu0
  %2109 = vrot.lane.b32.xlu0 %v2058, 64
  %v2110 = vpop.permute.xlu0 %2109
  %v2112 = vsel %vm291, %v2054, 0
  %v2115 = vsel %vm456, %v2110, 0
  %2117 = vmatprep.subr.bf16.mxu0 0
  %2118 = vmatpush1.bf16.msra.mxu0 0
  %2119 = vmatprep.subr.bf16.mxu0 0
  %2120 = vmatpush1.bf16.msra.mxu0 0
  %2121 = vmatprep.subr.bf16.mxu0 0
  %2122 = vmatpush1.bf16.msra.mxu0 0
  %2123 = vmatprep.subr.bf16.mxu0 0
  %2124 = vmatpush1.bf16.msra.mxu0 0
  %2125 = vmatprep.subr.bf16.mxu0 0
  %2126 = vmatpush1.bf16.msra.mxu0 0
  %2127 = vmatprep.subr.bf16.mxu0 0
  %2128 = vmatpush1.bf16.msra.mxu0 0
  %2129 = vmatprep.subr.bf16.mxu0 0
  %2130 = vmatpush1.bf16.msra.mxu0 0
  %2131 = vmatprep.subr.bf16.mxu0 0
  %2132 = vmatpush1.bf16.msra.mxu0 %v2115
  %2133 = vmatprep.subr.bf16.mxu0 0
  %2134 = vmatpush2.bf16.msra.mxu0 0
  %2135 = vmatprep.subr.bf16.mxu0 0
  %2136 = vmatpush2.bf16.msra.mxu0 0
  %2137 = vmatprep.subr.bf16.mxu0 0
  %2138 = vmatpush2.bf16.msra.mxu0 0
  %2139 = vmatprep.subr.bf16.mxu0 0
  %2140 = vmatpush2.bf16.msra.mxu0 0
  %2141 = vmatprep.subr.bf16.mxu0 0
  %2142 = vmatpush2.bf16.msra.mxu0 0
  %2143 = vmatprep.subr.bf16.mxu0 0
  %2144 = vmatpush2.bf16.msra.mxu0 0
  %2145 = vmatprep.subr.bf16.mxu0 0
  %2146 = vmatpush2.bf16.msra.mxu0 0
  %2147 = vmatprep.subr.bf16.mxu0 0
  %2148 = vmatpush2.bf16.msra.mxu0 0
  %2149 = vmatprep.mubr.bf16.mxu0 0
  %2150 = vmatmul.mubr.bf16.gmra.mxu0 %v2112
  %v2151 = vpop.f32.mrf.mxu0
  %v2152 = vadd.f32 0.0, %v2151
  %v2153 = vpop.f32.mrf.mxu0
  %v2154 = vpop.f32.mrf.mxu0
  %v2155 = vpop.f32.mrf.mxu0
  %2156 = vdwg.mxu0
  %v2157 = vadd.f32 %v1883, %v2103
  %v2158 = vadd.f32 %v1932, %v2152
  %v2159 = vmul.f32 %v1477, %v104
  %v2160 = vmul.f32 %v1480, %v104
  %v2161 = vpack.c.bf16 %v2159, %v2159
  %v2162 = vpack.c.bf16 %v2160, %v2160
  %v2164 = vsel %vm43, %v2161, 0
  %2166 = vmatprep.subr.bf16.mxu0 0
  %2167 = vmatpush1.bf16.xpose.msra.mxu0 0
  %2168 = vmatprep.subr.bf16.mxu0 0
  %2169 = vmatpush1.bf16.xpose.msra.mxu0 0
  %2170 = vmatprep.subr.bf16.mxu0 0
  %2171 = vmatpush1.bf16.xpose.msra.mxu0 0
  %2172 = vmatprep.subr.bf16.mxu0 0
  %2173 = vmatpush1.bf16.xpose.msra.mxu0 0
  %2174 = vmatprep.subr.bf16.mxu0 0
  %2175 = vmatpush1.bf16.xpose.msra.mxu0 0
  %2176 = vmatprep.subr.bf16.mxu0 0
  %2177 = vmatpush1.bf16.xpose.msra.mxu0 0
  %2178 = vmatprep.subr.bf16.mxu0 0
  %2179 = vmatpush1.bf16.xpose.msra.mxu0 0
  %2180 = vmatprep.subr.bf16.mxu0 0
  %2181 = vmatpush1.bf16.xpose.msra.mxu0 %v1496
  %2182 = vmatprep.subr.bf16.mxu0 0
  %2183 = vmatpush2.bf16.xpose.msra.mxu0 0
  %2184 = vmatprep.subr.bf16.mxu0 0
  %2185 = vmatpush2.bf16.xpose.msra.mxu0 0
  %2186 = vmatprep.subr.bf16.mxu0 0
  %2187 = vmatpush2.bf16.xpose.msra.mxu0 0
  %2188 = vmatprep.subr.bf16.mxu0 0
  %2189 = vmatpush2.bf16.xpose.msra.mxu0 0
  %2190 = vmatprep.subr.bf16.mxu0 0
  %2191 = vmatpush2.bf16.xpose.msra.mxu0 0
  %2192 = vmatprep.subr.bf16.mxu0 0
  %2193 = vmatpush2.bf16.xpose.msra.mxu0 0
  %2194 = vmatprep.subr.bf16.mxu0 0
  %2195 = vmatpush2.bf16.xpose.msra.mxu0 0
  %2196 = vmatprep.subr.bf16.mxu0 0
  %2197 = vmatpush2.bf16.xpose.msra.mxu0 0
  %2198 = vmatprep.mubr.bf16.mxu0 0
  %2199 = vmatmul.mubr.bf16.gmra.mxu0 %v2164
  %v2200 = vpop.f32.mrf.mxu0
  %v2201 = vadd.f32 0.0, %v2200
  %v2202 = vpop.f32.mrf.mxu0
  %v2203 = vpop.f32.mrf.mxu0
  %v2204 = vpop.f32.mrf.mxu0
  %2205 = vdwg.mxu0
  %v2207 = vsel %vm43, %v2162, 0
  %2209 = vmatprep.subr.bf16.mxu0 0
  %2210 = vmatpush1.bf16.xpose.msra.mxu0 0
  %2211 = vmatprep.subr.bf16.mxu0 0
  %2212 = vmatpush1.bf16.xpose.msra.mxu0 0
  %2213 = vmatprep.subr.bf16.mxu0 0
  %2214 = vmatpush1.bf16.xpose.msra.mxu0 0
  %2215 = vmatprep.subr.bf16.mxu0 0
  %2216 = vmatpush1.bf16.xpose.msra.mxu0 0
  %2217 = vmatprep.subr.bf16.mxu0 0
  %2218 = vmatpush1.bf16.xpose.msra.mxu0 0
  %2219 = vmatprep.subr.bf16.mxu0 0
  %2220 = vmatpush1.bf16.xpose.msra.mxu0 0
  %2221 = vmatprep.subr.bf16.mxu0 0
  %2222 = vmatpush1.bf16.xpose.msra.mxu0 0
  %2223 = vmatprep.subr.bf16.mxu0 0
  %2224 = vmatpush1.bf16.xpose.msra.mxu0 %v1545
  %2225 = vmatprep.subr.bf16.mxu0 0
  %2226 = vmatpush2.bf16.xpose.msra.mxu0 0
  %2227 = vmatprep.subr.bf16.mxu0 0
  %2228 = vmatpush2.bf16.xpose.msra.mxu0 0
  %2229 = vmatprep.subr.bf16.mxu0 0
  %2230 = vmatpush2.bf16.xpose.msra.mxu0 0
  %2231 = vmatprep.subr.bf16.mxu0 0
  %2232 = vmatpush2.bf16.xpose.msra.mxu0 0
  %2233 = vmatprep.subr.bf16.mxu0 0
  %2234 = vmatpush2.bf16.xpose.msra.mxu0 0
  %2235 = vmatprep.subr.bf16.mxu0 0
  %2236 = vmatpush2.bf16.xpose.msra.mxu0 0
  %2237 = vmatprep.subr.bf16.mxu0 0
  %2238 = vmatpush2.bf16.xpose.msra.mxu0 0
  %2239 = vmatprep.subr.bf16.mxu0 0
  %2240 = vmatpush2.bf16.xpose.msra.mxu0 0
  %2241 = vmatprep.mubr.bf16.mxu0 0
  %2242 = vmatmul.mubr.bf16.gmra.mxu0 %v2207
  %v2243 = vpop.f32.mrf.mxu0
  %v2244 = vadd.f32 0.0, %v2243
  %v2245 = vpop.f32.mrf.mxu0
  %v2246 = vpop.f32.mrf.mxu0
  %v2247 = vpop.f32.mrf.mxu0
  %2248 = vdwg.mxu0
  %v2249 = vmul.f32 %v2201, 0.35355338
  %v2250 = vmul.f32 %v2244, 0.35355338
  %v2251 = vadd.f32 %v2249, %v282
  %v2252 = vadd.f32 %v2250, %v286
  %v2253 = vsel %vm291, %v2251, -inf
  %2254 = vmax.xlane.f32.xlu0 %v2253
  %v2255 = vpop.xlane.xlu0 %2254
  %v2256 = vsel %vm291, %v2252, -inf
  %2257 = vmax.xlane.f32.xlu0 %v2256
  %v2258 = vpop.xlane.xlu0 %2257
  %v2259 = vsub.f32 %v2251, %v2255
  %v2260 = vsub.f32 %v2252, %v2258
  %v2261 = vmul.f32 %v2259, 1.442695
  %v2262 = vpow.pop %v2261
  %v2263 = vmul.f32 %v2260, 1.442695
  %v2264 = vpow.pop %v2263
  %v2265 = vsel %vm291, %v2262, 0.0
  %2266 = vadd.xlane.f32.xlu0 %v2265
  %v2267 = vpop.xlane.xlu0 %2266
  %v2268 = vsel %vm291, %v2264, 0.0
  %2269 = vadd.xlane.f32.xlu0 %v2268
  %v2270 = vpop.xlane.xlu0 %2269
  %v2271 = vrcp.pop %v2267
  %v2272 = vmul.f32 %v2262, %v2271
  %v2273 = vrcp.pop %v2270
  %v2274 = vmul.f32 %v2264, %v2273
  %v2275 = vpack.c.bf16 %v2272, %v2272
  %v2276 = vpack.c.bf16 %v2274, %v2274
  %v2277 = vmul.f32 %v1477, %v993
  %v2278 = vmul.f32 %v1480, %v993
  %v2279 = vpack.c.bf16 %v2277, %v2277
  %v2280 = vpack.c.bf16 %v2278, %v2278
  %2282 = vrot.lane.b32.xlu0 %v2279, 64
  %v2283 = vpop.permute.xlu0 %2282
  %v2285 = vsel %vm291, %v2275, 0
  %v2288 = vsel %vm456, %v2283, 0
  %2290 = vmatprep.subr.bf16.mxu0 0
  %2291 = vmatpush1.bf16.msra.mxu0 0
  %2292 = vmatprep.subr.bf16.mxu0 0
  %2293 = vmatpush1.bf16.msra.mxu0 0
  %2294 = vmatprep.subr.bf16.mxu0 0
  %2295 = vmatpush1.bf16.msra.mxu0 0
  %2296 = vmatprep.subr.bf16.mxu0 0
  %2297 = vmatpush1.bf16.msra.mxu0 0
  %2298 = vmatprep.subr.bf16.mxu0 0
  %2299 = vmatpush1.bf16.msra.mxu0 0
  %2300 = vmatprep.subr.bf16.mxu0 0
  %2301 = vmatpush1.bf16.msra.mxu0 0
  %2302 = vmatprep.subr.bf16.mxu0 0
  %2303 = vmatpush1.bf16.msra.mxu0 0
  %2304 = vmatprep.subr.bf16.mxu0 0
  %2305 = vmatpush1.bf16.msra.mxu0 %v2288
  %2306 = vmatprep.subr.bf16.mxu0 0
  %2307 = vmatpush2.bf16.msra.mxu0 0
  %2308 = vmatprep.subr.bf16.mxu0 0
  %2309 = vmatpush2.bf16.msra.mxu0 0
  %2310 = vmatprep.subr.bf16.mxu0 0
  %2311 = vmatpush2.bf16.msra.mxu0 0
  %2312 = vmatprep.subr.bf16.mxu0 0
  %2313 = vmatpush2.bf16.msra.mxu0 0
  %2314 = vmatprep.subr.bf16.mxu0 0
  %2315 = vmatpush2.bf16.msra.mxu0 0
  %2316 = vmatprep.subr.bf16.mxu0 0
  %2317 = vmatpush2.bf16.msra.mxu0 0
  %2318 = vmatprep.subr.bf16.mxu0 0
  %2319 = vmatpush2.bf16.msra.mxu0 0
  %2320 = vmatprep.subr.bf16.mxu0 0
  %2321 = vmatpush2.bf16.msra.mxu0 0
  %2322 = vmatprep.mubr.bf16.mxu0 0
  %2323 = vmatmul.mubr.bf16.gmra.mxu0 %v2285
  %v2324 = vpop.f32.mrf.mxu0
  %v2325 = vadd.f32 0.0, %v2324
  %v2326 = vpop.f32.mrf.mxu0
  %v2327 = vpop.f32.mrf.mxu0
  %v2328 = vpop.f32.mrf.mxu0
  %2329 = vdwg.mxu0
  %2331 = vrot.lane.b32.xlu0 %v2280, 64
  %v2332 = vpop.permute.xlu0 %2331
  %v2334 = vsel %vm291, %v2276, 0
  %v2337 = vsel %vm456, %v2332, 0
  %2339 = vmatprep.subr.bf16.mxu0 0
  %2340 = vmatpush1.bf16.msra.mxu0 0
  %2341 = vmatprep.subr.bf16.mxu0 0
  %2342 = vmatpush1.bf16.msra.mxu0 0
  %2343 = vmatprep.subr.bf16.mxu0 0
  %2344 = vmatpush1.bf16.msra.mxu0 0
  %2345 = vmatprep.subr.bf16.mxu0 0
  %2346 = vmatpush1.bf16.msra.mxu0 0
  %2347 = vmatprep.subr.bf16.mxu0 0
  %2348 = vmatpush1.bf16.msra.mxu0 0
  %2349 = vmatprep.subr.bf16.mxu0 0
  %2350 = vmatpush1.bf16.msra.mxu0 0
  %2351 = vmatprep.subr.bf16.mxu0 0
  %2352 = vmatpush1.bf16.msra.mxu0 0
  %2353 = vmatprep.subr.bf16.mxu0 0
  %2354 = vmatpush1.bf16.msra.mxu0 %v2337
  %2355 = vmatprep.subr.bf16.mxu0 0
  %2356 = vmatpush2.bf16.msra.mxu0 0
  %2357 = vmatprep.subr.bf16.mxu0 0
  %2358 = vmatpush2.bf16.msra.mxu0 0
  %2359 = vmatprep.subr.bf16.mxu0 0
  %2360 = vmatpush2.bf16.msra.mxu0 0
  %2361 = vmatprep.subr.bf16.mxu0 0
  %2362 = vmatpush2.bf16.msra.mxu0 0
  %2363 = vmatprep.subr.bf16.mxu0 0
  %2364 = vmatpush2.bf16.msra.mxu0 0
  %2365 = vmatprep.subr.bf16.mxu0 0
  %2366 = vmatpush2.bf16.msra.mxu0 0
  %2367 = vmatprep.subr.bf16.mxu0 0
  %2368 = vmatpush2.bf16.msra.mxu0 0
  %2369 = vmatprep.subr.bf16.mxu0 0
  %2370 = vmatpush2.bf16.msra.mxu0 0
  %2371 = vmatprep.mubr.bf16.mxu0 0
  %2372 = vmatmul.mubr.bf16.gmra.mxu0 %v2334
  %v2373 = vpop.f32.mrf.mxu0
  %v2374 = vadd.f32 0.0, %v2373
  %v2375 = vpop.f32.mrf.mxu0
  %v2376 = vpop.f32.mrf.mxu0
  %v2377 = vpop.f32.mrf.mxu0
  %2378 = vdwg.mxu0
  %v2379 = vadd.f32 %v2157, %v2325
  %v2380 = vadd.f32 %v2158, %v2374
  %v2381 = vpack.c.bf16 %v2380, %v2379
  %s2382 = scalar_lea.vmem %s4, 16
  %v2383 = vld [vmem:[%s2382] sm:$0xf]
  %v2384 = vld [vmem:[%s2382 + $0x4] sm:$0xf]
  %v2385 = vld [vmem:[%s2382 + $0x8] sm:$0xf]
  %v2386 = vld [vmem:[%s2382 + $0xc] sm:$0xf]
  %v2387 = vld [vmem:[%s8 + $0x5] sm:$0x1]
  %v2388 = vlaneseq
  %v2389 = vshrl.u32 %v2388, 7
  %v2390 = vsub.s32 0, %v2389
  %v2391 = vrot.slane %v2387, %v2390
  %v2396 = vunpack.c.l.b16 %v2383
  %v2397 = vunpack.c.l.b16 %v2384
  %v2398 = vunpack.c.l.b16 %v2385
  %v2399 = vunpack.c.l.b16 %v2386
  %v2400 = vpack.c.b16 %v2397, %v2396
  %v2401 = vpack.c.b16 %v2399, %v2398
  %v2405 = vsel %vm43, %v2381, 0
  %2407 = vmatprep.subr.bf16.mxu0 0
  %2408 = vmatpush1.bf16.msra.mxu0 0
  %2409 = vmatprep.subr.bf16.mxu0 0
  %2410 = vmatpush1.bf16.msra.mxu0 0
  %2411 = vmatprep.subr.bf16.mxu0 0
  %2412 = vmatpush1.bf16.msra.mxu0 0
  %2413 = vmatprep.subr.bf16.mxu0 0
  %2414 = vmatpush1.bf16.msra.mxu0 0
  %2415 = vmatprep.subr.bf16.mxu0 0
  %2416 = vmatpush1.bf16.msra.mxu0 0
  %2417 = vmatprep.subr.bf16.mxu0 0
  %2418 = vmatpush1.bf16.msra.mxu0 0
  %2419 = vmatprep.subr.bf16.mxu0 0
  %2420 = vmatpush1.bf16.msra.mxu0 %v2401
  %2421 = vmatprep.subr.bf16.mxu0 0
  %2422 = vmatpush1.bf16.msra.mxu0 %v2400
  %2423 = vmatprep.subr.bf16.mxu0 0
  %2424 = vmatpush2.bf16.msra.mxu0 0
  %2425 = vmatprep.subr.bf16.mxu0 0
  %2426 = vmatpush2.bf16.msra.mxu0 0
  %2427 = vmatprep.subr.bf16.mxu0 0
  %2428 = vmatpush2.bf16.msra.mxu0 0
  %2429 = vmatprep.subr.bf16.mxu0 0
  %2430 = vmatpush2.bf16.msra.mxu0 0
  %2431 = vmatprep.subr.bf16.mxu0 0
  %2432 = vmatpush2.bf16.msra.mxu0 0
  %2433 = vmatprep.subr.bf16.mxu0 0
  %2434 = vmatpush2.bf16.msra.mxu0 0
  %2435 = vmatprep.subr.bf16.mxu0 0
  %2436 = vmatpush2.bf16.msra.mxu0 0
  %2437 = vmatprep.subr.bf16.mxu0 0
  %2438 = vmatpush2.bf16.msra.mxu0 0
  %2439 = vmatprep.mubr.bf16.mxu0 0
  %2440 = vmatmul.mubr.bf16.gmra.mxu0 %v2405
  %v2441 = vpop.f32.mrf.mxu0
  %v2442 = vadd.f32 %v2391, %v2441
  %v2443 = vpop.f32.mrf.mxu0
  %v2444 = vpop.f32.mrf.mxu0
  %v2445 = vadd.f32 %v2391, %v2444
  %v2446 = vpop.f32.mrf.mxu0
  %2447 = vdwg.mxu0
  %v2448 = vadd.f32 %v1414, %v2442
  %v2449 = vadd.f32 %v1415, %v2445
  %v2450 = vld [vmem:[%s8 + $0xc] sm:$0x1]
  %v2451 = vld [vmem:[%s8 + $0xd] sm:$0x1]
  %v2452 = vsel %vm43, %v2448, 0.0
  %2453 = vadd.xlane.f32.xlu0 %v2452
  %v2454 = vpop.xlane.xlu0 %2453
  %v2455 = vsel %vm43, %v2449, 0.0
  %2456 = vadd.xlane.f32.xlu0 %v2455
  %v2457 = vpop.xlane.xlu0 %2456
  %v2458 = vmul.f32 %v2454, %v50
  %v2459 = vmul.f32 %v2457, %v50
  %v2460 = vsub.f32 %v2448, %v2458
  %v2461 = vsub.f32 %v2449, %v2459
  %v2462 = vmul.f32 %v2460, %v2460
  %v2463 = vmul.f32 %v2461, %v2461
  %v2464 = vsel %vm43, %v2462, 0.0
  %2465 = vadd.xlane.f32.xlu0 %v2464
  %v2466 = vpop.xlane.xlu0 %2465
  %v2467 = vsel %vm43, %v2463, 0.0
  %2468 = vadd.xlane.f32.xlu0 %v2467
  %v2469 = vpop.xlane.xlu0 %2468
  %v2470 = vmul.f32 %v2466, %v50
  %v2471 = vmul.f32 %v2469, %v50
  %v2472 = vadd.f32 %v2470, 1e-12
  %v2473 = vadd.f32 %v2471, 1e-12
  %v2474 = vrsqrt.pop %v2472
  %v2475 = vrsqrt.pop %v2473
  %v2476 = vmul.f32 %v2460, %v2474
  %v2477 = vmul.f32 %v2461, %v2475
  %v2478 = vlaneseq
  %v2479 = vshrl.u32 %v2478, 7
  %v2480 = vsub.s32 0, %v2479
  %v2481 = vrot.slane %v2450, %v2480
  %v2482 = vmul.f32 %v2476, %v2481
  %v2483 = vmul.f32 %v2477, %v2481
  %v2484 = vlaneseq
  %v2485 = vshrl.u32 %v2484, 7
  %v2486 = vsub.s32 0, %v2485
  %v2487 = vrot.slane %v2451, %v2486
  %v2488 = vadd.f32 %v2482, %v2487
  %v2489 = vadd.f32 %v2483, %v2487
  %v2490 = vpack.c.bf16 %v2489, %v2488
  %s2491 = scalar_lea.vmem %s5, 16
  %v2492 = vld [vmem:[%s2491] sm:$0xf]
  %v2493 = vld [vmem:[%s2491 + $0x4] sm:$0xf]
  %v2494 = vld [vmem:[%s2491 + $0x8] sm:$0xf]
  %v2495 = vld [vmem:[%s2491 + $0xc] sm:$0xf]
  %v2496 = vld [vmem:[%s8 + $0x7] sm:$0x1]
  %v2497 = vlaneseq
  %v2498 = vshrl.u32 %v2497, 7
  %v2499 = vsub.s32 0, %v2498
  %v2500 = vrot.slane %v2496, %v2499
  %v2505 = vunpack.c.l.b16 %v2492
  %v2506 = vunpack.c.l.b16 %v2493
  %v2507 = vunpack.c.l.b16 %v2494
  %v2508 = vunpack.c.l.b16 %v2495
  %v2509 = vpack.c.b16 %v2506, %v2505
  %v2510 = vpack.c.b16 %v2508, %v2507
  %v2514 = vsel %vm43, %v2490, 0
  %2516 = vmatprep.subr.bf16.mxu0 0
  %2517 = vmatpush1.bf16.msra.mxu0 0
  %2518 = vmatprep.subr.bf16.mxu0 0
  %2519 = vmatpush1.bf16.msra.mxu0 0
  %2520 = vmatprep.subr.bf16.mxu0 0
  %2521 = vmatpush1.bf16.msra.mxu0 0
  %2522 = vmatprep.subr.bf16.mxu0 0
  %2523 = vmatpush1.bf16.msra.mxu0 0
  %2524 = vmatprep.subr.bf16.mxu0 0
  %2525 = vmatpush1.bf16.msra.mxu0 0
  %2526 = vmatprep.subr.bf16.mxu0 0
  %2527 = vmatpush1.bf16.msra.mxu0 0
  %2528 = vmatprep.subr.bf16.mxu0 0
  %2529 = vmatpush1.bf16.msra.mxu0 %v2510
  %2530 = vmatprep.subr.bf16.mxu0 0
  %2531 = vmatpush1.bf16.msra.mxu0 %v2509
  %2532 = vmatprep.subr.bf16.mxu0 0
  %2533 = vmatpush2.bf16.msra.mxu0 0
  %2534 = vmatprep.subr.bf16.mxu0 0
  %2535 = vmatpush2.bf16.msra.mxu0 0
  %2536 = vmatprep.subr.bf16.mxu0 0
  %2537 = vmatpush2.bf16.msra.mxu0 0
  %2538 = vmatprep.subr.bf16.mxu0 0
  %2539 = vmatpush2.bf16.msra.mxu0 0
  %2540 = vmatprep.subr.bf16.mxu0 0
  %2541 = vmatpush2.bf16.msra.mxu0 0
  %2542 = vmatprep.subr.bf16.mxu0 0
  %2543 = vmatpush2.bf16.msra.mxu0 0
  %2544 = vmatprep.subr.bf16.mxu0 0
  %2545 = vmatpush2.bf16.msra.mxu0 0
  %2546 = vmatprep.subr.bf16.mxu0 0
  %2547 = vmatpush2.bf16.msra.mxu0 0
  %2548 = vmatprep.mubr.bf16.mxu0 0
  %2549 = vmatmul.mubr.bf16.gmra.mxu0 %v2514
  %v2550 = vpop.f32.mrf.mxu0
  %v2551 = vadd.f32 %v2500, %v2550
  %v2552 = vpop.f32.mrf.mxu0
  %v2553 = vpop.f32.mrf.mxu0
  %v2554 = vadd.f32 %v2500, %v2553
  %v2555 = vpop.f32.mrf.mxu0
  %2556 = vdwg.mxu0
  %v2557 = vmul.f32 %v2551, %v2551
  %v2558 = vmul.f32 %v2554, %v2554
  %v2559 = vmul.f32 %v2551, %v2557
  %v2560 = vmul.f32 %v2554, %v2558
  %v2561 = vmul.f32 %v2559, 0.044715
  %v2562 = vmul.f32 %v2560, 0.044715
  %v2563 = vadd.f32 %v2551, %v2561
  %v2564 = vadd.f32 %v2554, %v2562
  %v2565 = vmul.f32 %v2563, 0.7978846
  %v2566 = vmul.f32 %v2564, 0.7978846
  %v2567 = vtanh.pop %v2565
  %v2568 = vtanh.pop %v2566
  %v2569 = vadd.f32 %v2567, 1.0
  %v2570 = vadd.f32 %v2568, 1.0
  %v2571 = vmul.f32 %v2569, 0.5
  %v2572 = vmul.f32 %v2570, 0.5
  %v2573 = vmul.f32 %v2551, %v2571
  %v2574 = vmul.f32 %v2554, %v2572
  %v2575 = vpack.c.bf16 %v2574, %v2573
  %s2576 = scalar_lea.vmem %s6, 32
  %v2577 = vld [vmem:[%s2576] sm:$0xf]
  %v2578 = vld [vmem:[%s2576 + $0x4] sm:$0xf]
  %v2579 = vld [vmem:[%s2576 + $0x8] sm:$0xf]
  %v2580 = vld [vmem:[%s2576 + $0xc] sm:$0xf]
  %v2581 = vld [vmem:[%s2576 + $0x10] sm:$0xf]
  %v2582 = vld [vmem:[%s2576 + $0x14] sm:$0xf]
  %v2583 = vld [vmem:[%s2576 + $0x18] sm:$0xf]
  %v2584 = vld [vmem:[%s2576 + $0x1c] sm:$0xf]
  %v2585 = vld [vmem:[%s8 + $0x9] sm:$0x1]
  %v2586 = vlaneseq
  %v2587 = vshrl.u32 %v2586, 7
  %v2588 = vsub.s32 0, %v2587
  %v2589 = vrot.slane %v2585, %v2588
  %v2598 = vunpack.c.l.b16 %v2577
  %v2599 = vunpack.c.l.b16 %v2578
  %v2600 = vunpack.c.l.b16 %v2579
  %v2601 = vunpack.c.l.b16 %v2580
  %v2602 = vunpack.c.l.b16 %v2581
  %v2603 = vunpack.c.l.b16 %v2582
  %v2604 = vunpack.c.l.b16 %v2583
  %v2605 = vunpack.c.l.b16 %v2584
  %v2606 = vpack.c.b16 %v2599, %v2598
  %v2607 = vpack.c.b16 %v2601, %v2600
  %v2608 = vpack.c.b16 %v2603, %v2602
  %v2609 = vpack.c.b16 %v2605, %v2604
  %v2615 = vsel %vm1329, %v2575, 0
  %2617 = vmatprep.subr.bf16.mxu0 0
  %2618 = vmatpush1.bf16.msra.mxu0 0
  %2619 = vmatprep.subr.bf16.mxu0 0
  %2620 = vmatpush1.bf16.msra.mxu0 0
  %2621 = vmatprep.subr.bf16.mxu0 0
  %2622 = vmatpush1.bf16.msra.mxu0 0
  %2623 = vmatprep.subr.bf16.mxu0 0
  %2624 = vmatpush1.bf16.msra.mxu0 0
  %2625 = vmatprep.subr.bf16.mxu0 0
  %2626 = vmatpush1.bf16.msra.mxu0 %v2609
  %2627 = vmatprep.subr.bf16.mxu0 0
  %2628 = vmatpush1.bf16.msra.mxu0 %v2608
  %2629 = vmatprep.subr.bf16.mxu0 0
  %2630 = vmatpush1.bf16.msra.mxu0 %v2607
  %2631 = vmatprep.subr.bf16.mxu0 0
  %2632 = vmatpush1.bf16.msra.mxu0 %v2606
  %2633 = vmatprep.subr.bf16.mxu0 0
  %2634 = vmatpush2.bf16.msra.mxu0 0
  %2635 = vmatprep.subr.bf16.mxu0 0
  %2636 = vmatpush2.bf16.msra.mxu0 0
  %2637 = vmatprep.subr.bf16.mxu0 0
  %2638 = vmatpush2.bf16.msra.mxu0 0
  %2639 = vmatprep.subr.bf16.mxu0 0
  %2640 = vmatpush2.bf16.msra.mxu0 0
  %2641 = vmatprep.subr.bf16.mxu0 0
  %2642 = vmatpush2.bf16.msra.mxu0 0
  %2643 = vmatprep.subr.bf16.mxu0 0
  %2644 = vmatpush2.bf16.msra.mxu0 0
  %2645 = vmatprep.subr.bf16.mxu0 0
  %2646 = vmatpush2.bf16.msra.mxu0 0
  %2647 = vmatprep.subr.bf16.mxu0 0
  %2648 = vmatpush2.bf16.msra.mxu0 0
  %2649 = vmatprep.mubr.bf16.mxu0 0
  %2650 = vmatmul.mubr.bf16.gmra.mxu0 %v2615
  %v2651 = vpop.f32.mrf.mxu0
  %v2652 = vadd.f32 %v2589, %v2651
  %v2653 = vpop.f32.mrf.mxu0
  %v2654 = vpop.f32.mrf.mxu0
  %v2655 = vadd.f32 %v2589, %v2654
  %v2656 = vpop.f32.mrf.mxu0
  %2657 = vdwg.mxu0
  %v2658 = vadd.f32 %v2488, %v2652
  %v2659 = vadd.f32 %v2489, %v2655
  %v2660 = vld [vmem:[%s8 + $0x10] sm:$0x1]
  %v2661 = vld [vmem:[%s8 + $0x11] sm:$0x1]
  %v2662 = vsel %vm43, %v2658, 0.0
  %2663 = vadd.xlane.f32.xlu0 %v2662
  %v2664 = vpop.xlane.xlu0 %2663
  %v2665 = vsel %vm43, %v2659, 0.0
  %2666 = vadd.xlane.f32.xlu0 %v2665
  %v2667 = vpop.xlane.xlu0 %2666
  %v2668 = vmul.f32 %v2664, %v50
  %v2669 = vmul.f32 %v2667, %v50
  %v2670 = vsub.f32 %v2658, %v2668
  %v2671 = vsub.f32 %v2659, %v2669
  %v2672 = vmul.f32 %v2670, %v2670
  %v2673 = vmul.f32 %v2671, %v2671
  %v2674 = vsel %vm43, %v2672, 0.0
  %2675 = vadd.xlane.f32.xlu0 %v2674
  %v2676 = vpop.xlane.xlu0 %2675
  %v2677 = vsel %vm43, %v2673, 0.0
  %2678 = vadd.xlane.f32.xlu0 %v2677
  %v2679 = vpop.xlane.xlu0 %2678
  %v2680 = vmul.f32 %v2676, %v50
  %v2681 = vmul.f32 %v2679, %v50
  %v2682 = vadd.f32 %v2680, 1e-12
  %v2683 = vadd.f32 %v2681, 1e-12
  %v2684 = vrsqrt.pop %v2682
  %v2685 = vrsqrt.pop %v2683
  %v2686 = vmul.f32 %v2670, %v2684
  %v2687 = vmul.f32 %v2671, %v2685
  %v2688 = vlaneseq
  %v2689 = vshrl.u32 %v2688, 7
  %v2690 = vsub.s32 0, %v2689
  %v2691 = vrot.slane %v2660, %v2690
  %v2692 = vmul.f32 %v2686, %v2691
  %v2693 = vmul.f32 %v2687, %v2691
  %v2694 = vlaneseq
  %v2695 = vshrl.u32 %v2694, 7
  %v2696 = vsub.s32 0, %v2695
  %v2697 = vrot.slane %v2661, %v2696
  %v2698 = vadd.f32 %v2692, %v2697
  %v2699 = vadd.f32 %v2693, %v2697
  %v2700 = vpack.c.bf16 %v2698, %v2698
  %v2701 = vpack.c.bf16 %v2699, %v2699
  %v2702 = vld [vmem:[%s7] sm:$0xf]
  %v2703 = vld [vmem:[%s7 + $0x4] sm:$0xf]
  %v2704 = vld [vmem:[%s7 + $0x8] sm:$0xf]
  %v2705 = vld [vmem:[%s7 + $0xc] sm:$0xf]
  %v2706 = vld [vmem:[%s8 + $0x12] sm:$0x1]
  %v2707 = vlaneseq
  %v2708 = vshrl.u32 %v2707, 7
  %v2709 = vsub.s32 0, %v2708
  %v2710 = vrot.slane %v2706, %v2709
  %v2713 = vunpack.c.l.b16 %v2700
  %v2714 = vunpack.c.l.b16 %v2701
  %v2715 = vrot.slane %v2714, 7
  %vm2716 = vcmask 1041409
  %v2717 = vsel %vm2716, %v2715, %v2713
  %v2718 = vpack.c.b16 %v2717, %v2717
  %v2723 = vunpack.c.l.b16 %v2702
  %v2724 = vunpack.c.l.b16 %v2703
  %v2725 = vunpack.c.l.b16 %v2704
  %v2726 = vunpack.c.l.b16 %v2705
  %v2727 = vpack.c.b16 %v2724, %v2723
  %v2728 = vpack.c.b16 %v2726, %v2725
  %v2732 = vsel %vm43, %v2718, 0
  %2734 = vmatprep.subr.bf16.mxu0 0
  %2735 = vmatpush1.bf16.msra.mxu0 0
  %2736 = vmatprep.subr.bf16.mxu0 0
  %2737 = vmatpush1.bf16.msra.mxu0 0
  %2738 = vmatprep.subr.bf16.mxu0 0
  %2739 = vmatpush1.bf16.msra.mxu0 0
  %2740 = vmatprep.subr.bf16.mxu0 0
  %2741 = vmatpush1.bf16.msra.mxu0 0
  %2742 = vmatprep.subr.bf16.mxu0 0
  %2743 = vmatpush1.bf16.msra.mxu0 0
  %2744 = vmatprep.subr.bf16.mxu0 0
  %2745 = vmatpush1.bf16.msra.mxu0 0
  %2746 = vmatprep.subr.bf16.mxu0 0
  %2747 = vmatpush1.bf16.msra.mxu0 %v2728
  %2748 = vmatprep.subr.bf16.mxu0 0
  %2749 = vmatpush1.bf16.msra.mxu0 %v2727
  %2750 = vmatprep.subr.bf16.mxu0 0
  %2751 = vmatpush2.bf16.msra.mxu0 0
  %2752 = vmatprep.subr.bf16.mxu0 0
  %2753 = vmatpush2.bf16.msra.mxu0 0
  %2754 = vmatprep.subr.bf16.mxu0 0
  %2755 = vmatpush2.bf16.msra.mxu0 0
  %2756 = vmatprep.subr.bf16.mxu0 0
  %2757 = vmatpush2.bf16.msra.mxu0 0
  %2758 = vmatprep.subr.bf16.mxu0 0
  %2759 = vmatpush2.bf16.msra.mxu0 0
  %2760 = vmatprep.subr.bf16.mxu0 0
  %2761 = vmatpush2.bf16.msra.mxu0 0
  %2762 = vmatprep.subr.bf16.mxu0 0
  %2763 = vmatpush2.bf16.msra.mxu0 0
  %2764 = vmatprep.subr.bf16.mxu0 0
  %2765 = vmatpush2.bf16.msra.mxu0 0
  %2766 = vmatprep.mubr.bf16.mxu0 0
  %2767 = vmatmul.mubr.bf16.gmra.mxu0 %v2732
  %v2768 = vpop.f32.mrf.mxu0
  %v2769 = vadd.f32 %v2710, %v2768
  %v2770 = vpop.f32.mrf.mxu0
  %v2771 = vpop.f32.mrf.mxu0
  %v2772 = vpop.f32.mrf.mxu0
  %2773 = vdwg.mxu0
  %v2774 = vtanh.pop %v2769
  %v2776 = vsel %vm291, %v33, 0
  %2778 = vmatprep.subr.mxu0 0.0
  %2779 = vmatpush1.msra.mxu0 0.0
  %2780 = vmatprep.subr.mxu0 0.0
  %2781 = vmatpush1.msra.mxu0 0.0
  %2782 = vmatprep.subr.mxu0 0.0
  %2783 = vmatpush1.msra.mxu0 0.0
  %2784 = vmatprep.subr.mxu0 0.0
  %2785 = vmatpush1.msra.mxu0 0.0
  %2786 = vmatprep.subr.mxu0 0.0
  %2787 = vmatpush1.msra.mxu0 0.0
  %2788 = vmatprep.subr.mxu0 0.0
  %2789 = vmatpush1.msra.mxu0 0.0
  %2790 = vmatprep.subr.mxu0 0.0
  %2791 = vmatpush1.msra.mxu0 0.0
  %2792 = vmatprep.subr.mxu0 0.0
  %2793 = vmatpush1.msra.mxu0 0.0
  %2794 = vmatprep.subr.mxu0 0.0
  %2795 = vmatpush1.msra.mxu0 0.0
  %2796 = vmatprep.subr.mxu0 0.0
  %2797 = vmatpush1.msra.mxu0 0.0
  %2798 = vmatprep.subr.mxu0 0.0
  %2799 = vmatpush1.msra.mxu0 0.0
  %2800 = vmatprep.subr.mxu0 0.0
  %2801 = vmatpush1.msra.mxu0 0.0
  %2802 = vmatprep.subr.mxu0 0.0
  %2803 = vmatpush1.msra.mxu0 0.0
  %2804 = vmatprep.subr.mxu0 0.0
  %2805 = vmatpush1.msra.mxu0 0.0
  %2806 = vmatprep.subr.mxu0 0.0
  %2807 = vmatpush1.msra.mxu0 0.0
  %2808 = vmatprep.subr.mxu0 0.0
  %2809 = vmatpush1.msra.mxu0 %v2698
  %2810 = vmatprep.subr.mxu0 0.0
  %2811 = vmatpush2.msra.mxu0 0.0
  %2812 = vmatprep.subr.mxu0 0.0
  %2813 = vmatpush2.msra.mxu0 0.0
  %2814 = vmatprep.subr.mxu0 0.0
  %2815 = vmatpush2.msra.mxu0 0.0
  %2816 = vmatprep.subr.mxu0 0.0
  %2817 = vmatpush2.msra.mxu0 0.0
  %2818 = vmatprep.subr.mxu0 0.0
  %2819 = vmatpush2.msra.mxu0 0.0
  %2820 = vmatprep.subr.mxu0 0.0
  %2821 = vmatpush2.msra.mxu0 0.0
  %2822 = vmatprep.subr.mxu0 0.0
  %2823 = vmatpush2.msra.mxu0 0.0
  %2824 = vmatprep.subr.mxu0 0.0
  %2825 = vmatpush2.msra.mxu0 0.0
  %2826 = vmatprep.subr.mxu0 0.0
  %2827 = vmatpush2.msra.mxu0 0.0
  %2828 = vmatprep.subr.mxu0 0.0
  %2829 = vmatpush2.msra.mxu0 0.0
  %2830 = vmatprep.subr.mxu0 0.0
  %2831 = vmatpush2.msra.mxu0 0.0
  %2832 = vmatprep.subr.mxu0 0.0
  %2833 = vmatpush2.msra.mxu0 0.0
  %2834 = vmatprep.subr.mxu0 0.0
  %2835 = vmatpush2.msra.mxu0 0.0
  %2836 = vmatprep.subr.mxu0 0.0
  %2837 = vmatpush2.msra.mxu0 0.0
  %2838 = vmatprep.subr.mxu0 0.0
  %2839 = vmatpush2.msra.mxu0 0.0
  %2840 = vmatprep.subr.mxu0 0.0
  %2841 = vmatpush2.msra.mxu0 0.0
  %2842 = vmatprep.mubr.f32.mxu0 0.0
  %2843 = vmatmul.mubr.f32.gmra.mxu0 %v2776
  %v2844 = vpop.f32.mrf.mxu0
  %v2845 = vadd.f32 0.0, %v2844
  %v2846 = vpop.f32.mrf.mxu0
  %2847 = vdwg.mxu0
  %v2849 = vsel %vm291, %v34, 0
  %2851 = vmatprep.subr.mxu0 0.0
  %2852 = vmatpush1.msra.mxu0 0.0
  %2853 = vmatprep.subr.mxu0 0.0
  %2854 = vmatpush1.msra.mxu0 0.0
  %2855 = vmatprep.subr.mxu0 0.0
  %2856 = vmatpush1.msra.mxu0 0.0
  %2857 = vmatprep.subr.mxu0 0.0
  %2858 = vmatpush1.msra.mxu0 0.0
  %2859 = vmatprep.subr.mxu0 0.0
  %2860 = vmatpush1.msra.mxu0 0.0
  %2861 = vmatprep.subr.mxu0 0.0
  %2862 = vmatpush1.msra.mxu0 0.0
  %2863 = vmatprep.subr.mxu0 0.0
  %2864 = vmatpush1.msra.mxu0 0.0
  %2865 = vmatprep.subr.mxu0 0.0
  %2866 = vmatpush1.msra.mxu0 0.0
  %2867 = vmatprep.subr.mxu0 0.0
  %2868 = vmatpush1.msra.mxu0 0.0
  %2869 = vmatprep.subr.mxu0 0.0
  %2870 = vmatpush1.msra.mxu0 0.0
  %2871 = vmatprep.subr.mxu0 0.0
  %2872 = vmatpush1.msra.mxu0 0.0
  %2873 = vmatprep.subr.mxu0 0.0
  %2874 = vmatpush1.msra.mxu0 0.0
  %2875 = vmatprep.subr.mxu0 0.0
  %2876 = vmatpush1.msra.mxu0 0.0
  %2877 = vmatprep.subr.mxu0 0.0
  %2878 = vmatpush1.msra.mxu0 0.0
  %2879 = vmatprep.subr.mxu0 0.0
  %2880 = vmatpush1.msra.mxu0 0.0
  %2881 = vmatprep.subr.mxu0 0.0
  %2882 = vmatpush1.msra.mxu0 %v2699
  %2883 = vmatprep.subr.mxu0 0.0
  %2884 = vmatpush2.msra.mxu0 0.0
  %2885 = vmatprep.subr.mxu0 0.0
  %2886 = vmatpush2.msra.mxu0 0.0
  %2887 = vmatprep.subr.mxu0 0.0
  %2888 = vmatpush2.msra.mxu0 0.0
  %2889 = vmatprep.subr.mxu0 0.0
  %2890 = vmatpush2.msra.mxu0 0.0
  %2891 = vmatprep.subr.mxu0 0.0
  %2892 = vmatpush2.msra.mxu0 0.0
  %2893 = vmatprep.subr.mxu0 0.0
  %2894 = vmatpush2.msra.mxu0 0.0
  %2895 = vmatprep.subr.mxu0 0.0
  %2896 = vmatpush2.msra.mxu0 0.0
  %2897 = vmatprep.subr.mxu0 0.0
  %2898 = vmatpush2.msra.mxu0 0.0
  %2899 = vmatprep.subr.mxu0 0.0
  %2900 = vmatpush2.msra.mxu0 0.0
  %2901 = vmatprep.subr.mxu0 0.0
  %2902 = vmatpush2.msra.mxu0 0.0
  %2903 = vmatprep.subr.mxu0 0.0
  %2904 = vmatpush2.msra.mxu0 0.0
  %2905 = vmatprep.subr.mxu0 0.0
  %2906 = vmatpush2.msra.mxu0 0.0
  %2907 = vmatprep.subr.mxu0 0.0
  %2908 = vmatpush2.msra.mxu0 0.0
  %2909 = vmatprep.subr.mxu0 0.0
  %2910 = vmatpush2.msra.mxu0 0.0
  %2911 = vmatprep.subr.mxu0 0.0
  %2912 = vmatpush2.msra.mxu0 0.0
  %2913 = vmatprep.subr.mxu0 0.0
  %2914 = vmatpush2.msra.mxu0 0.0
  %2915 = vmatprep.mubr.f32.mxu0 0.0
  %2916 = vmatmul.mubr.f32.gmra.mxu0 %v2849
  %v2917 = vpop.f32.mrf.mxu0
  %v2918 = vadd.f32 0.0, %v2917
  %v2919 = vpop.f32.mrf.mxu0
  %2920 = vdwg.mxu0
  %vm2921 = vcmask 57344
  %v2922 = vsel %vm2921, %v33, 0.0
  %2923 = vadd.xlane.f32.xlu0 %v2922
  %v2924 = vpop.xlane.xlu0 %2923
  %v2925 = vsel %vm2921, %v34, 0.0
  %2926 = vadd.xlane.f32.xlu0 %v2925
  %v2927 = vpop.xlane.xlu0 %2926
  %v2928 = vmax.f32 %v2924, 1.0
  %v2929 = vmax.f32 %v2927, 1.0
  %v2930 = vrcp.pop %v2928
  %v2931 = vmul.f32 %v2845, %v2930
  %v2932 = vrcp.pop %v2929
  %v2933 = vmul.f32 %v2918, %v2932
  %v2934 = vld [vmem:[%s2] sm:$0xff]
  %v2935 = vld [vmem:[%s2 + $0x8] sm:$0xff]
  %v2936 = vsel %vm43, %v2934, 0.0
  %v2937 = vrot.slane %v2936, 4
  %v2938 = vadd.f32 %v2936, %v2937
  %v2939 = vrot.slane %v2938, 2
  %v2940 = vadd.f32 %v2938, %v2939
  %v2941 = vrot.slane %v2940, 1
  %v2942 = vadd.f32 %v2940, %v2941
  %v2943 = vsel %vm43, %v2935, 0.0
  %v2944 = vrot.slane %v2943, 4
  %v2945 = vadd.f32 %v2943, %v2944
  %v2946 = vrot.slane %v2945, 2
  %v2947 = vadd.f32 %v2945, %v2946
  %v2948 = vrot.slane %v2947, 1
  %v2949 = vadd.f32 %v2947, %v2948
  %v2950 = vrcp.pop 8.0
  %v2951 = vmul.f32 %v2942, %v2950
  %v2952 = vmul.f32 %v2949, %v2950
  %v2953 = vld [vmem:[%s8 + $0x13] sm:$0x1]
  %v2954 = vlaneseq
  %v2955 = vshrl.u32 %v2954, 7
  %v2956 = vsub.s32 0, %v2955
  %v2957 = vrot.slane %v2953, %v2956
  %v2958 = vmul.f32 %v2774, %v2957
  %v2959 = vld [vmem:[%s8 + $0x14] sm:$0x1]
  %v2960 = vlaneseq
  %v2961 = vshrl.u32 %v2960, 7
  %v2962 = vsub.s32 0, %v2961
  %v2963 = vrot.slane %v2959, %v2962
  %v2964 = vmul.f32 %v2931, %v2963
  %v2965 = vmul.f32 %v2933, %v2963
  %v2968 = vrot.slane %v2965, 7
  %v2969 = vsel %vm2716, %v2968, %v2964
  %v2971 = vadd.f32 %v2958, %v2969
  %v2972 = vld [vmem:[%s8 + $0x15] sm:$0x1]
  %v2973 = vlaneseq
  %v2974 = vshrl.u32 %v2973, 7
  %v2975 = vsub.s32 0, %v2974
  %v2976 = vrot.slane %v2972, %v2975
  %v2977 = vmul.f32 %v2951, %v2976
  %v2978 = vmul.f32 %v2952, %v2976
  %v2981 = vrot.slane %v2978, 7
  %v2982 = vsel %vm2716, %v2981, %v2977
  %v2984 = vadd.f32 %v2971, %v2982
  %vm2985 = vcmask 254976
  %v2986 = vsel %vm2985, %v2984, 0.0
  %2987 = vadd.xlane.f32.xlu0 %v2986
  %v2988 = vpop.xlane.xlu0 %2987
  %v2989 = vld [vmem:[%s8 + $0x16] sm:$0x1]
  %v2990 = vlaneseq
  %v2991 = vshrl.u32 %v2990, 7
  %v2992 = vsub.s32 0, %v2991
  %v2993 = vrot.slane %v2989, %v2992
  %v2994 = vadd.f32 %v2988, %v2993
  %vm2995 = vcmask 1024
  %2996 = vst.msk [vmem:[%s9] sm:$0x3] %vm2995, %v2994
  // Predicated region
  $region38: #{bert_regression_forward.1} parent=0 // pred_check
    _
  $region39: #{bert_regression_forward.1} parent=0 // pred_check_branch
    %2998 = sbr.rel (0) target = $region41
  $region40: #{bert_regression_forward.1} parent=0 // pred_region
    _
  $region41: #{bert_regression_forward.1} parent=0 // pred_fallthru
    _
  // Predicated region
  $region42: #{bert_regression_forward.1} parent=0 // pred_check
    _
  $region43: #{bert_regression_forward.1} parent=0 // pred_check_branch
    %3000 = sbr.rel (0) target = $region45
  $region44: #{bert_regression_forward.1} parent=0 // pred_region
    _
  $region45: #{bert_regression_forward.1} parent=0 // pred_fallthru
    _

</llo_original>
